<compile_context>
chip_gen: v6e
topology: v6e:2x2x1
jax: 0.10.0
libtpu: 0.0.40
codegen_flags: <defaults>
</compile_context>

<pallas_src>
import functools

import jax
import jax.numpy as jnp
from jax import lax
from jax.experimental import pallas as pl
from jax.experimental.pallas import tpu as pltpu

EPS = 1e-5        # BatchNorm2d default eps
SLOPE = 0.1       # LeakyReLU negative slope
ALIGN = 16        # bf16 sublane tile (rows) -> padded-row stride / guard size


def _leaky(v):
    return jnp.where(v >= 0, v, SLOPE * v)


def _round_up(v, m):
    return (v + m - 1) // m * m


def ruidual_kernel(x_ref, w1_ref, b1_ref, w2_ref, b2_ref, o_ref, pad_ref, *,
                   H, W, S, G):
    # x_ref:   (1, H*W, C)   bf16  one batch element, channels-last, rows flat
    # w1_ref:  (C, C2)       bf16  folded 1x1 conv + BN1
    # b1_ref:  (1, C2)       f32
    # w2_ref:  (9*C2, C)     bf16  folded 3x3 conv + BN2, taps (dy, dx, c2)
    # b2_ref:  (1, C)        f32
    # o_ref:   (1, H*W, C)   f32
    # pad_ref: (R, C2)       bf16  flat zero-padded hidden activations:
    #          padded pixel (py, px) lives at flat index G + py*S + px - 1,
    #          i.e. the left-pad column sits at the end of the previous flat
    #          row so data-row store bases G + py*S are 16-aligned.
    C2 = w1_ref.shape[1]
    K = 9 * C2
    L = H * S                      # tap-slice length (incl. S-W junk cols/row)
    R = pad_ref.shape[0]

    x = x_ref[0]                                             # (H*W, C) bf16

    # ---- 1x1 conv (+ folded BN1) + LeakyReLU: bf16 MXU, f32 accumulate -----
    h1 = jnp.dot(x, w1_ref[...], preferred_element_type=jnp.float32)
    h1 = _leaky(h1 + b1_ref[...])                            # (H*W, C2) f32
    h1b = h1.astype(jnp.bfloat16)                            # cast once

    # ---- scatter hidden activations into the flat padded bf16 scratch ------
    # Border / gap rows are re-zeroed every step (every scratch row is written
    # exactly once per step), so no scratch state persists across iterations
    # -> the "parallel" batch axis is safe on megacore / v7x.
    zero_head = jnp.zeros((G + S, C2), jnp.bfloat16)         # guard+top pad+left pad row1
    zero_gap = jnp.zeros((S - W, C2), jnp.bfloat16)          # right pad+junk+next left pad
    tail0 = G + H * S + W
    zero_tail = jnp.zeros((R - tail0, C2), jnp.bfloat16)     # last right pad+bottom+overhang
    pad_ref[0:G + S, :] = zero_head
    for r in range(H):
        base = G + (r + 1) * S                               # 16-aligned store base
        pad_ref[base:base + W, :] = h1b[r * W:(r + 1) * W, :]
        if r < H - 1:
            pad_ref[base + W:base + S, :] = zero_gap
    pad_ref[tail0:R, :] = zero_tail

    # ---- 3x3 conv (+ folded BN2): single im2col matmul, contraction 9*C2 ---
    # Tap (dy, dx) for output flat index i = r*S + ox reads
    # pad[G + (r+dy)*S + (ox+dx) - 1] = pad[i + (G + dy*S + dx - 1)]  -> one
    # contiguous leading-dim slice per tap; concat along lanes -> im2col.
    taps = [pad_ref[G + dy * S + dx - 1: G + dy * S + dx - 1 + L, :]
            for dy in range(3) for dx in range(3)]
    patch = jnp.concatenate(taps, axis=-1)                   # (H*S, 9*C2) bf16

    xr = x.astype(jnp.float32)
    if W % 8 == 0:
        # Crop the S-W junk columns per output row BEFORE the matmul (aligned
        # sublane slice since S, W are multiples of 8/16), then one matmul and
        # one lane-dense full-block residual store.
        patch = patch.reshape(H, S, K)[:, :W, :].reshape(H * W, K)
        h2 = jnp.dot(patch, w2_ref[...], preferred_element_type=jnp.float32)
        o_ref[0] = xr + _leaky(h2 + b2_ref[...])             # (H*W, C) f32
    else:
        # TODO(synk): fallback for W not a multiple of 8 — keeps junk MXU rows
        # and crops per output row during the residual store.
        h2 = _leaky(jnp.dot(patch, w2_ref[...],
                            preferred_element_type=jnp.float32) + b2_ref[...])
        for r in range(H):
            o_ref[0, r * W:(r + 1) * W, :] = (
                xr[r * W:(r + 1) * W, :] + h2[r * S:r * S + W, :])


def _vmem_capacity_bytes():
    """Generation-aware VMEM capacity (v5e/v6e: 128 MiB, v7x: 64 MiB)."""
    try:
        info = pltpu.get_tpu_info()
        for name in ("vmem_capacity_bytes", "vmem_size_bytes", "vmem_bytes"):
            v = getattr(info, name, None)
            if v:
                return int(v)
    except Exception:
        pass
    return 64 * 1024 * 1024


def _vmem_limit_bytes(H, W, C, C2, S, G, R):
    """Explicit VMEM budget from the block/scratch footprint, capped per-gen."""
    def tile(rows, cols, itemsize):
        return _round_up(rows, 8) * _round_up(cols, 128) * itemsize
    HW = H * W
    blk_in = tile(HW, C, 2)                            # bf16 input block
    blk_out = tile(HW, C, 4)                           # f32 output block
    pad = tile(R, C2, 2)                               # bf16 padded scratch
    wts = (tile(C, C2, 2) + tile(9 * C2, C, 2)
           + tile(1, C2, 4) + tile(1, C, 4))
    tmp = (2 * tile(HW, C2, 4)                         # h1 f32 + bf16 copy
           + tile(H * S, 9 * C2, 2)                    # im2col patch (pre-crop)
           + tile(HW, 9 * C2, 2)                       # cropped patch
           + 2 * tile(HW, C, 4))                       # h2 / residual temp
    est = 2 * (blk_in + blk_out) + 2 * wts + pad + tmp  # in/out/wts double-buffered
    cap = int(0.85 * _vmem_capacity_bytes())
    # TODO(synk): if est exceeds cap at production sizes, switch to H-row tiling.
    return int(min(max(2 * est, 32 * 1024 * 1024), cap))


def ruidual_forward(x_flat, w1f, b1f, w2f, b2f, H, W):
    N, HW, C = x_flat.shape
    C2 = w1f.shape[1]
    S = _round_up(W + 2, ALIGN)                # aligned padded-row stride
    G = ALIGN                                  # leading guard rows (>= 1)
    R = G + (H + 2) * S + ALIGN                # scratch rows (covers tap overhang)
    kernel = functools.partial(ruidual_kernel, H=H, W=W, S=S, G=G)

    flops = N * (2 * HW * C * C2 + 2 * HW * 9 * C2 * C)
    bytes_accessed = (N * HW * C * (2 + 4)                     # bf16 in + f32 out
                      + C * C2 * 2 + 9 * C2 * C * 2 + (C2 + C) * 4)

    return pl.pallas_call(
        kernel,
        out_shape=jax.ShapeDtypeStruct((N, HW, C), jnp.float32),
        grid_spec=pltpu.PrefetchScalarGridSpec(
            num_scalar_prefetch=0,
            grid=(N,),
            in_specs=[
                pl.BlockSpec((1, HW, C), lambda n: (n, 0, 0)),
                pl.BlockSpec((C, C2), lambda n: (0, 0)),
                pl.BlockSpec((1, C2), lambda n: (0, 0)),
                pl.BlockSpec((9 * C2, C), lambda n: (0, 0)),
                pl.BlockSpec((1, C), lambda n: (0, 0)),
            ],
            out_specs=pl.BlockSpec((1, HW, C), lambda n: (n, 0, 0)),
            scratch_shapes=[pltpu.VMEM((R, C2), jnp.bfloat16)],
        ),
        compiler_params=pltpu.CompilerParams(
            dimension_semantics=("parallel",),      # shard batch across cores
            vmem_limit_bytes=_vmem_limit_bytes(H, W, C, C2, S, G, R)),
        cost_estimate=pl.CostEstimate(
            flops=int(flops), transcendentals=0,
            bytes_accessed=int(bytes_accessed)),
    )(x_flat.astype(jnp.bfloat16), w1f, b1f, w2f, b2f)


def make_params(key, in_ch):
    """Deterministic synthetic parameters in PyTorch conventions."""
    c2 = in_ch // 2
    k = jax.random.split(key, 12)
    p = dict(
        w1=0.1 * jax.random.normal(k[0], (c2, in_ch, 1, 1), jnp.float32),   # OIHW
        b1=0.1 * jax.random.normal(k[1], (c2,), jnp.float32),
        g1=1.0 + 0.1 * jax.random.normal(k[2], (c2,), jnp.float32),
        be1=0.1 * jax.random.normal(k[3], (c2,), jnp.float32),
        m1=0.1 * jax.random.normal(k[4], (c2,), jnp.float32),
        v1=jnp.abs(jax.random.normal(k[5], (c2,), jnp.float32)) + 0.5,
        w2=0.1 * jax.random.normal(k[6], (in_ch, c2, 3, 3), jnp.float32),   # OIHW
        b2=0.1 * jax.random.normal(k[7], (in_ch,), jnp.float32),
        g2=1.0 + 0.1 * jax.random.normal(k[8], (in_ch,), jnp.float32),
        be2=0.1 * jax.random.normal(k[9], (in_ch,), jnp.float32),
        m2=0.1 * jax.random.normal(k[10], (in_ch,), jnp.float32),
        v2=jnp.abs(jax.random.normal(k[11], (in_ch,), jnp.float32)) + 0.5,
    )
    return p


def fold_params(p):
    """Fold eval-mode BN into conv weights/biases (f32 fold, bf16 cast last)."""
    s1 = p["g1"] / jnp.sqrt(p["v1"] + EPS)                              # (C2,)
    w1f = (p["w1"][:, :, 0, 0] * s1[:, None]).T.astype(jnp.bfloat16)    # (C, C2)
    b1f = ((p["b1"] - p["m1"]) * s1 + p["be1"])[None, :]                # (1, C2)

    s2 = p["g2"] / jnp.sqrt(p["v2"] + EPS)                              # (C,)
    w2_scaled = p["w2"] * s2[:, None, None, None]                       # (C, C2, 3, 3)
    c_out, c2 = w2_scaled.shape[0], w2_scaled.shape[1]
    # im2col layout: (dy, dx, c2) flattened -> (9*C2, C), matching the kernel's
    # tap concatenation order (dy outer, dx inner).
    w2f = (jnp.transpose(w2_scaled, (2, 3, 1, 0))
           .reshape(9 * c2, c_out).astype(jnp.bfloat16))
    b2f = ((p["b2"] - p["m2"]) * s2 + p["be2"])[None, :]                # (1, C)
    return w1f, b1f, w2f, b2f


def reference_nchw(x, p):
    """Pure-JAX f32 reference mirroring PyTorch (eval-mode BN)."""
    def block(y, w, b, g, be, m, v, pad):
        y = lax.conv_general_dilated(
            y, w, window_strides=(1, 1), padding=[(pad, pad), (pad, pad)],
            dimension_numbers=("NCHW", "OIHW", "NCHW"))
        y = y + b[None, :, None, None]
        y = ((y - m[None, :, None, None])
             / jnp.sqrt(v + EPS)[None, :, None, None]
             * g[None, :, None, None] + be[None, :, None, None])
        return jnp.where(y >= 0, y, SLOPE * y)

    h = block(x, p["w1"], p["b1"], p["g1"], p["be1"], p["m1"], p["v1"], 0)
    h = block(h, p["w2"], p["b2"], p["g2"], p["be2"], p["m2"], p["v2"], 1)
    return x + h


if __name__ == "__main__":
    key = jax.random.PRNGKey(0)
    kx, kp = jax.random.split(key)

    N, C, H, W = 2, 8, 16, 16                      # in_ch = 8 -> hidden = 4
    x_nchw = jax.random.normal(kx, (N, C, H, W), jnp.float32)
    params = make_params(kp, C)
    w1f, b1f, w2f, b2f = fold_params(params)

    # NCHW -> flat channels-last (N, H*W, C): pure layout plumbing in XLA.
    x_flat = jnp.transpose(x_nchw, (0, 2, 3, 1)).reshape(N, H * W, C)
    out_flat = ruidual_forward(x_flat, w1f, b1f, w2f, b2f, H, W)
    out_nchw = jnp.transpose(out_flat.reshape(N, H, W, C), (0, 3, 1, 2))
    jax.block_until_ready(out_nchw)

    ref = reference_nchw(x_nchw, params)
    assert out_nchw.shape == (N, C, H, W)
    # bf16 activations/weights on the MXU vs pure-f32 reference -> loosened tol.
    assert jnp.allclose(out_nchw, ref, atol=5e-2, rtol=5e-2), (
        "mismatch vs reference: max |err| = "
        f"{float(jnp.max(jnp.abs(out_nchw - ref)))}")
    print("KERNEL_OK")
</pallas_src>

<mosaic_0001>
module attributes {stable_mosaic.version = 11 : i64} {
  func.func @ruidual_kernel(%arg0: i32, %arg1: memref<1x256x8xbf16, #tpu.memory_space<vmem>>, %arg2: memref<8x4xbf16, #tpu.memory_space<vmem>>, %arg3: memref<1x4xf32, #tpu.memory_space<vmem>>, %arg4: memref<36x8xbf16, #tpu.memory_space<vmem>>, %arg5: memref<1x8xf32, #tpu.memory_space<vmem>>, %arg6: memref<1x256x8xf32, #tpu.memory_space<vmem>>, %arg7: memref<608x4xbf16, #tpu.memory_space<vmem>>) attributes {dimension_semantics = [#tpu.dimension_semantics<parallel>], iteration_bounds = array<i64: 2>, scalar_prefetch = 0 : i64, scratch_operands = 1 : i64, tpu.core_type = #tpu.core_type<tc>, window_params = [{transform_indices = @transform_0, window_bounds = array<i64: 1, 256, 8>}, {pipeline_mode = #tpu.pipeline_mode<synchronous>, transform_indices = @transform_1, window_bounds = array<i64: 8, 4>}, {pipeline_mode = #tpu.pipeline_mode<synchronous>, transform_indices = @transform_2, window_bounds = array<i64: 1, 4>}, {pipeline_mode = #tpu.pipeline_mode<synchronous>, transform_indices = @transform_3, window_bounds = array<i64: 36, 8>}, {pipeline_mode = #tpu.pipeline_mode<synchronous>, transform_indices = @transform_4, window_bounds = array<i64: 1, 8>}, {transform_indices = @transform_5, window_bounds = array<i64: 1, 256, 8>}]} {
    %c0 = arith.constant 0 : index
    %c0_0 = arith.constant 0 : index
    %c0_1 = arith.constant 0 : index
    %0 = vector.load %arg1[%c0, %c0_0, %c0_1] : memref<1x256x8xbf16, #tpu.memory_space<vmem>>, vector<1x256x8xbf16>
    %1 = vector.shape_cast %0 : vector<1x256x8xbf16> to vector<256x8xbf16>
    %c0_2 = arith.constant 0 : index
    %c0_3 = arith.constant 0 : index
    %2 = vector.load %arg2[%c0_2, %c0_3] : memref<8x4xbf16, #tpu.memory_space<vmem>>, vector<8x4xbf16>
    %cst = arith.constant dense<0.000000e+00> : vector<256x4xf32>
    %3 = tpu.matmul %1, %2, %cst {dimension_numbers = #tpu.dot_dimension_numbers<[1], [0], [0], [1], [0, 0, 1, 1], [], []>} : vector<256x8xbf16>, vector<8x4xbf16>, vector<256x4xf32> -> vector<256x4xf32>
    %c0_4 = arith.constant 0 : index
    %c0_5 = arith.constant 0 : index
    %4 = vector.load %arg3[%c0_4, %c0_5] : memref<1x4xf32, #tpu.memory_space<vmem>>, vector<1x4xf32>
    %5 = vector.broadcast %4 : vector<1x4xf32> to vector<256x4xf32>
    %6 = arith.addf %3, %5 : vector<256x4xf32>
    %cst_6 = arith.constant 0.000000e+00 : f32
    %7 = vector.broadcast %cst_6 : f32 to vector<256x4xf32>
    %8 = arith.cmpf oge, %6, %7 : vector<256x4xf32>
    %cst_7 = arith.constant 1.000000e-01 : f32
    %9 = vector.broadcast %cst_7 : f32 to vector<256x4xf32>
    %10 = arith.mulf %9, %6 : vector<256x4xf32>
    %11 = arith.select %8, %6, %10 : vector<256x4xi1>, vector<256x4xf32>
    %12 = arith.truncf %11 : vector<256x4xf32> to vector<256x4xbf16>
    %cst_8 = arith.constant 0.000000e+00 : bf16
    %13 = vector.broadcast %cst_8 : bf16 to vector<48x4xbf16>
    %cst_9 = arith.constant 0.000000e+00 : bf16
    %14 = vector.broadcast %cst_9 : bf16 to vector<16x4xbf16>
    %cst_10 = arith.constant 0.000000e+00 : bf16
    %15 = vector.broadcast %cst_10 : bf16 to vector<64x4xbf16>
    %c0_11 = arith.constant 0 : index
    %c0_12 = arith.constant 0 : index
    %16 = vector.load %arg7[%c0_11, %c0_12] : memref<608x4xbf16, #tpu.memory_space<vmem>>, vector<48x4xbf16>
    tpu.vector_store %arg7[%c0_11, %c0_12], %13 {strides = array<i32>} : memref<608x4xbf16, #tpu.memory_space<vmem>>, vector<48x4xbf16>,
    %17 = vector.extract_strided_slice %12 {offsets = [0, 0], sizes = [16, 4], strides = [1, 1]} : vector<256x4xbf16> to vector<16x4xbf16>
    %c48 = arith.constant 48 : index
    %c0_13 = arith.constant 0 : index
    %18 = vector.load %arg7[%c48, %c0_13] : memref<608x4xbf16, #tpu.memory_space<vmem>>, vector<16x4xbf16>
    tpu.vector_store %arg7[%c48, %c0_13], %17 {strides = array<i32>} : memref<608x4xbf16, #tpu.memory_space<vmem>>, vector<16x4xbf16>,
    %c64 = arith.constant 64 : index
    %c0_14 = arith.constant 0 : index
    %19 = vector.load %arg7[%c64, %c0_14] : memref<608x4xbf16, #tpu.memory_space<vmem>>, vector<16x4xbf16>
    tpu.vector_store %arg7[%c64, %c0_14], %14 {strides = array<i32>} : memref<608x4xbf16, #tpu.memory_space<vmem>>, vector<16x4xbf16>,
    %20 = vector.extract_strided_slice %12 {offsets = [16, 0], sizes = [16, 4], strides = [1, 1]} : vector<256x4xbf16> to vector<16x4xbf16>
    %c80 = arith.constant 80 : index
    %c0_15 = arith.constant 0 : index
    %21 = vector.load %arg7[%c80, %c0_15] : memref<608x4xbf16, #tpu.memory_space<vmem>>, vector<16x4xbf16>
    tpu.vector_store %arg7[%c80, %c0_15], %20 {strides = array<i32>} : memref<608x4xbf16, #tpu.memory_space<vmem>>, vector<16x4xbf16>,
    %c96 = arith.constant 96 : index
    %c0_16 = arith.constant 0 : index
    %22 = vector.load %arg7[%c96, %c0_16] : memref<608x4xbf16, #tpu.memory_space<vmem>>, vector<16x4xbf16>
    tpu.vector_store %arg7[%c96, %c0_16], %14 {strides = array<i32>} : memref<608x4xbf16, #tpu.memory_space<vmem>>, vector<16x4xbf16>,
    %23 = vector.extract_strided_slice %12 {offsets = [32, 0], sizes = [16, 4], strides = [1, 1]} : vector<256x4xbf16> to vector<16x4xbf16>
    %c112 = arith.constant 112 : index
    %c0_17 = arith.constant 0 : index
    %24 = vector.load %arg7[%c112, %c0_17] : memref<608x4xbf16, #tpu.memory_space<vmem>>, vector<16x4xbf16>
    tpu.vector_store %arg7[%c112, %c0_17], %23 {strides = array<i32>} : memref<608x4xbf16, #tpu.memory_space<vmem>>, vector<16x4xbf16>,
    %c128 = arith.constant 128 : index
    %c0_18 = arith.constant 0 : index
    %25 = vector.load %arg7[%c128, %c0_18] : memref<608x4xbf16, #tpu.memory_space<vmem>>, vector<16x4xbf16>
    tpu.vector_store %arg7[%c128, %c0_18], %14 {strides = array<i32>} : memref<608x4xbf16, #tpu.memory_space<vmem>>, vector<16x4xbf16>,
    %26 = vector.extract_strided_slice %12 {offsets = [48, 0], sizes = [16, 4], strides = [1, 1]} : vector<256x4xbf16> to vector<16x4xbf16>
    %c144 = arith.constant 144 : index
    %c0_19 = arith.constant 0 : index
    %27 = vector.load %arg7[%c144, %c0_19] : memref<608x4xbf16, #tpu.memory_space<vmem>>, vector<16x4xbf16>
    tpu.vector_store %arg7[%c144, %c0_19], %26 {strides = array<i32>} : memref<608x4xbf16, #tpu.memory_space<vmem>>, vector<16x4xbf16>,
    %c160 = arith.constant 160 : index
    %c0_20 = arith.constant 0 : index
    %28 = vector.load %arg7[%c160, %c0_20] : memref<608x4xbf16, #tpu.memory_space<vmem>>, vector<16x4xbf16>
    tpu.vector_store %arg7[%c160, %c0_20], %14 {strides = array<i32>} : memref<608x4xbf16, #tpu.memory_space<vmem>>, vector<16x4xbf16>,
    %29 = vector.extract_strided_slice %12 {offsets = [64, 0], sizes = [16, 4], strides = [1, 1]} : vector<256x4xbf16> to vector<16x4xbf16>
    %c176 = arith.constant 176 : index
    %c0_21 = arith.constant 0 : index
    %30 = vector.load %arg7[%c176, %c0_21] : memref<608x4xbf16, #tpu.memory_space<vmem>>, vector<16x4xbf16>
    tpu.vector_store %arg7[%c176, %c0_21], %29 {strides = array<i32>} : memref<608x4xbf16, #tpu.memory_space<vmem>>, vector<16x4xbf16>,
    %c192 = arith.constant 192 : index
    %c0_22 = arith.constant 0 : index
    %31 = vector.load %arg7[%c192, %c0_22] : memref<608x4xbf16, #tpu.memory_space<vmem>>, vector<16x4xbf16>
    tpu.vector_store %arg7[%c192, %c0_22], %14 {strides = array<i32>} : memref<608x4xbf16, #tpu.memory_space<vmem>>, vector<16x4xbf16>,
    %32 = vector.extract_strided_slice %12 {offsets = [80, 0], sizes = [16, 4], strides = [1, 1]} : vector<256x4xbf16> to vector<16x4xbf16>
    %c208 = arith.constant 208 : index
    %c0_23 = arith.constant 0 : index
    %33 = vector.load %arg7[%c208, %c0_23] : memref<608x4xbf16, #tpu.memory_space<vmem>>, vector<16x4xbf16>
    tpu.vector_store %arg7[%c208, %c0_23], %32 {strides = array<i32>} : memref<608x4xbf16, #tpu.memory_space<vmem>>, vector<16x4xbf16>,
    %c224 = arith.constant 224 : index
    %c0_24 = arith.constant 0 : index
    %34 = vector.load %arg7[%c224, %c0_24] : memref<608x4xbf16, #tpu.memory_space<vmem>>, vector<16x4xbf16>
    tpu.vector_store %arg7[%c224, %c0_24], %14 {strides = array<i32>} : memref<608x4xbf16, #tpu.memory_space<vmem>>, vector<16x4xbf16>,
    %35 = vector.extract_strided_slice %12 {offsets = [96, 0], sizes = [16, 4], strides = [1, 1]} : vector<256x4xbf16> to vector<16x4xbf16>
    %c240 = arith.constant 240 : index
    %c0_25 = arith.constant 0 : index
    %36 = vector.load %arg7[%c240, %c0_25] : memref<608x4xbf16, #tpu.memory_space<vmem>>, vector<16x4xbf16>
    tpu.vector_store %arg7[%c240, %c0_25], %35 {strides = array<i32>} : memref<608x4xbf16, #tpu.memory_space<vmem>>, vector<16x4xbf16>,
    %c256 = arith.constant 256 : index
    %c0_26 = arith.constant 0 : index
    %37 = vector.load %arg7[%c256, %c0_26] : memref<608x4xbf16, #tpu.memory_space<vmem>>, vector<16x4xbf16>
    tpu.vector_store %arg7[%c256, %c0_26], %14 {strides = array<i32>} : memref<608x4xbf16, #tpu.memory_space<vmem>>, vector<16x4xbf16>,
    %38 = vector.extract_strided_slice %12 {offsets = [112, 0], sizes = [16, 4], strides = [1, 1]} : vector<256x4xbf16> to vector<16x4xbf16>
    %c272 = arith.constant 272 : index
    %c0_27 = arith.constant 0 : index
    %39 = vector.load %arg7[%c272, %c0_27] : memref<608x4xbf16, #tpu.memory_space<vmem>>, vector<16x4xbf16>
    tpu.vector_store %arg7[%c272, %c0_27], %38 {strides = array<i32>} : memref<608x4xbf16, #tpu.memory_space<vmem>>, vector<16x4xbf16>,
    %c288 = arith.constant 288 : index
    %c0_28 = arith.constant 0 : index
    %40 = vector.load %arg7[%c288, %c0_28] : memref<608x4xbf16, #tpu.memory_space<vmem>>, vector<16x4xbf16>
    tpu.vector_store %arg7[%c288, %c0_28], %14 {strides = array<i32>} : memref<608x4xbf16, #tpu.memory_space<vmem>>, vector<16x4xbf16>,
    %41 = vector.extract_strided_slice %12 {offsets = [128, 0], sizes = [16, 4], strides = [1, 1]} : vector<256x4xbf16> to vector<16x4xbf16>
    %c304 = arith.constant 304 : index
    %c0_29 = arith.constant 0 : index
    %42 = vector.load %arg7[%c304, %c0_29] : memref<608x4xbf16, #tpu.memory_space<vmem>>, vector<16x4xbf16>
    tpu.vector_store %arg7[%c304, %c0_29], %41 {strides = array<i32>} : memref<608x4xbf16, #tpu.memory_space<vmem>>, vector<16x4xbf16>,
    %c320 = arith.constant 320 : index
    %c0_30 = arith.constant 0 : index
    %43 = vector.load %arg7[%c320, %c0_30] : memref<608x4xbf16, #tpu.memory_space<vmem>>, vector<16x4xbf16>
    tpu.vector_store %arg7[%c320, %c0_30], %14 {strides = array<i32>} : memref<608x4xbf16, #tpu.memory_space<vmem>>, vector<16x4xbf16>,
    %44 = vector.extract_strided_slice %12 {offsets = [144, 0], sizes = [16, 4], strides = [1, 1]} : vector<256x4xbf16> to vector<16x4xbf16>
    %c336 = arith.constant 336 : index
    %c0_31 = arith.constant 0 : index
    %45 = vector.load %arg7[%c336, %c0_31] : memref<608x4xbf16, #tpu.memory_space<vmem>>, vector<16x4xbf16>
    tpu.vector_store %arg7[%c336, %c0_31], %44 {strides = array<i32>} : memref<608x4xbf16, #tpu.memory_space<vmem>>, vector<16x4xbf16>,
    %c352 = arith.constant 352 : index
    %c0_32 = arith.constant 0 : index
    %46 = vector.load %arg7[%c352, %c0_32] : memref<608x4xbf16, #tpu.memory_space<vmem>>, vector<16x4xbf16>
    tpu.vector_store %arg7[%c352, %c0_32], %14 {strides = array<i32>} : memref<608x4xbf16, #tpu.memory_space<vmem>>, vector<16x4xbf16>,
    %47 = vector.extract_strided_slice %12 {offsets = [160, 0], sizes = [16, 4], strides = [1, 1]} : vector<256x4xbf16> to vector<16x4xbf16>
    %c368 = arith.constant 368 : index
    %c0_33 = arith.constant 0 : index
    %48 = vector.load %arg7[%c368, %c0_33] : memref<608x4xbf16, #tpu.memory_space<vmem>>, vector<16x4xbf16>
    tpu.vector_store %arg7[%c368, %c0_33], %47 {strides = array<i32>} : memref<608x4xbf16, #tpu.memory_space<vmem>>, vector<16x4xbf16>,
    %c384 = arith.constant 384 : index
    %c0_34 = arith.constant 0 : index
    %49 = vector.load %arg7[%c384, %c0_34] : memref<608x4xbf16, #tpu.memory_space<vmem>>, vector<16x4xbf16>
    tpu.vector_store %arg7[%c384, %c0_34], %14 {strides = array<i32>} : memref<608x4xbf16, #tpu.memory_space<vmem>>, vector<16x4xbf16>,
    %50 = vector.extract_strided_slice %12 {offsets = [176, 0], sizes = [16, 4], strides = [1, 1]} : vector<256x4xbf16> to vector<16x4xbf16>
    %c400 = arith.constant 400 : index
    %c0_35 = arith.constant 0 : index
    %51 = vector.load %arg7[%c400, %c0_35] : memref<608x4xbf16, #tpu.memory_space<vmem>>, vector<16x4xbf16>
    tpu.vector_store %arg7[%c400, %c0_35], %50 {strides = array<i32>} : memref<608x4xbf16, #tpu.memory_space<vmem>>, vector<16x4xbf16>,
    %c416 = arith.constant 416 : index
    %c0_36 = arith.constant 0 : index
    %52 = vector.load %arg7[%c416, %c0_36] : memref<608x4xbf16, #tpu.memory_space<vmem>>, vector<16x4xbf16>
    tpu.vector_store %arg7[%c416, %c0_36], %14 {strides = array<i32>} : memref<608x4xbf16, #tpu.memory_space<vmem>>, vector<16x4xbf16>,
    %53 = vector.extract_strided_slice %12 {offsets = [192, 0], sizes = [16, 4], strides = [1, 1]} : vector<256x4xbf16> to vector<16x4xbf16>
    %c432 = arith.constant 432 : index
    %c0_37 = arith.constant 0 : index
    %54 = vector.load %arg7[%c432, %c0_37] : memref<608x4xbf16, #tpu.memory_space<vmem>>, vector<16x4xbf16>
    tpu.vector_store %arg7[%c432, %c0_37], %53 {strides = array<i32>} : memref<608x4xbf16, #tpu.memory_space<vmem>>, vector<16x4xbf16>,
    %c448 = arith.constant 448 : index
    %c0_38 = arith.constant 0 : index
    %55 = vector.load %arg7[%c448, %c0_38] : memref<608x4xbf16, #tpu.memory_space<vmem>>, vector<16x4xbf16>
    tpu.vector_store %arg7[%c448, %c0_38], %14 {strides = array<i32>} : memref<608x4xbf16, #tpu.memory_space<vmem>>, vector<16x4xbf16>,
    %56 = vector.extract_strided_slice %12 {offsets = [208, 0], sizes = [16, 4], strides = [1, 1]} : vector<256x4xbf16> to vector<16x4xbf16>
    %c464 = arith.constant 464 : index
    %c0_39 = arith.constant 0 : index
    %57 = vector.load %arg7[%c464, %c0_39] : memref<608x4xbf16, #tpu.memory_space<vmem>>, vector<16x4xbf16>
    tpu.vector_store %arg7[%c464, %c0_39], %56 {strides = array<i32>} : memref<608x4xbf16, #tpu.memory_space<vmem>>, vector<16x4xbf16>,
    %c480 = arith.constant 480 : index
    %c0_40 = arith.constant 0 : index
    %58 = vector.load %arg7[%c480, %c0_40] : memref<608x4xbf16, #tpu.memory_space<vmem>>, vector<16x4xbf16>
    tpu.vector_store %arg7[%c480, %c0_40], %14 {strides = array<i32>} : memref<608x4xbf16, #tpu.memory_space<vmem>>, vector<16x4xbf16>,
    %59 = vector.extract_strided_slice %12 {offsets = [224, 0], sizes = [16, 4], strides = [1, 1]} : vector<256x4xbf16> to vector<16x4xbf16>
    %c496 = arith.constant 496 : index
    %c0_41 = arith.constant 0 : index
    %60 = vector.load %arg7[%c496, %c0_41] : memref<608x4xbf16, #tpu.memory_space<vmem>>, vector<16x4xbf16>
    tpu.vector_store %arg7[%c496, %c0_41], %59 {strides = array<i32>} : memref<608x4xbf16, #tpu.memory_space<vmem>>, vector<16x4xbf16>,
    %c512 = arith.constant 512 : index
    %c0_42 = arith.constant 0 : index
    %61 = vector.load %arg7[%c512, %c0_42] : memref<608x4xbf16, #tpu.memory_space<vmem>>, vector<16x4xbf16>
    tpu.vector_store %arg7[%c512, %c0_42], %14 {strides = array<i32>} : memref<608x4xbf16, #tpu.memory_space<vmem>>, vector<16x4xbf16>,
    %62 = vector.extract_strided_slice %12 {offsets = [240, 0], sizes = [16, 4], strides = [1, 1]} : vector<256x4xbf16> to vector<16x4xbf16>
    %c528 = arith.constant 528 : index
    %c0_43 = arith.constant 0 : index
    %63 = vector.load %arg7[%c528, %c0_43] : memref<608x4xbf16, #tpu.memory_space<vmem>>, vector<16x4xbf16>
    tpu.vector_store %arg7[%c528, %c0_43], %62 {strides = array<i32>} : memref<608x4xbf16, #tpu.memory_space<vmem>>, vector<16x4xbf16>,
    %c544 = arith.constant 544 : index
    %c0_44 = arith.constant 0 : index
    %64 = vector.load %arg7[%c544, %c0_44] : memref<608x4xbf16, #tpu.memory_space<vmem>>, vector<64x4xbf16>
    tpu.vector_store %arg7[%c544, %c0_44], %15 {strides = array<i32>} : memref<608x4xbf16, #tpu.memory_space<vmem>>, vector<64x4xbf16>,
    %c15 = arith.constant 15 : index
    %c0_45 = arith.constant 0 : index
    %65 = vector.load %arg7[%c15, %c0_45] : memref<608x4xbf16, #tpu.memory_space<vmem>>, vector<512x4xbf16>
    %c16 = arith.constant 16 : index
    %c0_46 = arith.constant 0 : index
    %66 = vector.load %arg7[%c16, %c0_46] : memref<608x4xbf16, #tpu.memory_space<vmem>>, vector<512x4xbf16>
    %c17 = arith.constant 17 : index
    %c0_47 = arith.constant 0 : index
    %67 = vector.load %arg7[%c17, %c0_47] : memref<608x4xbf16, #tpu.memory_space<vmem>>, vector<512x4xbf16>
    %c47 = arith.constant 47 : index
    %c0_48 = arith.constant 0 : index
    %68 = vector.load %arg7[%c47, %c0_48] : memref<608x4xbf16, #tpu.memory_space<vmem>>, vector<512x4xbf16>
    %c48_49 = arith.constant 48 : index
    %c0_50 = arith.constant 0 : index
    %69 = vector.load %arg7[%c48_49, %c0_50] : memref<608x4xbf16, #tpu.memory_space<vmem>>, vector<512x4xbf16>
    %c49 = arith.constant 49 : index
    %c0_51 = arith.constant 0 : index
    %70 = vector.load %arg7[%c49, %c0_51] : memref<608x4xbf16, #tpu.memory_space<vmem>>, vector<512x4xbf16>
    %c79 = arith.constant 79 : index
    %c0_52 = arith.constant 0 : index
    %71 = vector.load %arg7[%c79, %c0_52] : memref<608x4xbf16, #tpu.memory_space<vmem>>, vector<512x4xbf16>
    %c80_53 = arith.constant 80 : index
    %c0_54 = arith.constant 0 : index
    %72 = vector.load %arg7[%c80_53, %c0_54] : memref<608x4xbf16, #tpu.memory_space<vmem>>, vector<512x4xbf16>
    %c81 = arith.constant 81 : index
    %c0_55 = arith.constant 0 : index
    %73 = vector.load %arg7[%c81, %c0_55] : memref<608x4xbf16, #tpu.memory_space<vmem>>, vector<512x4xbf16>
    %74 = tpu.concatenate %65, %66, %67, %68, %69, %70, %71, %72, %73 in 1 : vector<512x4xbf16>, vector<512x4xbf16>, vector<512x4xbf16>, vector<512x4xbf16>, vector<512x4xbf16>, vector<512x4xbf16>, vector<512x4xbf16>, vector<512x4xbf16>, vector<512x4xbf16> -> vector<512x36xbf16>
    %75 = arith.extf %1 : vector<256x8xbf16> to vector<256x8xf32>
    %76 = vector.shape_cast %74 : vector<512x36xbf16> to vector<16x32x36xbf16>
    %77 = vector.extract_strided_slice %76 {offsets = [0, 0, 0], sizes = [16, 16, 36], strides = [1, 1, 1]} : vector<16x32x36xbf16> to vector<16x16x36xbf16>
    %78 = vector.shape_cast %77 : vector<16x16x36xbf16> to vector<256x36xbf16>
    %c0_56 = arith.constant 0 : index
    %c0_57 = arith.constant 0 : index
    %79 = vector.load %arg4[%c0_56, %c0_57] : memref<36x8xbf16, #tpu.memory_space<vmem>>, vector<36x8xbf16>
    %cst_58 = arith.constant dense<0.000000e+00> : vector<256x8xf32>
    %80 = tpu.matmul %78, %79, %cst_58 {dimension_numbers = #tpu.dot_dimension_numbers<[1], [0], [0], [1], [0, 0, 1, 1], [], []>} : vector<256x36xbf16>, vector<36x8xbf16>, vector<256x8xf32> -> vector<256x8xf32>
    %c0_59 = arith.constant 0 : index
    %c0_60 = arith.constant 0 : index
    %81 = vector.load %arg5[%c0_59, %c0_60] : memref<1x8xf32, #tpu.memory_space<vmem>>, vector<1x8xf32>
    %82 = vector.broadcast %81 : vector<1x8xf32> to vector<256x8xf32>
    %83 = arith.addf %80, %82 : vector<256x8xf32>
    %cst_61 = arith.constant 0.000000e+00 : f32
    %84 = vector.broadcast %cst_61 : f32 to vector<256x8xf32>
    %85 = arith.cmpf oge, %83, %84 : vector<256x8xf32>
    %cst_62 = arith.constant 1.000000e-01 : f32
    %86 = vector.broadcast %cst_62 : f32 to vector<256x8xf32>
    %87 = arith.mulf %86, %83 : vector<256x8xf32>
    %88 = arith.select %85, %83, %87 : vector<256x8xi1>, vector<256x8xf32>
    %89 = arith.addf %75, %88 : vector<256x8xf32>
    %c0_63 = arith.constant 0 : index
    %c0_64 = arith.constant 0 : index
    %c0_65 = arith.constant 0 : index
    %90 = vector.load %arg6[%c0_63, %c0_64, %c0_65] : memref<1x256x8xf32, #tpu.memory_space<vmem>>, vector<1x256x8xf32>
    %91 = vector.shape_cast %90 : vector<1x256x8xf32> to vector<256x8xf32>
    %92 = vector.shape_cast %89 : vector<256x8xf32> to vector<1x256x8xf32>
    tpu.vector_store %arg6[%c0_63, %c0_64, %c0_65], %92 {strides = array<i32>} : memref<1x256x8xf32, #tpu.memory_space<vmem>>, vector<1x256x8xf32>,
    return
  }
  func.func @transform_0(%arg0: i32) -> (i32, i32, i32) {
    %c0_i32 = arith.constant 0 : i32
    %c0_i32_0 = arith.constant 0 : i32
    %c0_i32_1 = arith.constant 0 : i32
    return %arg0, %c0_i32, %c0_i32_0 : i32, i32, i32
  }
  func.func @transform_1(%arg0: i32) -> (i32, i32) {
    %c0_i32 = arith.constant 0 : i32
    %c0_i32_0 = arith.constant 0 : i32
    %c0_i32_1 = arith.constant 0 : i32
    return %c0_i32, %c0_i32_0 : i32, i32
  }
  func.func @transform_2(%arg0: i32) -> (i32, i32) {
    %c0_i32 = arith.constant 0 : i32
    %c0_i32_0 = arith.constant 0 : i32
    %c0_i32_1 = arith.constant 0 : i32
    return %c0_i32, %c0_i32_0 : i32, i32
  }
  func.func @transform_3(%arg0: i32) -> (i32, i32) {
    %c0_i32 = arith.constant 0 : i32
    %c0_i32_0 = arith.constant 0 : i32
    %c0_i32_1 = arith.constant 0 : i32
    return %c0_i32, %c0_i32_0 : i32, i32
  }
  func.func @transform_4(%arg0: i32) -> (i32, i32) {
    %c0_i32 = arith.constant 0 : i32
    %c0_i32_0 = arith.constant 0 : i32
    %c0_i32_1 = arith.constant 0 : i32
    return %c0_i32, %c0_i32_0 : i32, i32
  }
  func.func @transform_5(%arg0: i32) -> (i32, i32, i32) {
    %c0_i32 = arith.constant 0 : i32
    %c0_i32_0 = arith.constant 0 : i32
    %c0_i32_1 = arith.constant 0 : i32
    return %arg0, %c0_i32, %c0_i32_0 : i32, i32, i32
  }
}

</mosaic_0001>

<llo_original>
// kernel: tpu_custom_call.1
$region0: #{tpu_custom_call.1}
  #allocation0 [shape = 'u32[]', space=smem, size = 0x4, offset = 0x4, fixed_abs, tag = 'smem constant byte address 0x4 - core index']
  #allocation1 [shape = 'u32[144,128]{1,0:T(1,128)}', space=vmem, size = 0x12000, scoped, tag = 'internal scratch']
  #allocation2 [shape = 'bf16[608,4]{1,0:T(8,128)(2,1)}', space=vmem, size = 0x26000, scoped, tag = 'scratch operand']
  %s0 = inlined_call_operand.vmem [shape: bf16[2,256,8], index: 0, kind: input, shape index: {}]
  %s1 = inlined_call_operand.vmem [shape: bf16[8,4], index: 1, kind: input, shape index: {}]
  %s2 = inlined_call_operand.vmem [shape: f32[1,4], index: 2, kind: input, shape index: {}]
  %s3 = inlined_call_operand.vmem [shape: bf16[36,8], index: 3, kind: input, shape index: {}]
  %s4 = inlined_call_operand.vmem [shape: f32[1,8], index: 4, kind: input, shape index: {}]
  %s5 = inlined_call_operand.vmem [shape: f32[2,256,8], index: 5, kind: output, shape index: {}]
  %s6 = sld [smem:[#allocation0]]
  $region53: #{tpu_custom_call.1} parent=0
    _
  %s8 = ssub.s32 1, %s6
  %s9 = scalar_select 0, %s8, %s6
  loop: start=0, step=1, limit=4
  $region2: #{tpu_custom_call.1} parent=0 // loop_pre_header
    _
  $region3: #{tpu_custom_call.1} parent=0 // loop_header
    %s11 = sphi 0, %s15
    %p12 = scmp.ge.s32.totalorder %s11, 4
    %s21 = sphi 0, %s23
    %s24 = sphi 0, %s21
    %s25 = sphi 0, %s24
    %s41 = sphi 0, %s25
    %s45 = sphi 0, %s45
    %s47 = sphi 0, %s45
    %s48 = sphi 0, %s47
    %s62 = sphi 0, %s48
    %s66 = sphi 0, %s66
    %s68 = sphi 0, %s66
    %s69 = sphi 0, %s68
    %s83 = sphi 0, %s69
    %s87 = sphi 0, %s87
    %s89 = sphi 0, %s87
    %s90 = sphi 0, %s89
    %s104 = sphi 0, %s90
    %s108 = sphi 0, %s108
    %s110 = sphi 0, %s108
    %s111 = sphi 0, %s110
    %s125 = sphi 0, %s111
    %s131 = sphi 0, %s133
    %s134 = sphi 0, %s131
    %s135 = sphi 0, %s134
    %s151 = sphi 0, %s135
  $region4: #{tpu_custom_call.1} parent=0 // loop_header_branch
    %14 = sbr.rel (%p12) target = $region8
  $region5: #{tpu_custom_call.1} parent=0 // loop_body
    %s16 = ssub.s32 %s11, 1
    %s17 = ssub.s32 %s11, 2
    %s18 = sadd.s32 %s11, 1
    %s19 = ssub.s32 %s11, %s18
    %p20 = scmp.eq.s32.totalorder %s19, 0
    %s22 = sadd.s32 %s21, 1
    %s23 = scalar_select %p20, %s21, %s22
    %p26 = pneg %p20
    %p27 = scmp.eq.s32.totalorder %s11, 1
    %p28 = por %p26, %p27
    %p29 = scmp.ne.s32.totalorder %s21, %s24
    %p30 = scmp.eq.s32.totalorder %s11, 0
    %p31 = por %p29, %p30
    %p32 = scmp.ne.s32.totalorder %s21, %s24
    %p33 = scmp.eq.s32.totalorder %s16, 1
    %p34 = por %p32, %p33
    %p35 = scmp.ne.s32.totalorder %s24, %s25
    %p36 = scmp.eq.s32.totalorder %s16, 0
    %p37 = por %p35, %p36
    %p38 = scmp.ne.s32.totalorder %s24, %s25
    %p39 = scmp.eq.s32.totalorder %s17, 1
    %p40 = por %p38, %p39
    %p42 = scmp.ne.s32.totalorder %s25, %s41
    %p43 = scmp.eq.s32.totalorder %s17, 0
    %p44 = por %p42, %p43
    %s46 = sadd.s32 %s45, 1
    %p49 = scmp.eq.s32.totalorder %s11, 1
    %p50 = scmp.ne.s32.totalorder %s45, %s47
    %p51 = scmp.eq.s32.totalorder %s11, 0
    %p52 = por %p50, %p51
    %p53 = scmp.ne.s32.totalorder %s45, %s47
    %p54 = scmp.eq.s32.totalorder %s16, 1
    %p55 = por %p53, %p54
    %p56 = scmp.ne.s32.totalorder %s47, %s48
    %p57 = scmp.eq.s32.totalorder %s16, 0
    %p58 = por %p56, %p57
    %p59 = scmp.ne.s32.totalorder %s47, %s48
    %p60 = scmp.eq.s32.totalorder %s17, 1
    %p61 = por %p59, %p60
    %p63 = scmp.ne.s32.totalorder %s48, %s62
    %p64 = scmp.eq.s32.totalorder %s17, 0
    %p65 = por %p63, %p64
    %s67 = sadd.s32 %s66, 1
    %p70 = scmp.eq.s32.totalorder %s11, 1
    %p71 = scmp.ne.s32.totalorder %s66, %s68
    %p72 = scmp.eq.s32.totalorder %s11, 0
    %p73 = por %p71, %p72
    %p74 = scmp.ne.s32.totalorder %s66, %s68
    %p75 = scmp.eq.s32.totalorder %s16, 1
    %p76 = por %p74, %p75
    %p77 = scmp.ne.s32.totalorder %s68, %s69
    %p78 = scmp.eq.s32.totalorder %s16, 0
    %p79 = por %p77, %p78
    %p80 = scmp.ne.s32.totalorder %s68, %s69
    %p81 = scmp.eq.s32.totalorder %s17, 1
    %p82 = por %p80, %p81
    %p84 = scmp.ne.s32.totalorder %s69, %s83
    %p85 = scmp.eq.s32.totalorder %s17, 0
    %p86 = por %p84, %p85
    %s88 = sadd.s32 %s87, 1
    %p91 = scmp.eq.s32.totalorder %s11, 1
    %p92 = scmp.ne.s32.totalorder %s87, %s89
    %p93 = scmp.eq.s32.totalorder %s11, 0
    %p94 = por %p92, %p93
    %p95 = scmp.ne.s32.totalorder %s87, %s89
    %p96 = scmp.eq.s32.totalorder %s16, 1
    %p97 = por %p95, %p96
    %p98 = scmp.ne.s32.totalorder %s89, %s90
    %p99 = scmp.eq.s32.totalorder %s16, 0
    %p100 = por %p98, %p99
    %p101 = scmp.ne.s32.totalorder %s89, %s90
    %p102 = scmp.eq.s32.totalorder %s17, 1
    %p103 = por %p101, %p102
    %p105 = scmp.ne.s32.totalorder %s90, %s104
    %p106 = scmp.eq.s32.totalorder %s17, 0
    %p107 = por %p105, %p106
    %s109 = sadd.s32 %s108, 1
    %p112 = scmp.eq.s32.totalorder %s11, 1
    %p113 = scmp.ne.s32.totalorder %s108, %s110
    %p114 = scmp.eq.s32.totalorder %s11, 0
    %p115 = por %p113, %p114
    %p116 = scmp.ne.s32.totalorder %s108, %s110
    %p117 = scmp.eq.s32.totalorder %s16, 1
    %p118 = por %p116, %p117
    %p119 = scmp.ne.s32.totalorder %s110, %s111
    %p120 = scmp.eq.s32.totalorder %s16, 0
    %p121 = por %p119, %p120
    %p122 = scmp.ne.s32.totalorder %s110, %s111
    %p123 = scmp.eq.s32.totalorder %s17, 1
    %p124 = por %p122, %p123
    %p126 = scmp.ne.s32.totalorder %s111, %s125
    %p127 = scmp.eq.s32.totalorder %s17, 0
    %p128 = por %p126, %p127
    %s129 = ssub.s32 %s11, %s18
    %p130 = scmp.eq.s32.totalorder %s129, 0
    %s132 = sadd.s32 %s131, 1
    %s133 = scalar_select %p130, %s131, %s132
    %p136 = pneg %p130
    %p137 = scmp.eq.s32.totalorder %s11, 1
    %p138 = por %p136, %p137
    %p139 = scmp.ne.s32.totalorder %s131, %s134
    %p140 = scmp.eq.s32.totalorder %s11, 0
    %p141 = por %p139, %p140
    %p142 = scmp.ne.s32.totalorder %s131, %s134
    %p143 = scmp.eq.s32.totalorder %s16, 1
    %p144 = por %p142, %p143
    %p145 = scmp.ne.s32.totalorder %s134, %s135
    %p146 = scmp.eq.s32.totalorder %s16, 0
    %p147 = por %p145, %p146
    %p148 = scmp.ne.s32.totalorder %s134, %s135
    %p149 = scmp.eq.s32.totalorder %s17, 1
    %p150 = por %p148, %p149
    %p152 = scmp.ne.s32.totalorder %s135, %s151
    %p153 = scmp.eq.s32.totalorder %s17, 0
    %p154 = por %p152, %p153
    %p155 = scmp.le.s32.totalorder 1, %s11
    %p156 = scmp.lt.s32.totalorder %s11, 3
    %p157 = pnand %p155, %p156
    %p158 = pneg %p157
    // Predicated region
    $region9: #{tpu_custom_call.1} parent=5 // pred_check
      _
    $region10: #{tpu_custom_call.1} parent=5 // pred_check_branch
      %160 = sbr.rel (%p157) target = $region12
    $region11: #{tpu_custom_call.1} parent=5 // pred_region
      %s161 = ssub.s32 %s11, 1
      // Predicated region
      $region13: #{tpu_custom_call.1} parent=11 // pred_check
        %p162 = pneg %p58
      $region14: #{tpu_custom_call.1} parent=11 // pred_check_branch
        %164 = sbr.rel (%p162) target = $region16
      $region15: #{tpu_custom_call.1} parent=11 // pred_region
        _
      $region16: #{tpu_custom_call.1} parent=11 // pred_fallthru
        _
      // Predicated region
      $region17: #{tpu_custom_call.1} parent=11 // pred_check
        %p165 = pneg %p79
      $region18: #{tpu_custom_call.1} parent=11 // pred_check_branch
        %167 = sbr.rel (%p165) target = $region20
      $region19: #{tpu_custom_call.1} parent=11 // pred_region
        _
      $region20: #{tpu_custom_call.1} parent=11 // pred_fallthru
        _
      // Predicated region
      $region21: #{tpu_custom_call.1} parent=11 // pred_check
        %p168 = pneg %p100
      $region22: #{tpu_custom_call.1} parent=11 // pred_check_branch
        %170 = sbr.rel (%p168) target = $region24
      $region23: #{tpu_custom_call.1} parent=11 // pred_region
        _
      $region24: #{tpu_custom_call.1} parent=11 // pred_fallthru
        _
      // Predicated region
      $region25: #{tpu_custom_call.1} parent=11 // pred_check
        %p171 = pneg %p121
      $region26: #{tpu_custom_call.1} parent=11 // pred_check_branch
        %173 = sbr.rel (%p171) target = $region28
      $region27: #{tpu_custom_call.1} parent=11 // pred_region
        _
      $region28: #{tpu_custom_call.1} parent=11 // pred_fallthru
        _
    $region12: #{tpu_custom_call.1} parent=5 // pred_fallthru
      _
    %p174 = scmp.lt.s32.totalorder %s11, 2
    // Predicated region
    $region29: #{tpu_custom_call.1} parent=5 // pred_check
      %p175 = pneg %p174
    $region30: #{tpu_custom_call.1} parent=5 // pred_check_branch
      %177 = sbr.rel (%p175) target = $region32
    $region31: #{tpu_custom_call.1} parent=5 // pred_region
      // Predicated region
      $region33: #{tpu_custom_call.1} parent=31 // pred_check
        %p178 = pneg %p31
      $region34: #{tpu_custom_call.1} parent=31 // pred_check_branch
        %180 = sbr.rel (%p178) target = $region36
      $region35: #{tpu_custom_call.1} parent=31 // pred_region
        %p181 = scmp.lt.s32.totalorder %s11, 1
        %s182 = scalar_select %p181, %s11, 1
        %s183 = smul.addr %s182, 32
        %s184 = smul.addr %s183, 4
        %s185 = scalar_lea.vmem %s0, %s184
      $region36: #{tpu_custom_call.1} parent=31 // pred_fallthru
        _
    $region32: #{tpu_custom_call.1} parent=5 // pred_fallthru
      _
    %p186 = scmp.le.s32.totalorder 1, %s11
    %p187 = scmp.lt.s32.totalorder %s11, 3
    %p188 = pnand %p186, %p187
    %p189 = pneg %p188
    // Predicated region
    $region37: #{tpu_custom_call.1} parent=5 // pred_check
      _
    $region38: #{tpu_custom_call.1} parent=5 // pred_check_branch
      %191 = sbr.rel (%p188) target = $region40
    $region39: #{tpu_custom_call.1} parent=5 // pred_region
      %s192 = ssub.s32 %s11, 1
      %p193 = scmp.lt.s32.totalorder %s16, 1
      %s194 = scalar_select %p193, %s16, 1
      %s195 = smul.addr %s194, 32
      %s196 = smul.addr %s195, 4
      %s197 = scalar_lea.vmem %s0, %s196
      %p198 = pneg %p37
      %p199 = pneg %p34
      %p200 = pneg %p58
      %p201 = pneg %p55
      %p202 = pneg %p79
      %p203 = pneg %p76
      %p204 = pneg %p100
      %p205 = pneg %p97
      %p206 = pneg %p121
      %p207 = pneg %p118
      %p208 = pneg %p147
      %p209 = pneg %p144
      %p210 = scmp.lt.s32.totalorder %s16, 1
      %s211 = scalar_select %p210, %s16, 1
      %s212 = smul.addr %s211, 32
      %s213 = smul.addr %s212, 8
      %s214 = scalar_lea.vmem %s5, %s213
      %p215 = scmp.lt.s32.totalorder %s16, 1
      %s216 = scalar_select %p215, %s16, 1
      %s217 = smul.addr %s216, 32
      %s218 = smul.addr %s217, 4
      %s219 = scalar_lea.vmem %s0, %s218
      %p220 = scmp.lt.s32.totalorder %s16, 1
      %s221 = scalar_select %p220, %s16, 1
      %s222 = smul.addr %s221, 32
      %s223 = smul.addr %s222, 8
      %s224 = scalar_lea.vmem %s5, %s223
      %v226 = vld [vmem:[%s219] sm:$0xf]
      %v227 = vld [vmem:[%s219 + $0x4] sm:$0xf]
      %v228 = vld [vmem:[%s219 + $0x8] sm:$0xf]
      %v229 = vld [vmem:[%s219 + $0xc] sm:$0xf]
      %v230 = vld [vmem:[%s219 + $0x10] sm:$0xf]
      %v231 = vld [vmem:[%s219 + $0x14] sm:$0xf]
      %v232 = vld [vmem:[%s219 + $0x18] sm:$0xf]
      %v233 = vld [vmem:[%s219 + $0x1c] sm:$0xf]
      %v234 = vld [vmem:[%s219 + $0x20] sm:$0xf]
      %v235 = vld [vmem:[%s219 + $0x24] sm:$0xf]
      %v236 = vld [vmem:[%s219 + $0x28] sm:$0xf]
      %v237 = vld [vmem:[%s219 + $0x2c] sm:$0xf]
      %v238 = vld [vmem:[%s219 + $0x30] sm:$0xf]
      %v239 = vld [vmem:[%s219 + $0x34] sm:$0xf]
      %v240 = vld [vmem:[%s219 + $0x38] sm:$0xf]
      %v241 = vld [vmem:[%s219 + $0x3c] sm:$0xf]
      %v242 = vld [vmem:[%s219 + $0x40] sm:$0xf]
      %v243 = vld [vmem:[%s219 + $0x44] sm:$0xf]
      %v244 = vld [vmem:[%s219 + $0x48] sm:$0xf]
      %v245 = vld [vmem:[%s219 + $0x4c] sm:$0xf]
      %v246 = vld [vmem:[%s219 + $0x50] sm:$0xf]
      %v247 = vld [vmem:[%s219 + $0x54] sm:$0xf]
      %v248 = vld [vmem:[%s219 + $0x58] sm:$0xf]
      %v249 = vld [vmem:[%s219 + $0x5c] sm:$0xf]
      %v250 = vld [vmem:[%s219 + $0x60] sm:$0xf]
      %v251 = vld [vmem:[%s219 + $0x64] sm:$0xf]
      %v252 = vld [vmem:[%s219 + $0x68] sm:$0xf]
      %v253 = vld [vmem:[%s219 + $0x6c] sm:$0xf]
      %v254 = vld [vmem:[%s219 + $0x70] sm:$0xf]
      %v255 = vld [vmem:[%s219 + $0x74] sm:$0xf]
      %v256 = vld [vmem:[%s219 + $0x78] sm:$0xf]
      %v257 = vld [vmem:[%s219 + $0x7c] sm:$0xf]
      %v258 = vld [vmem:[%s1] sm:$0xf]
      %v259 = vld [vmem:[%s2] sm:$0x1]
      %v261 = vlaneseq
      %v262 = vshrl.u32 %v261, 7
      %v263 = vsub.s32 0, %v262
      %v264 = vrot.slane %v259, %v263
      %v298 = vunpack.c.l.b16 %v226
      %v299 = vunpack.c.l.b16 %v227
      %v300 = vunpack.c.l.b16 %v228
      %v301 = vunpack.c.l.b16 %v229
      %v302 = vunpack.c.l.b16 %v230
      %v303 = vunpack.c.l.b16 %v231
      %v304 = vunpack.c.l.b16 %v232
      %v305 = vunpack.c.l.b16 %v233
      %v306 = vunpack.c.l.b16 %v234
      %v307 = vunpack.c.l.b16 %v235
      %v308 = vunpack.c.l.b16 %v236
      %v309 = vunpack.c.l.b16 %v237
      %v310 = vunpack.c.l.b16 %v238
      %v311 = vunpack.c.l.b16 %v239
      %v312 = vunpack.c.l.b16 %v240
      %v313 = vunpack.c.l.b16 %v241
      %v314 = vunpack.c.l.b16 %v242
      %v315 = vunpack.c.l.b16 %v243
      %v316 = vunpack.c.l.b16 %v244
      %v317 = vunpack.c.l.b16 %v245
      %v318 = vunpack.c.l.b16 %v246
      %v319 = vunpack.c.l.b16 %v247
      %v320 = vunpack.c.l.b16 %v248
      %v321 = vunpack.c.l.b16 %v249
      %v322 = vunpack.c.l.b16 %v250
      %v323 = vunpack.c.l.b16 %v251
      %v324 = vunpack.c.l.b16 %v252
      %v325 = vunpack.c.l.b16 %v253
      %v326 = vunpack.c.l.b16 %v254
      %v327 = vunpack.c.l.b16 %v255
      %v328 = vunpack.c.l.b16 %v256
      %v329 = vunpack.c.l.b16 %v257
      %v330 = vpack.c.b16 %v299, %v298
      %v331 = vpack.c.b16 %v301, %v300
      %v332 = vpack.c.b16 %v303, %v302
      %v333 = vpack.c.b16 %v305, %v304
      %v334 = vpack.c.b16 %v307, %v306
      %v335 = vpack.c.b16 %v309, %v308
      %v336 = vpack.c.b16 %v311, %v310
      %v337 = vpack.c.b16 %v313, %v312
      %v338 = vpack.c.b16 %v315, %v314
      %v339 = vpack.c.b16 %v317, %v316
      %v340 = vpack.c.b16 %v319, %v318
      %v341 = vpack.c.b16 %v321, %v320
      %v342 = vpack.c.b16 %v323, %v322
      %v343 = vpack.c.b16 %v325, %v324
      %v344 = vpack.c.b16 %v327, %v326
      %v345 = vpack.c.b16 %v329, %v328
      %vm346 = vcmask 64512
      %v348 = vsel %vm346, %v330, 0
      %v351 = vsel %vm346, %v331, 0
      %v354 = vsel %vm346, %v332, 0
      %v357 = vsel %vm346, %v333, 0
      %v360 = vsel %vm346, %v334, 0
      %v363 = vsel %vm346, %v335, 0
      %v366 = vsel %vm346, %v336, 0
      %v369 = vsel %vm346, %v337, 0
      %v372 = vsel %vm346, %v338, 0
      %v375 = vsel %vm346, %v339, 0
      %v378 = vsel %vm346, %v340, 0
      %v381 = vsel %vm346, %v341, 0
      %v384 = vsel %vm346, %v342, 0
      %v387 = vsel %vm346, %v343, 0
      %v390 = vsel %vm346, %v344, 0
      %v393 = vsel %vm346, %v345, 0
      %vm395 = vcmask 1043456
      %v397 = vsel %vm395, %v258, 0
      %399 = vmatprep.subr.bf16.mxu0 0
      %400 = vmatpush1.bf16.msra.mxu0 0
      %401 = vmatprep.subr.bf16.mxu0 0
      %402 = vmatpush1.bf16.msra.mxu0 0
      %403 = vmatprep.subr.bf16.mxu0 0
      %404 = vmatpush1.bf16.msra.mxu0 0
      %405 = vmatprep.subr.bf16.mxu0 0
      %406 = vmatpush1.bf16.msra.mxu0 0
      %407 = vmatprep.subr.bf16.mxu0 0
      %408 = vmatpush1.bf16.msra.mxu0 0
      %409 = vmatprep.subr.bf16.mxu0 0
      %410 = vmatpush1.bf16.msra.mxu0 0
      %411 = vmatprep.subr.bf16.mxu0 0
      %412 = vmatpush1.bf16.msra.mxu0 0
      %413 = vmatprep.subr.bf16.mxu0 0
      %414 = vmatpush1.bf16.msra.mxu0 %v397
      %415 = vmatprep.subr.bf16.mxu0 0
      %416 = vmatpush2.bf16.msra.mxu0 0
      %417 = vmatprep.subr.bf16.mxu0 0
      %418 = vmatpush2.bf16.msra.mxu0 0
      %419 = vmatprep.subr.bf16.mxu0 0
      %420 = vmatpush2.bf16.msra.mxu0 0
      %421 = vmatprep.subr.bf16.mxu0 0
      %422 = vmatpush2.bf16.msra.mxu0 0
      %423 = vmatprep.subr.bf16.mxu0 0
      %424 = vmatpush2.bf16.msra.mxu0 0
      %425 = vmatprep.subr.bf16.mxu0 0
      %426 = vmatpush2.bf16.msra.mxu0 0
      %427 = vmatprep.subr.bf16.mxu0 0
      %428 = vmatpush2.bf16.msra.mxu0 0
      %429 = vmatprep.subr.bf16.mxu0 0
      %430 = vmatpush2.bf16.msra.mxu0 0
      %431 = vmatprep.mubr.bf16.mxu0 0
      %432 = vmatmul.mubr.bf16.gmra.mxu0 %v348
      %v433 = vpop.f32.mrf.mxu0
      %v434 = vadd.f32 %v264, %v433
      %v435 = vpop.f32.mrf.mxu0
      %v436 = vpop.f32.mrf.mxu0
      %v437 = vadd.f32 %v264, %v436
      %v438 = vpop.f32.mrf.mxu0
      %439 = vmatprep.mubr.bf16.mxu0 0
      %440 = vmatmul.mubr.bf16.gmra.mxu0 %v351
      %v441 = vpop.f32.mrf.mxu0
      %v442 = vadd.f32 %v264, %v441
      %v443 = vpop.f32.mrf.mxu0
      %v444 = vpop.f32.mrf.mxu0
      %v445 = vadd.f32 %v264, %v444
      %v446 = vpop.f32.mrf.mxu0
      %447 = vmatprep.mubr.bf16.mxu0 0
      %448 = vmatmul.mubr.bf16.gmra.mxu0 %v354
      %v449 = vpop.f32.mrf.mxu0
      %v450 = vadd.f32 %v264, %v449
      %v451 = vpop.f32.mrf.mxu0
      %v452 = vpop.f32.mrf.mxu0
      %v453 = vadd.f32 %v264, %v452
      %v454 = vpop.f32.mrf.mxu0
      %455 = vmatprep.mubr.bf16.mxu0 0
      %456 = vmatmul.mubr.bf16.gmra.mxu0 %v357
      %v457 = vpop.f32.mrf.mxu0
      %v458 = vadd.f32 %v264, %v457
      %v459 = vpop.f32.mrf.mxu0
      %v460 = vpop.f32.mrf.mxu0
      %v461 = vadd.f32 %v264, %v460
      %v462 = vpop.f32.mrf.mxu0
      %463 = vmatprep.mubr.bf16.mxu0 0
      %464 = vmatmul.mubr.bf16.gmra.mxu0 %v360
      %v465 = vpop.f32.mrf.mxu0
      %v466 = vadd.f32 %v264, %v465
      %v467 = vpop.f32.mrf.mxu0
      %v468 = vpop.f32.mrf.mxu0
      %v469 = vadd.f32 %v264, %v468
      %v470 = vpop.f32.mrf.mxu0
      %471 = vmatprep.mubr.bf16.mxu0 0
      %472 = vmatmul.mubr.bf16.gmra.mxu0 %v363
      %v473 = vpop.f32.mrf.mxu0
      %v474 = vadd.f32 %v264, %v473
      %v475 = vpop.f32.mrf.mxu0
      %v476 = vpop.f32.mrf.mxu0
      %v477 = vadd.f32 %v264, %v476
      %v478 = vpop.f32.mrf.mxu0
      %479 = vmatprep.mubr.bf16.mxu0 0
      %480 = vmatmul.mubr.bf16.gmra.mxu0 %v366
      %v481 = vpop.f32.mrf.mxu0
      %v482 = vadd.f32 %v264, %v481
      %v483 = vpop.f32.mrf.mxu0
      %v484 = vpop.f32.mrf.mxu0
      %v485 = vadd.f32 %v264, %v484
      %v486 = vpop.f32.mrf.mxu0
      %487 = vmatprep.mubr.bf16.mxu0 0
      %488 = vmatmul.mubr.bf16.gmra.mxu0 %v369
      %v489 = vpop.f32.mrf.mxu0
      %v490 = vadd.f32 %v264, %v489
      %v491 = vpop.f32.mrf.mxu0
      %v492 = vpop.f32.mrf.mxu0
      %v493 = vadd.f32 %v264, %v492
      %v494 = vpop.f32.mrf.mxu0
      %495 = vmatprep.mubr.bf16.mxu0 0
      %496 = vmatmul.mubr.bf16.gmra.mxu0 %v372
      %v497 = vpop.f32.mrf.mxu0
      %v498 = vadd.f32 %v264, %v497
      %v499 = vpop.f32.mrf.mxu0
      %v500 = vpop.f32.mrf.mxu0
      %v501 = vadd.f32 %v264, %v500
      %v502 = vpop.f32.mrf.mxu0
      %503 = vmatprep.mubr.bf16.mxu0 0
      %504 = vmatmul.mubr.bf16.gmra.mxu0 %v375
      %v505 = vpop.f32.mrf.mxu0
      %v506 = vadd.f32 %v264, %v505
      %v507 = vpop.f32.mrf.mxu0
      %v508 = vpop.f32.mrf.mxu0
      %v509 = vadd.f32 %v264, %v508
      %v510 = vpop.f32.mrf.mxu0
      %511 = vmatprep.mubr.bf16.mxu0 0
      %512 = vmatmul.mubr.bf16.gmra.mxu0 %v378
      %v513 = vpop.f32.mrf.mxu0
      %v514 = vadd.f32 %v264, %v513
      %v515 = vpop.f32.mrf.mxu0
      %v516 = vpop.f32.mrf.mxu0
      %v517 = vadd.f32 %v264, %v516
      %v518 = vpop.f32.mrf.mxu0
      %519 = vmatprep.mubr.bf16.mxu0 0
      %520 = vmatmul.mubr.bf16.gmra.mxu0 %v381
      %v521 = vpop.f32.mrf.mxu0
      %v522 = vadd.f32 %v264, %v521
      %v523 = vpop.f32.mrf.mxu0
      %v524 = vpop.f32.mrf.mxu0
      %v525 = vadd.f32 %v264, %v524
      %v526 = vpop.f32.mrf.mxu0
      %527 = vmatprep.mubr.bf16.mxu0 0
      %528 = vmatmul.mubr.bf16.gmra.mxu0 %v384
      %v529 = vpop.f32.mrf.mxu0
      %v530 = vadd.f32 %v264, %v529
      %v531 = vpop.f32.mrf.mxu0
      %v532 = vpop.f32.mrf.mxu0
      %v533 = vadd.f32 %v264, %v532
      %v534 = vpop.f32.mrf.mxu0
      %535 = vmatprep.mubr.bf16.mxu0 0
      %536 = vmatmul.mubr.bf16.gmra.mxu0 %v387
      %v537 = vpop.f32.mrf.mxu0
      %v538 = vadd.f32 %v264, %v537
      %v539 = vpop.f32.mrf.mxu0
      %v540 = vpop.f32.mrf.mxu0
      %v541 = vadd.f32 %v264, %v540
      %v542 = vpop.f32.mrf.mxu0
      %543 = vmatprep.mubr.bf16.mxu0 0
      %544 = vmatmul.mubr.bf16.gmra.mxu0 %v390
      %v545 = vpop.f32.mrf.mxu0
      %v546 = vadd.f32 %v264, %v545
      %v547 = vpop.f32.mrf.mxu0
      %v548 = vpop.f32.mrf.mxu0
      %v549 = vadd.f32 %v264, %v548
      %v550 = vpop.f32.mrf.mxu0
      %551 = vmatprep.mubr.bf16.mxu0 0
      %552 = vmatmul.mubr.bf16.gmra.mxu0 %v393
      %v553 = vpop.f32.mrf.mxu0
      %v554 = vadd.f32 %v264, %v553
      %v555 = vpop.f32.mrf.mxu0
      %v556 = vpop.f32.mrf.mxu0
      %v557 = vadd.f32 %v264, %v556
      %v558 = vpop.f32.mrf.mxu0
      %559 = vdwg.mxu0
      %vm560 = vcmp.ge.f32.partialorder %v434, 0.0
      %vm561 = vcmp.ge.f32.partialorder %v437, 0.0
      %vm562 = vcmp.ge.f32.partialorder %v442, 0.0
      %vm563 = vcmp.ge.f32.partialorder %v445, 0.0
      %vm564 = vcmp.ge.f32.partialorder %v450, 0.0
      %vm565 = vcmp.ge.f32.partialorder %v453, 0.0
      %vm566 = vcmp.ge.f32.partialorder %v458, 0.0
      %vm567 = vcmp.ge.f32.partialorder %v461, 0.0
      %vm568 = vcmp.ge.f32.partialorder %v466, 0.0
      %vm569 = vcmp.ge.f32.partialorder %v469, 0.0
      %vm570 = vcmp.ge.f32.partialorder %v474, 0.0
      %vm571 = vcmp.ge.f32.partialorder %v477, 0.0
      %vm572 = vcmp.ge.f32.partialorder %v482, 0.0
      %vm573 = vcmp.ge.f32.partialorder %v485, 0.0
      %vm574 = vcmp.ge.f32.partialorder %v490, 0.0
      %vm575 = vcmp.ge.f32.partialorder %v493, 0.0
      %vm576 = vcmp.ge.f32.partialorder %v498, 0.0
      %vm577 = vcmp.ge.f32.partialorder %v501, 0.0
      %vm578 = vcmp.ge.f32.partialorder %v506, 0.0
      %vm579 = vcmp.ge.f32.partialorder %v509, 0.0
      %vm580 = vcmp.ge.f32.partialorder %v514, 0.0
      %vm581 = vcmp.ge.f32.partialorder %v517, 0.0
      %vm582 = vcmp.ge.f32.partialorder %v522, 0.0
      %vm583 = vcmp.ge.f32.partialorder %v525, 0.0
      %vm584 = vcmp.ge.f32.partialorder %v530, 0.0
      %vm585 = vcmp.ge.f32.partialorder %v533, 0.0
      %vm586 = vcmp.ge.f32.partialorder %v538, 0.0
      %vm587 = vcmp.ge.f32.partialorder %v541, 0.0
      %vm588 = vcmp.ge.f32.partialorder %v546, 0.0
      %vm589 = vcmp.ge.f32.partialorder %v549, 0.0
      %vm590 = vcmp.ge.f32.partialorder %v554, 0.0
      %vm591 = vcmp.ge.f32.partialorder %v557, 0.0
      %v592 = vmul.f32 %v434, 0.1
      %v593 = vmul.f32 %v437, 0.1
      %v594 = vmul.f32 %v442, 0.1
      %v595 = vmul.f32 %v445, 0.1
      %v596 = vmul.f32 %v450, 0.1
      %v597 = vmul.f32 %v453, 0.1
      %v598 = vmul.f32 %v458, 0.1
      %v599 = vmul.f32 %v461, 0.1
      %v600 = vmul.f32 %v466, 0.1
      %v601 = vmul.f32 %v469, 0.1
      %v602 = vmul.f32 %v474, 0.1
      %v603 = vmul.f32 %v477, 0.1
      %v604 = vmul.f32 %v482, 0.1
      %v605 = vmul.f32 %v485, 0.1
      %v606 = vmul.f32 %v490, 0.1
      %v607 = vmul.f32 %v493, 0.1
      %v608 = vmul.f32 %v498, 0.1
      %v609 = vmul.f32 %v501, 0.1
      %v610 = vmul.f32 %v506, 0.1
      %v611 = vmul.f32 %v509, 0.1
      %v612 = vmul.f32 %v514, 0.1
      %v613 = vmul.f32 %v517, 0.1
      %v614 = vmul.f32 %v522, 0.1
      %v615 = vmul.f32 %v525, 0.1
      %v616 = vmul.f32 %v530, 0.1
      %v617 = vmul.f32 %v533, 0.1
      %v618 = vmul.f32 %v538, 0.1
      %v619 = vmul.f32 %v541, 0.1
      %v620 = vmul.f32 %v546, 0.1
      %v621 = vmul.f32 %v549, 0.1
      %v622 = vmul.f32 %v554, 0.1
      %v623 = vmul.f32 %v557, 0.1
      %v624 = vsel %vm560, %v434, %v592
      %v625 = vsel %vm561, %v437, %v593
      %v626 = vsel %vm562, %v442, %v594
      %v627 = vsel %vm563, %v445, %v595
      %v628 = vsel %vm564, %v450, %v596
      %v629 = vsel %vm565, %v453, %v597
      %v630 = vsel %vm566, %v458, %v598
      %v631 = vsel %vm567, %v461, %v599
      %v632 = vsel %vm568, %v466, %v600
      %v633 = vsel %vm569, %v469, %v601
      %v634 = vsel %vm570, %v474, %v602
      %v635 = vsel %vm571, %v477, %v603
      %v636 = vsel %vm572, %v482, %v604
      %v637 = vsel %vm573, %v485, %v605
      %v638 = vsel %vm574, %v490, %v606
      %v639 = vsel %vm575, %v493, %v607
      %v640 = vsel %vm576, %v498, %v608
      %v641 = vsel %vm577, %v501, %v609
      %v642 = vsel %vm578, %v506, %v610
      %v643 = vsel %vm579, %v509, %v611
      %v644 = vsel %vm580, %v514, %v612
      %v645 = vsel %vm581, %v517, %v613
      %v646 = vsel %vm582, %v522, %v614
      %v647 = vsel %vm583, %v525, %v615
      %v648 = vsel %vm584, %v530, %v616
      %v649 = vsel %vm585, %v533, %v617
      %v650 = vsel %vm586, %v538, %v618
      %v651 = vsel %vm587, %v541, %v619
      %v652 = vsel %vm588, %v546, %v620
      %v653 = vsel %vm589, %v549, %v621
      %v654 = vsel %vm590, %v554, %v622
      %v655 = vsel %vm591, %v557, %v623
      %v656 = vpack.c.bf16 %v625, %v624
      %v657 = vpack.c.bf16 %v627, %v626
      %v658 = vpack.c.bf16 %v629, %v628
      %v659 = vpack.c.bf16 %v631, %v630
      %v660 = vpack.c.bf16 %v633, %v632
      %v661 = vpack.c.bf16 %v635, %v634
      %v662 = vpack.c.bf16 %v637, %v636
      %v663 = vpack.c.bf16 %v639, %v638
      %v664 = vpack.c.bf16 %v641, %v640
      %v665 = vpack.c.bf16 %v643, %v642
      %v666 = vpack.c.bf16 %v645, %v644
      %v667 = vpack.c.bf16 %v647, %v646
      %v668 = vpack.c.bf16 %v649, %v648
      %v669 = vpack.c.bf16 %v651, %v650
      %v670 = vpack.c.bf16 %v653, %v652
      %v671 = vpack.c.bf16 %v655, %v654
      %vm672 = vcmask 27648
      %673 = vst.msk [vmem:[#allocation2] sm:$0xf] %vm672, 0
      %674 = vst.msk [vmem:[#allocation2 + $0x4] sm:$0xf] %vm672, 0
      %675 = vst.msk [vmem:[#allocation2 + $0x8] sm:$0xf] %vm672, 0
      %676 = vst.msk [vmem:[#allocation2 + $0xc] sm:$0xf] %vm672, 0
      %677 = vst.msk [vmem:[#allocation2 + $0x10] sm:$0xf] %vm672, 0
      %678 = vst.msk [vmem:[#allocation2 + $0x14] sm:$0xf] %vm672, 0
      %v680 = vunpack.c.l.b16 %v656
      %v681 = vunpack.c.h.b16 %v656
      %v682 = vpack.c.b16 %v680, %v680
      %v683 = vpack.c.b16 %v681, %v681
      %686 = vst.msk [vmem:[#allocation2 + $0x18] sm:$0xf] %vm672, %v682
      %687 = vst.msk [vmem:[#allocation2 + $0x1c] sm:$0xf] %vm672, %v683
      %688 = vst.msk [vmem:[#allocation2 + $0x20] sm:$0xf] %vm672, 0
      %689 = vst.msk [vmem:[#allocation2 + $0x24] sm:$0xf] %vm672, 0
      %v691 = vunpack.c.l.b16 %v657
      %v692 = vunpack.c.h.b16 %v657
      %v693 = vpack.c.b16 %v691, %v691
      %v694 = vpack.c.b16 %v692, %v692
      %697 = vst.msk [vmem:[#allocation2 + $0x28] sm:$0xf] %vm672, %v693
      %698 = vst.msk [vmem:[#allocation2 + $0x2c] sm:$0xf] %vm672, %v694
      %699 = vst.msk [vmem:[#allocation2 + $0x30] sm:$0xf] %vm672, 0
      %700 = vst.msk [vmem:[#allocation2 + $0x34] sm:$0xf] %vm672, 0
      %v702 = vunpack.c.l.b16 %v658
      %v703 = vunpack.c.h.b16 %v658
      %v704 = vpack.c.b16 %v702, %v702
      %v705 = vpack.c.b16 %v703, %v703
      %708 = vst.msk [vmem:[#allocation2 + $0x38] sm:$0xf] %vm672, %v704
      %709 = vst.msk [vmem:[#allocation2 + $0x3c] sm:$0xf] %vm672, %v705
      %710 = vst.msk [vmem:[#allocation2 + $0x40] sm:$0xf] %vm672, 0
      %711 = vst.msk [vmem:[#allocation2 + $0x44] sm:$0xf] %vm672, 0
      %v713 = vunpack.c.l.b16 %v659
      %v714 = vunpack.c.h.b16 %v659
      %v715 = vpack.c.b16 %v713, %v713
      %v716 = vpack.c.b16 %v714, %v714
      %719 = vst.msk [vmem:[#allocation2 + $0x48] sm:$0xf] %vm672, %v715
      %720 = vst.msk [vmem:[#allocation2 + $0x4c] sm:$0xf] %vm672, %v716
      %721 = vst.msk [vmem:[#allocation2 + $0x50] sm:$0xf] %vm672, 0
      %722 = vst.msk [vmem:[#allocation2 + $0x54] sm:$0xf] %vm672, 0
      %v724 = vunpack.c.l.b16 %v660
      %v725 = vunpack.c.h.b16 %v660
      %v726 = vpack.c.b16 %v724, %v724
      %v727 = vpack.c.b16 %v725, %v725
      %730 = vst.msk [vmem:[#allocation2 + $0x58] sm:$0xf] %vm672, %v726
      %731 = vst.msk [vmem:[#allocation2 + $0x5c] sm:$0xf] %vm672, %v727
      %732 = vst.msk [vmem:[#allocation2 + $0x60] sm:$0xf] %vm672, 0
      %733 = vst.msk [vmem:[#allocation2 + $0x64] sm:$0xf] %vm672, 0
      %v735 = vunpack.c.l.b16 %v661
      %v736 = vunpack.c.h.b16 %v661
      %v737 = vpack.c.b16 %v735, %v735
      %v738 = vpack.c.b16 %v736, %v736
      %741 = vst.msk [vmem:[#allocation2 + $0x68] sm:$0xf] %vm672, %v737
      %742 = vst.msk [vmem:[#allocation2 + $0x6c] sm:$0xf] %vm672, %v738
      %743 = vst.msk [vmem:[#allocation2 + $0x70] sm:$0xf] %vm672, 0
      %744 = vst.msk [vmem:[#allocation2 + $0x74] sm:$0xf] %vm672, 0
      %v746 = vunpack.c.l.b16 %v662
      %v747 = vunpack.c.h.b16 %v662
      %v748 = vpack.c.b16 %v746, %v746
      %v749 = vpack.c.b16 %v747, %v747
      %752 = vst.msk [vmem:[#allocation2 + $0x78] sm:$0xf] %vm672, %v748
      %753 = vst.msk [vmem:[#allocation2 + $0x7c] sm:$0xf] %vm672, %v749
      %754 = vst.msk [vmem:[#allocation2 + $0x80] sm:$0xf] %vm672, 0
      %755 = vst.msk [vmem:[#allocation2 + $0x84] sm:$0xf] %vm672, 0
      %v757 = vunpack.c.l.b16 %v663
      %v758 = vunpack.c.h.b16 %v663
      %v759 = vpack.c.b16 %v757, %v757
      %v760 = vpack.c.b16 %v758, %v758
      %763 = vst.msk [vmem:[#allocation2 + $0x88] sm:$0xf] %vm672, %v759
      %764 = vst.msk [vmem:[#allocation2 + $0x8c] sm:$0xf] %vm672, %v760
      %765 = vst.msk [vmem:[#allocation2 + $0x90] sm:$0xf] %vm672, 0
      %766 = vst.msk [vmem:[#allocation2 + $0x94] sm:$0xf] %vm672, 0
      %v768 = vunpack.c.l.b16 %v664
      %v769 = vunpack.c.h.b16 %v664
      %v770 = vpack.c.b16 %v768, %v768
      %v771 = vpack.c.b16 %v769, %v769
      %774 = vst.msk [vmem:[#allocation2 + $0x98] sm:$0xf] %vm672, %v770
      %775 = vst.msk [vmem:[#allocation2 + $0x9c] sm:$0xf] %vm672, %v771
      %776 = vst.msk [vmem:[#allocation2 + $0xa0] sm:$0xf] %vm672, 0
      %777 = vst.msk [vmem:[#allocation2 + $0xa4] sm:$0xf] %vm672, 0
      %v779 = vunpack.c.l.b16 %v665
      %v780 = vunpack.c.h.b16 %v665
      %v781 = vpack.c.b16 %v779, %v779
      %v782 = vpack.c.b16 %v780, %v780
      %785 = vst.msk [vmem:[#allocation2 + $0xa8] sm:$0xf] %vm672, %v781
      %786 = vst.msk [vmem:[#allocation2 + $0xac] sm:$0xf] %vm672, %v782
      %787 = vst.msk [vmem:[#allocation2 + $0xb0] sm:$0xf] %vm672, 0
      %788 = vst.msk [vmem:[#allocation2 + $0xb4] sm:$0xf] %vm672, 0
      %v790 = vunpack.c.l.b16 %v666
      %v791 = vunpack.c.h.b16 %v666
      %v792 = vpack.c.b16 %v790, %v790
      %v793 = vpack.c.b16 %v791, %v791
      %796 = vst.msk [vmem:[#allocation2 + $0xb8] sm:$0xf] %vm672, %v792
      %797 = vst.msk [vmem:[#allocation2 + $0xbc] sm:$0xf] %vm672, %v793
      %798 = vst.msk [vmem:[#allocation2 + $0xc0] sm:$0xf] %vm672, 0
      %799 = vst.msk [vmem:[#allocation2 + $0xc4] sm:$0xf] %vm672, 0
      %v801 = vunpack.c.l.b16 %v667
      %v802 = vunpack.c.h.b16 %v667
      %v803 = vpack.c.b16 %v801, %v801
      %v804 = vpack.c.b16 %v802, %v802
      %807 = vst.msk [vmem:[#allocation2 + $0xc8] sm:$0xf] %vm672, %v803
      %808 = vst.msk [vmem:[#allocation2 + $0xcc] sm:$0xf] %vm672, %v804
      %809 = vst.msk [vmem:[#allocation2 + $0xd0] sm:$0xf] %vm672, 0
      %810 = vst.msk [vmem:[#allocation2 + $0xd4] sm:$0xf] %vm672, 0
      %v812 = vunpack.c.l.b16 %v668
      %v813 = vunpack.c.h.b16 %v668
      %v814 = vpack.c.b16 %v812, %v812
      %v815 = vpack.c.b16 %v813, %v813
      %818 = vst.msk [vmem:[#allocation2 + $0xd8] sm:$0xf] %vm672, %v814
      %819 = vst.msk [vmem:[#allocation2 + $0xdc] sm:$0xf] %vm672, %v815
      %820 = vst.msk [vmem:[#allocation2 + $0xe0] sm:$0xf] %vm672, 0
      %821 = vst.msk [vmem:[#allocation2 + $0xe4] sm:$0xf] %vm672, 0
      %v823 = vunpack.c.l.b16 %v669
      %v824 = vunpack.c.h.b16 %v669
      %v825 = vpack.c.b16 %v823, %v823
      %v826 = vpack.c.b16 %v824, %v824
      %829 = vst.msk [vmem:[#allocation2 + $0xe8] sm:$0xf] %vm672, %v825
      %830 = vst.msk [vmem:[#allocation2 + $0xec] sm:$0xf] %vm672, %v826
      %831 = vst.msk [vmem:[#allocation2 + $0xf0] sm:$0xf] %vm672, 0
      %832 = vst.msk [vmem:[#allocation2 + $0xf4] sm:$0xf] %vm672, 0
      %v834 = vunpack.c.l.b16 %v670
      %v835 = vunpack.c.h.b16 %v670
      %v836 = vpack.c.b16 %v834, %v834
      %v837 = vpack.c.b16 %v835, %v835
      %840 = vst.msk [vmem:[#allocation2 + $0xf8] sm:$0xf] %vm672, %v836
      %841 = vst.msk [vmem:[#allocation2 + $0xfc] sm:$0xf] %vm672, %v837
      %842 = vst.msk [vmem:[#allocation2 + $0x100] sm:$0xf] %vm672, 0
      %843 = vst.msk [vmem:[#allocation2 + $0x104] sm:$0xf] %vm672, 0
      %v845 = vunpack.c.l.b16 %v671
      %v846 = vunpack.c.h.b16 %v671
      %v847 = vpack.c.b16 %v845, %v845
      %v848 = vpack.c.b16 %v846, %v846
      %851 = vst.msk [vmem:[#allocation2 + $0x108] sm:$0xf] %vm672, %v847
      %852 = vst.msk [vmem:[#allocation2 + $0x10c] sm:$0xf] %vm672, %v848
      %853 = vst.msk [vmem:[#allocation2 + $0x110] sm:$0xf] %vm672, 0
      %854 = vst.msk [vmem:[#allocation2 + $0x114] sm:$0xf] %vm672, 0
      %855 = vst.msk [vmem:[#allocation2 + $0x118] sm:$0xf] %vm672, 0
      %856 = vst.msk [vmem:[#allocation2 + $0x11c] sm:$0xf] %vm672, 0
      %857 = vst.msk [vmem:[#allocation2 + $0x120] sm:$0xf] %vm672, 0
      %858 = vst.msk [vmem:[#allocation2 + $0x124] sm:$0xf] %vm672, 0
      %859 = vst.msk [vmem:[#allocation2 + $0x128] sm:$0xf] %vm672, 0
      %860 = vst.msk [vmem:[#allocation2 + $0x12c] sm:$0xf] %vm672, 0
      %v861 = vld [vmem:[#allocation2 + $0x4] sm:$0x8]
      %v862 = vld [vmem:[#allocation2 + $0x8] sm:$0xf]
      %v863 = vld [vmem:[#allocation2 + $0xc] sm:$0xf]
      %v864 = vld [vmem:[#allocation2 + $0x10] sm:$0xf]
      %v865 = vld [vmem:[#allocation2 + $0x14] sm:$0xf]
      %v866 = vld [vmem:[#allocation2 + $0x18] sm:$0xf]
      %v867 = vld [vmem:[#allocation2 + $0x1c] sm:$0xf]
      %v868 = vld [vmem:[#allocation2 + $0x20] sm:$0xf]
      %v869 = vld [vmem:[#allocation2 + $0x24] sm:$0xf]
      %v870 = vld [vmem:[#allocation2 + $0x28] sm:$0xf]
      %v871 = vld [vmem:[#allocation2 + $0x2c] sm:$0xf]
      %v872 = vld [vmem:[#allocation2 + $0x30] sm:$0xf]
      %v873 = vld [vmem:[#allocation2 + $0x34] sm:$0xf]
      %v874 = vld [vmem:[#allocation2 + $0x38] sm:$0xf]
      %v875 = vld [vmem:[#allocation2 + $0x3c] sm:$0xf]
      %v876 = vld [vmem:[#allocation2 + $0x40] sm:$0xf]
      %v877 = vld [vmem:[#allocation2 + $0x44] sm:$0xf]
      %v878 = vld [vmem:[#allocation2 + $0x48] sm:$0xf]
      %v879 = vld [vmem:[#allocation2 + $0x4c] sm:$0xf]
      %v880 = vld [vmem:[#allocation2 + $0x50] sm:$0xf]
      %v881 = vld [vmem:[#allocation2 + $0x54] sm:$0xf]
      %v882 = vld [vmem:[#allocation2 + $0x58] sm:$0xf]
      %v883 = vld [vmem:[#allocation2 + $0x5c] sm:$0xf]
      %v884 = vld [vmem:[#allocation2 + $0x60] sm:$0xf]
      %v885 = vld [vmem:[#allocation2 + $0x64] sm:$0xf]
      %v886 = vld [vmem:[#allocation2 + $0x68] sm:$0xf]
      %v887 = vld [vmem:[#allocation2 + $0x6c] sm:$0xf]
      %v888 = vld [vmem:[#allocation2 + $0x70] sm:$0xf]
      %v889 = vld [vmem:[#allocation2 + $0x74] sm:$0xf]
      %v890 = vld [vmem:[#allocation2 + $0x78] sm:$0xf]
      %v891 = vld [vmem:[#allocation2 + $0x7c] sm:$0xf]
      %v892 = vld [vmem:[#allocation2 + $0x80] sm:$0xf]
      %v893 = vld [vmem:[#allocation2 + $0x84] sm:$0xf]
      %v894 = vld [vmem:[#allocation2 + $0x88] sm:$0xf]
      %v895 = vld [vmem:[#allocation2 + $0x8c] sm:$0xf]
      %v896 = vld [vmem:[#allocation2 + $0x90] sm:$0xf]
      %v897 = vld [vmem:[#allocation2 + $0x94] sm:$0xf]
      %v898 = vld [vmem:[#allocation2 + $0x98] sm:$0xf]
      %v899 = vld [vmem:[#allocation2 + $0x9c] sm:$0xf]
      %v900 = vld [vmem:[#allocation2 + $0xa0] sm:$0xf]
      %v901 = vld [vmem:[#allocation2 + $0xa4] sm:$0xf]
      %v902 = vld [vmem:[#allocation2 + $0xa8] sm:$0xf]
      %v903 = vld [vmem:[#allocation2 + $0xac] sm:$0xf]
      %v904 = vld [vmem:[#allocation2 + $0xb0] sm:$0xf]
      %v905 = vld [vmem:[#allocation2 + $0xb4] sm:$0xf]
      %v906 = vld [vmem:[#allocation2 + $0xb8] sm:$0xf]
      %v907 = vld [vmem:[#allocation2 + $0xbc] sm:$0xf]
      %v908 = vld [vmem:[#allocation2 + $0xc0] sm:$0xf]
      %v909 = vld [vmem:[#allocation2 + $0xc4] sm:$0xf]
      %v910 = vld [vmem:[#allocation2 + $0xc8] sm:$0xf]
      %v911 = vld [vmem:[#allocation2 + $0xcc] sm:$0xf]
      %v912 = vld [vmem:[#allocation2 + $0xd0] sm:$0xf]
      %v913 = vld [vmem:[#allocation2 + $0xd4] sm:$0xf]
      %v914 = vld [vmem:[#allocation2 + $0xd8] sm:$0xf]
      %v915 = vld [vmem:[#allocation2 + $0xdc] sm:$0xf]
      %v916 = vld [vmem:[#allocation2 + $0xe0] sm:$0xf]
      %v917 = vld [vmem:[#allocation2 + $0xe4] sm:$0xf]
      %v918 = vld [vmem:[#allocation2 + $0xe8] sm:$0xf]
      %v919 = vld [vmem:[#allocation2 + $0xec] sm:$0xf]
      %v920 = vld [vmem:[#allocation2 + $0xf0] sm:$0xf]
      %v921 = vld [vmem:[#allocation2 + $0xf4] sm:$0xf]
      %v922 = vld [vmem:[#allocation2 + $0xf8] sm:$0xf]
      %v923 = vld [vmem:[#allocation2 + $0xfc] sm:$0xf]
      %v924 = vld [vmem:[#allocation2 + $0x100] sm:$0xf]
      %v925 = vld [vmem:[#allocation2 + $0x104] sm:$0xf]
      %v926 = vld [vmem:[#allocation2 + $0x14] sm:$0x8]
      %v927 = vld [vmem:[#allocation2 + $0x108] sm:$0xf]
      %v928 = vld [vmem:[#allocation2 + $0x10c] sm:$0xf]
      %v929 = vld [vmem:[#allocation2 + $0x110] sm:$0xf]
      %v930 = vld [vmem:[#allocation2 + $0x114] sm:$0xf]
      %v931 = vld [vmem:[#allocation2 + $0x24] sm:$0x8]
      %v932 = vld [vmem:[#allocation2 + $0x118] sm:$0xf]
      %v933 = vld [vmem:[#allocation2 + $0x11c] sm:$0xf]
      %v934 = vld [vmem:[#allocation2 + $0x120] sm:$0xf]
      %v935 = vld [vmem:[#allocation2 + $0x124] sm:$0xf]
      %v1000 = vunpack.c.l.b16 %v861
      %v1001 = vunpack.c.l.b16 %v862
      %v1002 = vunpack.c.l.b16 %v863
      %v1003 = vunpack.c.l.b16 %v864
      %v1004 = vunpack.c.l.b16 %v865
      %v1005 = vunpack.c.l.b16 %v866
      %v1006 = vunpack.c.l.b16 %v867
      %v1007 = vunpack.c.l.b16 %v868
      %v1008 = vunpack.c.l.b16 %v869
      %v1009 = vunpack.c.l.b16 %v870
      %v1010 = vunpack.c.l.b16 %v871
      %v1011 = vunpack.c.l.b16 %v872
      %v1012 = vunpack.c.l.b16 %v873
      %v1013 = vunpack.c.l.b16 %v874
      %v1014 = vunpack.c.l.b16 %v875
      %v1015 = vunpack.c.l.b16 %v876
      %v1016 = vunpack.c.l.b16 %v877
      %v1017 = vunpack.c.l.b16 %v878
      %v1018 = vunpack.c.l.b16 %v879
      %v1019 = vunpack.c.l.b16 %v880
      %v1020 = vunpack.c.l.b16 %v881
      %v1021 = vunpack.c.l.b16 %v882
      %v1022 = vunpack.c.l.b16 %v883
      %v1023 = vunpack.c.l.b16 %v884
      %v1024 = vunpack.c.l.b16 %v885
      %v1025 = vunpack.c.l.b16 %v886
      %v1026 = vunpack.c.l.b16 %v887
      %v1027 = vunpack.c.l.b16 %v888
      %v1028 = vunpack.c.l.b16 %v889
      %v1029 = vunpack.c.l.b16 %v890
      %v1030 = vunpack.c.l.b16 %v891
      %v1031 = vunpack.c.l.b16 %v892
      %v1032 = vunpack.c.l.b16 %v893
      %v1033 = vunpack.c.l.b16 %v894
      %v1034 = vunpack.c.l.b16 %v895
      %v1035 = vunpack.c.l.b16 %v896
      %v1036 = vunpack.c.l.b16 %v897
      %v1037 = vunpack.c.l.b16 %v898
      %v1038 = vunpack.c.l.b16 %v899
      %v1039 = vunpack.c.l.b16 %v900
      %v1040 = vunpack.c.l.b16 %v901
      %v1041 = vunpack.c.l.b16 %v902
      %v1042 = vunpack.c.l.b16 %v903
      %v1043 = vunpack.c.l.b16 %v904
      %v1044 = vunpack.c.l.b16 %v905
      %v1045 = vunpack.c.l.b16 %v906
      %v1046 = vunpack.c.l.b16 %v907
      %v1047 = vunpack.c.l.b16 %v908
      %v1048 = vunpack.c.l.b16 %v909
      %v1049 = vunpack.c.l.b16 %v910
      %v1050 = vunpack.c.l.b16 %v911
      %v1051 = vunpack.c.l.b16 %v912
      %v1052 = vunpack.c.l.b16 %v913
      %v1053 = vunpack.c.l.b16 %v914
      %v1054 = vunpack.c.l.b16 %v915
      %v1055 = vunpack.c.l.b16 %v916
      %v1056 = vunpack.c.l.b16 %v917
      %v1057 = vunpack.c.l.b16 %v918
      %v1058 = vunpack.c.l.b16 %v919
      %v1059 = vunpack.c.l.b16 %v920
      %v1060 = vunpack.c.l.b16 %v921
      %v1061 = vunpack.c.l.b16 %v922
      %v1062 = vunpack.c.l.b16 %v923
      %v1063 = vunpack.c.l.b16 %v924
      %v1064 = vpack.c.b16 %v1001, %v1000
      %v1065 = vpack.c.b16 %v1003, %v1002
      %v1066 = vpack.c.b16 %v1005, %v1004
      %v1067 = vpack.c.b16 %v1007, %v1006
      %v1068 = vpack.c.b16 %v1009, %v1008
      %v1069 = vpack.c.b16 %v1011, %v1010
      %v1070 = vpack.c.b16 %v1013, %v1012
      %v1071 = vpack.c.b16 %v1015, %v1014
      %v1072 = vpack.c.b16 %v1017, %v1016
      %v1073 = vpack.c.b16 %v1019, %v1018
      %v1074 = vpack.c.b16 %v1021, %v1020
      %v1075 = vpack.c.b16 %v1023, %v1022
      %v1076 = vpack.c.b16 %v1025, %v1024
      %v1077 = vpack.c.b16 %v1027, %v1026
      %v1078 = vpack.c.b16 %v1029, %v1028
      %v1079 = vpack.c.b16 %v1031, %v1030
      %v1080 = vpack.c.b16 %v1033, %v1032
      %v1081 = vpack.c.b16 %v1035, %v1034
      %v1082 = vpack.c.b16 %v1037, %v1036
      %v1083 = vpack.c.b16 %v1039, %v1038
      %v1084 = vpack.c.b16 %v1041, %v1040
      %v1085 = vpack.c.b16 %v1043, %v1042
      %v1086 = vpack.c.b16 %v1045, %v1044
      %v1087 = vpack.c.b16 %v1047, %v1046
      %v1088 = vpack.c.b16 %v1049, %v1048
      %v1089 = vpack.c.b16 %v1051, %v1050
      %v1090 = vpack.c.b16 %v1053, %v1052
      %v1091 = vpack.c.b16 %v1055, %v1054
      %v1092 = vpack.c.b16 %v1057, %v1056
      %v1093 = vpack.c.b16 %v1059, %v1058
      %v1094 = vpack.c.b16 %v1061, %v1060
      %v1095 = vpack.c.b16 %v1063, %v1062
      %v1097 = vunpack.c.l.b16 %v925
      %v1098 = vpack.c.b16 %v1002, %v1001
      %v1099 = vpack.c.b16 %v1004, %v1003
      %v1100 = vpack.c.b16 %v1006, %v1005
      %v1101 = vpack.c.b16 %v1008, %v1007
      %v1102 = vpack.c.b16 %v1010, %v1009
      %v1103 = vpack.c.b16 %v1012, %v1011
      %v1104 = vpack.c.b16 %v1014, %v1013
      %v1105 = vpack.c.b16 %v1016, %v1015
      %v1106 = vpack.c.b16 %v1018, %v1017
      %v1107 = vpack.c.b16 %v1020, %v1019
      %v1108 = vpack.c.b16 %v1022, %v1021
      %v1109 = vpack.c.b16 %v1024, %v1023
      %v1110 = vpack.c.b16 %v1026, %v1025
      %v1111 = vpack.c.b16 %v1028, %v1027
      %v1112 = vpack.c.b16 %v1030, %v1029
      %v1113 = vpack.c.b16 %v1032, %v1031
      %v1114 = vpack.c.b16 %v1034, %v1033
      %v1115 = vpack.c.b16 %v1036, %v1035
      %v1116 = vpack.c.b16 %v1038, %v1037
      %v1117 = vpack.c.b16 %v1040, %v1039
      %v1118 = vpack.c.b16 %v1042, %v1041
      %v1119 = vpack.c.b16 %v1044, %v1043
      %v1120 = vpack.c.b16 %v1046, %v1045
      %v1121 = vpack.c.b16 %v1048, %v1047
      %v1122 = vpack.c.b16 %v1050, %v1049
      %v1123 = vpack.c.b16 %v1052, %v1051
      %v1124 = vpack.c.b16 %v1054, %v1053
      %v1125 = vpack.c.b16 %v1056, %v1055
      %v1126 = vpack.c.b16 %v1058, %v1057
      %v1127 = vpack.c.b16 %v1060, %v1059
      %v1128 = vpack.c.b16 %v1062, %v1061
      %v1129 = vpack.c.b16 %v1097, %v1063
      %vm1130 = vsmask.f32 3328
      %v1132 = vshrl.u32 %v1098, 16
      %v1134 = vrot.slane %v1132, 4
      %v1135 = vshll.u32 %v1098, 16
      %v1137 = vrot.slane %v1135, 5
      %v1138 = vor.u32 %v1134, %v1137
      %v1140 = vshrl.u32 %v1099, 16
      %v1142 = vrot.slane %v1140, 4
      %v1143 = vshll.u32 %v1099, 16
      %v1145 = vrot.slane %v1143, 5
      %v1146 = vor.u32 %v1142, %v1145
      %v1147 = vsel %vm1130, %v1138, %v1146
      %v1149 = vshrl.u32 %v1100, 16
      %v1151 = vrot.slane %v1149, 4
      %v1152 = vshll.u32 %v1100, 16
      %v1154 = vrot.slane %v1152, 5
      %v1155 = vor.u32 %v1151, %v1154
      %v1156 = vsel %vm1130, %v1146, %v1155
      %v1158 = vshrl.u32 %v1101, 16
      %v1160 = vrot.slane %v1158, 4
      %v1161 = vshll.u32 %v1101, 16
      %v1163 = vrot.slane %v1161, 5
      %v1164 = vor.u32 %v1160, %v1163
      %v1165 = vsel %vm1130, %v1155, %v1164
      %v1167 = vshrl.u32 %v1102, 16
      %v1169 = vrot.slane %v1167, 4
      %v1170 = vshll.u32 %v1102, 16
      %v1172 = vrot.slane %v1170, 5
      %v1173 = vor.u32 %v1169, %v1172
      %v1174 = vsel %vm1130, %v1164, %v1173
      %v1176 = vshrl.u32 %v1103, 16
      %v1178 = vrot.slane %v1176, 4
      %v1179 = vshll.u32 %v1103, 16
      %v1181 = vrot.slane %v1179, 5
      %v1182 = vor.u32 %v1178, %v1181
      %v1183 = vsel %vm1130, %v1173, %v1182
      %v1185 = vshrl.u32 %v1104, 16
      %v1187 = vrot.slane %v1185, 4
      %v1188 = vshll.u32 %v1104, 16
      %v1190 = vrot.slane %v1188, 5
      %v1191 = vor.u32 %v1187, %v1190
      %v1192 = vsel %vm1130, %v1182, %v1191
      %v1194 = vshrl.u32 %v1105, 16
      %v1196 = vrot.slane %v1194, 4
      %v1197 = vshll.u32 %v1105, 16
      %v1199 = vrot.slane %v1197, 5
      %v1200 = vor.u32 %v1196, %v1199
      %v1201 = vsel %vm1130, %v1191, %v1200
      %v1203 = vshrl.u32 %v1106, 16
      %v1205 = vrot.slane %v1203, 4
      %v1206 = vshll.u32 %v1106, 16
      %v1208 = vrot.slane %v1206, 5
      %v1209 = vor.u32 %v1205, %v1208
      %v1210 = vsel %vm1130, %v1200, %v1209
      %v1212 = vshrl.u32 %v1107, 16
      %v1214 = vrot.slane %v1212, 4
      %v1215 = vshll.u32 %v1107, 16
      %v1217 = vrot.slane %v1215, 5
      %v1218 = vor.u32 %v1214, %v1217
      %v1219 = vsel %vm1130, %v1209, %v1218
      %v1221 = vshrl.u32 %v1108, 16
      %v1223 = vrot.slane %v1221, 4
      %v1224 = vshll.u32 %v1108, 16
      %v1226 = vrot.slane %v1224, 5
      %v1227 = vor.u32 %v1223, %v1226
      %v1228 = vsel %vm1130, %v1218, %v1227
      %v1230 = vshrl.u32 %v1109, 16
      %v1232 = vrot.slane %v1230, 4
      %v1233 = vshll.u32 %v1109, 16
      %v1235 = vrot.slane %v1233, 5
      %v1236 = vor.u32 %v1232, %v1235
      %v1237 = vsel %vm1130, %v1227, %v1236
      %v1239 = vshrl.u32 %v1110, 16
      %v1241 = vrot.slane %v1239, 4
      %v1242 = vshll.u32 %v1110, 16
      %v1244 = vrot.slane %v1242, 5
      %v1245 = vor.u32 %v1241, %v1244
      %v1246 = vsel %vm1130, %v1236, %v1245
      %v1248 = vshrl.u32 %v1111, 16
      %v1250 = vrot.slane %v1248, 4
      %v1251 = vshll.u32 %v1111, 16
      %v1253 = vrot.slane %v1251, 5
      %v1254 = vor.u32 %v1250, %v1253
      %v1255 = vsel %vm1130, %v1245, %v1254
      %v1257 = vshrl.u32 %v1112, 16
      %v1259 = vrot.slane %v1257, 4
      %v1260 = vshll.u32 %v1112, 16
      %v1262 = vrot.slane %v1260, 5
      %v1263 = vor.u32 %v1259, %v1262
      %v1264 = vsel %vm1130, %v1254, %v1263
      %v1266 = vshrl.u32 %v1113, 16
      %v1268 = vrot.slane %v1266, 4
      %v1269 = vshll.u32 %v1113, 16
      %v1271 = vrot.slane %v1269, 5
      %v1272 = vor.u32 %v1268, %v1271
      %v1273 = vsel %vm1130, %v1263, %v1272
      %v1275 = vshrl.u32 %v1114, 16
      %v1277 = vrot.slane %v1275, 4
      %v1278 = vshll.u32 %v1114, 16
      %v1280 = vrot.slane %v1278, 5
      %v1281 = vor.u32 %v1277, %v1280
      %v1282 = vsel %vm1130, %v1272, %v1281
      %v1284 = vshrl.u32 %v1115, 16
      %v1286 = vrot.slane %v1284, 4
      %v1287 = vshll.u32 %v1115, 16
      %v1289 = vrot.slane %v1287, 5
      %v1290 = vor.u32 %v1286, %v1289
      %v1291 = vsel %vm1130, %v1281, %v1290
      %v1293 = vshrl.u32 %v1116, 16
      %v1295 = vrot.slane %v1293, 4
      %v1296 = vshll.u32 %v1116, 16
      %v1298 = vrot.slane %v1296, 5
      %v1299 = vor.u32 %v1295, %v1298
      %v1300 = vsel %vm1130, %v1290, %v1299
      %v1302 = vshrl.u32 %v1117, 16
      %v1304 = vrot.slane %v1302, 4
      %v1305 = vshll.u32 %v1117, 16
      %v1307 = vrot.slane %v1305, 5
      %v1308 = vor.u32 %v1304, %v1307
      %v1309 = vsel %vm1130, %v1299, %v1308
      %v1311 = vshrl.u32 %v1118, 16
      %v1313 = vrot.slane %v1311, 4
      %v1314 = vshll.u32 %v1118, 16
      %v1316 = vrot.slane %v1314, 5
      %v1317 = vor.u32 %v1313, %v1316
      %v1318 = vsel %vm1130, %v1308, %v1317
      %v1320 = vshrl.u32 %v1119, 16
      %v1322 = vrot.slane %v1320, 4
      %v1323 = vshll.u32 %v1119, 16
      %v1325 = vrot.slane %v1323, 5
      %v1326 = vor.u32 %v1322, %v1325
      %v1327 = vsel %vm1130, %v1317, %v1326
      %v1329 = vshrl.u32 %v1120, 16
      %v1331 = vrot.slane %v1329, 4
      %v1332 = vshll.u32 %v1120, 16
      %v1334 = vrot.slane %v1332, 5
      %v1335 = vor.u32 %v1331, %v1334
      %v1336 = vsel %vm1130, %v1326, %v1335
      %v1338 = vshrl.u32 %v1121, 16
      %v1340 = vrot.slane %v1338, 4
      %v1341 = vshll.u32 %v1121, 16
      %v1343 = vrot.slane %v1341, 5
      %v1344 = vor.u32 %v1340, %v1343
      %v1345 = vsel %vm1130, %v1335, %v1344
      %v1347 = vshrl.u32 %v1122, 16
      %v1349 = vrot.slane %v1347, 4
      %v1350 = vshll.u32 %v1122, 16
      %v1352 = vrot.slane %v1350, 5
      %v1353 = vor.u32 %v1349, %v1352
      %v1354 = vsel %vm1130, %v1344, %v1353
      %v1356 = vshrl.u32 %v1123, 16
      %v1358 = vrot.slane %v1356, 4
      %v1359 = vshll.u32 %v1123, 16
      %v1361 = vrot.slane %v1359, 5
      %v1362 = vor.u32 %v1358, %v1361
      %v1363 = vsel %vm1130, %v1353, %v1362
      %v1365 = vshrl.u32 %v1124, 16
      %v1367 = vrot.slane %v1365, 4
      %v1368 = vshll.u32 %v1124, 16
      %v1370 = vrot.slane %v1368, 5
      %v1371 = vor.u32 %v1367, %v1370
      %v1372 = vsel %vm1130, %v1362, %v1371
      %v1374 = vshrl.u32 %v1125, 16
      %v1376 = vrot.slane %v1374, 4
      %v1377 = vshll.u32 %v1125, 16
      %v1379 = vrot.slane %v1377, 5
      %v1380 = vor.u32 %v1376, %v1379
      %v1381 = vsel %vm1130, %v1371, %v1380
      %v1383 = vshrl.u32 %v1126, 16
      %v1385 = vrot.slane %v1383, 4
      %v1386 = vshll.u32 %v1126, 16
      %v1388 = vrot.slane %v1386, 5
      %v1389 = vor.u32 %v1385, %v1388
      %v1390 = vsel %vm1130, %v1380, %v1389
      %v1392 = vshrl.u32 %v1127, 16
      %v1394 = vrot.slane %v1392, 4
      %v1395 = vshll.u32 %v1127, 16
      %v1397 = vrot.slane %v1395, 5
      %v1398 = vor.u32 %v1394, %v1397
      %v1399 = vsel %vm1130, %v1389, %v1398
      %v1401 = vshrl.u32 %v1128, 16
      %v1403 = vrot.slane %v1401, 4
      %v1404 = vshll.u32 %v1128, 16
      %v1406 = vrot.slane %v1404, 5
      %v1407 = vor.u32 %v1403, %v1406
      %v1408 = vsel %vm1130, %v1398, %v1407
      %v1410 = vshrl.u32 %v1129, 16
      %v1412 = vrot.slane %v1410, 4
      %v1413 = vshll.u32 %v1129, 16
      %v1415 = vrot.slane %v1413, 5
      %v1416 = vor.u32 %v1412, %v1415
      %v1417 = vsel %vm1130, %v1407, %v1416
      %1418 = vrot.lane.b32.xlu0 %v1138, 4
      %v1419 = vpop.permute.xlu0 %1418
      %1420 = vrot.lane.b32.xlu0 %v1147, 4
      %v1421 = vpop.permute.xlu0 %1420
      %1422 = vrot.lane.b32.xlu0 %v1156, 4
      %v1423 = vpop.permute.xlu0 %1422
      %1424 = vrot.lane.b32.xlu0 %v1165, 4
      %v1425 = vpop.permute.xlu0 %1424
      %1426 = vrot.lane.b32.xlu0 %v1174, 4
      %v1427 = vpop.permute.xlu0 %1426
      %1428 = vrot.lane.b32.xlu0 %v1183, 4
      %v1429 = vpop.permute.xlu0 %1428
      %1430 = vrot.lane.b32.xlu0 %v1192, 4
      %v1431 = vpop.permute.xlu0 %1430
      %1432 = vrot.lane.b32.xlu0 %v1201, 4
      %v1433 = vpop.permute.xlu0 %1432
      %1434 = vrot.lane.b32.xlu0 %v1210, 4
      %v1435 = vpop.permute.xlu0 %1434
      %1436 = vrot.lane.b32.xlu0 %v1219, 4
      %v1437 = vpop.permute.xlu0 %1436
      %1438 = vrot.lane.b32.xlu0 %v1228, 4
      %v1439 = vpop.permute.xlu0 %1438
      %1440 = vrot.lane.b32.xlu0 %v1237, 4
      %v1441 = vpop.permute.xlu0 %1440
      %1442 = vrot.lane.b32.xlu0 %v1246, 4
      %v1443 = vpop.permute.xlu0 %1442
      %1444 = vrot.lane.b32.xlu0 %v1255, 4
      %v1445 = vpop.permute.xlu0 %1444
      %1446 = vrot.lane.b32.xlu0 %v1264, 4
      %v1447 = vpop.permute.xlu0 %1446
      %1448 = vrot.lane.b32.xlu0 %v1273, 4
      %v1449 = vpop.permute.xlu0 %1448
      %1450 = vrot.lane.b32.xlu0 %v1282, 4
      %v1451 = vpop.permute.xlu0 %1450
      %1452 = vrot.lane.b32.xlu0 %v1291, 4
      %v1453 = vpop.permute.xlu0 %1452
      %1454 = vrot.lane.b32.xlu0 %v1300, 4
      %v1455 = vpop.permute.xlu0 %1454
      %1456 = vrot.lane.b32.xlu0 %v1309, 4
      %v1457 = vpop.permute.xlu0 %1456
      %1458 = vrot.lane.b32.xlu0 %v1318, 4
      %v1459 = vpop.permute.xlu0 %1458
      %1460 = vrot.lane.b32.xlu0 %v1327, 4
      %v1461 = vpop.permute.xlu0 %1460
      %1462 = vrot.lane.b32.xlu0 %v1336, 4
      %v1463 = vpop.permute.xlu0 %1462
      %1464 = vrot.lane.b32.xlu0 %v1345, 4
      %v1465 = vpop.permute.xlu0 %1464
      %1466 = vrot.lane.b32.xlu0 %v1354, 4
      %v1467 = vpop.permute.xlu0 %1466
      %1468 = vrot.lane.b32.xlu0 %v1363, 4
      %v1469 = vpop.permute.xlu0 %1468
      %1470 = vrot.lane.b32.xlu0 %v1372, 4
      %v1471 = vpop.permute.xlu0 %1470
      %1472 = vrot.lane.b32.xlu0 %v1381, 4
      %v1473 = vpop.permute.xlu0 %1472
      %1474 = vrot.lane.b32.xlu0 %v1390, 4
      %v1475 = vpop.permute.xlu0 %1474
      %1476 = vrot.lane.b32.xlu0 %v1399, 4
      %v1477 = vpop.permute.xlu0 %1476
      %1478 = vrot.lane.b32.xlu0 %v1408, 4
      %v1479 = vpop.permute.xlu0 %1478
      %1480 = vrot.lane.b32.xlu0 %v1417, 4
      %v1481 = vpop.permute.xlu0 %1480
      %vm1482 = vcmask 1042432
      %v1483 = vrot.slane %v1098, 5
      %v1484 = vrot.slane %v1099, 5
      %v1485 = vsel %vm1482, %v1483, %v1484
      %v1486 = vrot.slane %v1100, 5
      %v1487 = vsel %vm1482, %v1484, %v1486
      %v1488 = vrot.slane %v1101, 5
      %v1489 = vsel %vm1482, %v1486, %v1488
      %v1490 = vrot.slane %v1102, 5
      %v1491 = vsel %vm1482, %v1488, %v1490
      %v1492 = vrot.slane %v1103, 5
      %v1493 = vsel %vm1482, %v1490, %v1492
      %v1494 = vrot.slane %v1104, 5
      %v1495 = vsel %vm1482, %v1492, %v1494
      %v1496 = vrot.slane %v1105, 5
      %v1497 = vsel %vm1482, %v1494, %v1496
      %v1498 = vrot.slane %v1106, 5
      %v1499 = vsel %vm1482, %v1496, %v1498
      %v1500 = vrot.slane %v1107, 5
      %v1501 = vsel %vm1482, %v1498, %v1500
      %v1502 = vrot.slane %v1108, 5
      %v1503 = vsel %vm1482, %v1500, %v1502
      %v1504 = vrot.slane %v1109, 5
      %v1505 = vsel %vm1482, %v1502, %v1504
      %v1506 = vrot.slane %v1110, 5
      %v1507 = vsel %vm1482, %v1504, %v1506
      %v1508 = vrot.slane %v1111, 5
      %v1509 = vsel %vm1482, %v1506, %v1508
      %v1510 = vrot.slane %v1112, 5
      %v1511 = vsel %vm1482, %v1508, %v1510
      %v1512 = vrot.slane %v1113, 5
      %v1513 = vsel %vm1482, %v1510, %v1512
      %v1514 = vrot.slane %v1114, 5
      %v1515 = vsel %vm1482, %v1512, %v1514
      %v1516 = vrot.slane %v1115, 5
      %v1517 = vsel %vm1482, %v1514, %v1516
      %v1518 = vrot.slane %v1116, 5
      %v1519 = vsel %vm1482, %v1516, %v1518
      %v1520 = vrot.slane %v1117, 5
      %v1521 = vsel %vm1482, %v1518, %v1520
      %v1522 = vrot.slane %v1118, 5
      %v1523 = vsel %vm1482, %v1520, %v1522
      %v1524 = vrot.slane %v1119, 5
      %v1525 = vsel %vm1482, %v1522, %v1524
      %v1526 = vrot.slane %v1120, 5
      %v1527 = vsel %vm1482, %v1524, %v1526
      %v1528 = vrot.slane %v1121, 5
      %v1529 = vsel %vm1482, %v1526, %v1528
      %v1530 = vrot.slane %v1122, 5
      %v1531 = vsel %vm1482, %v1528, %v1530
      %v1532 = vrot.slane %v1123, 5
      %v1533 = vsel %vm1482, %v1530, %v1532
      %v1534 = vrot.slane %v1124, 5
      %v1535 = vsel %vm1482, %v1532, %v1534
      %v1536 = vrot.slane %v1125, 5
      %v1537 = vsel %vm1482, %v1534, %v1536
      %v1538 = vrot.slane %v1126, 5
      %v1539 = vsel %vm1482, %v1536, %v1538
      %v1540 = vrot.slane %v1127, 5
      %v1541 = vsel %vm1482, %v1538, %v1540
      %v1542 = vrot.slane %v1128, 5
      %v1543 = vsel %vm1482, %v1540, %v1542
      %v1544 = vrot.slane %v1129, 5
      %v1545 = vsel %vm1482, %v1542, %v1544
      %1546 = vrot.lane.b32.xlu0 %v1483, 8
      %v1547 = vpop.permute.xlu0 %1546
      %1548 = vrot.lane.b32.xlu0 %v1485, 8
      %v1549 = vpop.permute.xlu0 %1548
      %1550 = vrot.lane.b32.xlu0 %v1487, 8
      %v1551 = vpop.permute.xlu0 %1550
      %1552 = vrot.lane.b32.xlu0 %v1489, 8
      %v1553 = vpop.permute.xlu0 %1552
      %1554 = vrot.lane.b32.xlu0 %v1491, 8
      %v1555 = vpop.permute.xlu0 %1554
      %1556 = vrot.lane.b32.xlu0 %v1493, 8
      %v1557 = vpop.permute.xlu0 %1556
      %1558 = vrot.lane.b32.xlu0 %v1495, 8
      %v1559 = vpop.permute.xlu0 %1558
      %1560 = vrot.lane.b32.xlu0 %v1497, 8
      %v1561 = vpop.permute.xlu0 %1560
      %1562 = vrot.lane.b32.xlu0 %v1499, 8
      %v1563 = vpop.permute.xlu0 %1562
      %1564 = vrot.lane.b32.xlu0 %v1501, 8
      %v1565 = vpop.permute.xlu0 %1564
      %1566 = vrot.lane.b32.xlu0 %v1503, 8
      %v1567 = vpop.permute.xlu0 %1566
      %1568 = vrot.lane.b32.xlu0 %v1505, 8
      %v1569 = vpop.permute.xlu0 %1568
      %1570 = vrot.lane.b32.xlu0 %v1507, 8
      %v1571 = vpop.permute.xlu0 %1570
      %1572 = vrot.lane.b32.xlu0 %v1509, 8
      %v1573 = vpop.permute.xlu0 %1572
      %1574 = vrot.lane.b32.xlu0 %v1511, 8
      %v1575 = vpop.permute.xlu0 %1574
      %1576 = vrot.lane.b32.xlu0 %v1513, 8
      %v1577 = vpop.permute.xlu0 %1576
      %1578 = vrot.lane.b32.xlu0 %v1515, 8
      %v1579 = vpop.permute.xlu0 %1578
      %1580 = vrot.lane.b32.xlu0 %v1517, 8
      %v1581 = vpop.permute.xlu0 %1580
      %1582 = vrot.lane.b32.xlu0 %v1519, 8
      %v1583 = vpop.permute.xlu0 %1582
      %1584 = vrot.lane.b32.xlu0 %v1521, 8
      %v1585 = vpop.permute.xlu0 %1584
      %1586 = vrot.lane.b32.xlu0 %v1523, 8
      %v1587 = vpop.permute.xlu0 %1586
      %1588 = vrot.lane.b32.xlu0 %v1525, 8
      %v1589 = vpop.permute.xlu0 %1588
      %1590 = vrot.lane.b32.xlu0 %v1527, 8
      %v1591 = vpop.permute.xlu0 %1590
      %1592 = vrot.lane.b32.xlu0 %v1529, 8
      %v1593 = vpop.permute.xlu0 %1592
      %1594 = vrot.lane.b32.xlu0 %v1531, 8
      %v1595 = vpop.permute.xlu0 %1594
      %1596 = vrot.lane.b32.xlu0 %v1533, 8
      %v1597 = vpop.permute.xlu0 %1596
      %1598 = vrot.lane.b32.xlu0 %v1535, 8
      %v1599 = vpop.permute.xlu0 %1598
      %1600 = vrot.lane.b32.xlu0 %v1537, 8
      %v1601 = vpop.permute.xlu0 %1600
      %1602 = vrot.lane.b32.xlu0 %v1539, 8
      %v1603 = vpop.permute.xlu0 %1602
      %1604 = vrot.lane.b32.xlu0 %v1541, 8
      %v1605 = vpop.permute.xlu0 %1604
      %1606 = vrot.lane.b32.xlu0 %v1543, 8
      %v1607 = vpop.permute.xlu0 %1606
      %1608 = vrot.lane.b32.xlu0 %v1545, 8
      %v1609 = vpop.permute.xlu0 %1608
      %v1614 = vunpack.c.l.b16 %v926
      %v1615 = vunpack.c.l.b16 %v927
      %v1616 = vunpack.c.l.b16 %v928
      %v1617 = vunpack.c.l.b16 %v929
      %v1618 = vpack.c.b16 %v1005, %v1614
      %v1619 = vpack.c.b16 %v1615, %v1097
      %v1620 = vpack.c.b16 %v1617, %v1616
      %1621 = vrot.lane.b32.xlu0 %v1618, 12
      %v1622 = vpop.permute.xlu0 %1621
      %1623 = vrot.lane.b32.xlu0 %v1067, 12
      %v1624 = vpop.permute.xlu0 %1623
      %1625 = vrot.lane.b32.xlu0 %v1068, 12
      %v1626 = vpop.permute.xlu0 %1625
      %1627 = vrot.lane.b32.xlu0 %v1069, 12
      %v1628 = vpop.permute.xlu0 %1627
      %1629 = vrot.lane.b32.xlu0 %v1070, 12
      %v1630 = vpop.permute.xlu0 %1629
      %1631 = vrot.lane.b32.xlu0 %v1071, 12
      %v1632 = vpop.permute.xlu0 %1631
      %1633 = vrot.lane.b32.xlu0 %v1072, 12
      %v1634 = vpop.permute.xlu0 %1633
      %1635 = vrot.lane.b32.xlu0 %v1073, 12
      %v1636 = vpop.permute.xlu0 %1635
      %1637 = vrot.lane.b32.xlu0 %v1074, 12
      %v1638 = vpop.permute.xlu0 %1637
      %1639 = vrot.lane.b32.xlu0 %v1075, 12
      %v1640 = vpop.permute.xlu0 %1639
      %1641 = vrot.lane.b32.xlu0 %v1076, 12
      %v1642 = vpop.permute.xlu0 %1641
      %1643 = vrot.lane.b32.xlu0 %v1077, 12
      %v1644 = vpop.permute.xlu0 %1643
      %1645 = vrot.lane.b32.xlu0 %v1078, 12
      %v1646 = vpop.permute.xlu0 %1645
      %1647 = vrot.lane.b32.xlu0 %v1079, 12
      %v1648 = vpop.permute.xlu0 %1647
      %1649 = vrot.lane.b32.xlu0 %v1080, 12
      %v1650 = vpop.permute.xlu0 %1649
      %1651 = vrot.lane.b32.xlu0 %v1081, 12
      %v1652 = vpop.permute.xlu0 %1651
      %1653 = vrot.lane.b32.xlu0 %v1082, 12
      %v1654 = vpop.permute.xlu0 %1653
      %1655 = vrot.lane.b32.xlu0 %v1083, 12
      %v1656 = vpop.permute.xlu0 %1655
      %1657 = vrot.lane.b32.xlu0 %v1084, 12
      %v1658 = vpop.permute.xlu0 %1657
      %1659 = vrot.lane.b32.xlu0 %v1085, 12
      %v1660 = vpop.permute.xlu0 %1659
      %1661 = vrot.lane.b32.xlu0 %v1086, 12
      %v1662 = vpop.permute.xlu0 %1661
      %1663 = vrot.lane.b32.xlu0 %v1087, 12
      %v1664 = vpop.permute.xlu0 %1663
      %1665 = vrot.lane.b32.xlu0 %v1088, 12
      %v1666 = vpop.permute.xlu0 %1665
      %1667 = vrot.lane.b32.xlu0 %v1089, 12
      %v1668 = vpop.permute.xlu0 %1667
      %1669 = vrot.lane.b32.xlu0 %v1090, 12
      %v1670 = vpop.permute.xlu0 %1669
      %1671 = vrot.lane.b32.xlu0 %v1091, 12
      %v1672 = vpop.permute.xlu0 %1671
      %1673 = vrot.lane.b32.xlu0 %v1092, 12
      %v1674 = vpop.permute.xlu0 %1673
      %1675 = vrot.lane.b32.xlu0 %v1093, 12
      %v1676 = vpop.permute.xlu0 %1675
      %1677 = vrot.lane.b32.xlu0 %v1094, 12
      %v1678 = vpop.permute.xlu0 %1677
      %1679 = vrot.lane.b32.xlu0 %v1095, 12
      %v1680 = vpop.permute.xlu0 %1679
      %1681 = vrot.lane.b32.xlu0 %v1619, 12
      %v1682 = vpop.permute.xlu0 %1681
      %1683 = vrot.lane.b32.xlu0 %v1620, 12
      %v1684 = vpop.permute.xlu0 %1683
      %v1686 = vunpack.c.l.b16 %v930
      %v1687 = vpack.c.b16 %v1616, %v1615
      %v1688 = vpack.c.b16 %v1686, %v1617
      %v1690 = vshrl.u32 %v1687, 16
      %v1692 = vrot.slane %v1690, 4
      %v1693 = vshll.u32 %v1687, 16
      %v1695 = vrot.slane %v1693, 5
      %v1696 = vor.u32 %v1692, %v1695
      %v1697 = vsel %vm1130, %v1416, %v1696
      %v1699 = vshrl.u32 %v1688, 16
      %v1701 = vrot.slane %v1699, 4
      %v1702 = vshll.u32 %v1688, 16
      %v1704 = vrot.slane %v1702, 5
      %v1705 = vor.u32 %v1701, %v1704
      %v1706 = vsel %vm1130, %v1696, %v1705
      %1707 = vrot.lane.b32.xlu0 %v1155, 16
      %v1708 = vpop.permute.xlu0 %1707
      %1709 = vrot.lane.b32.xlu0 %v1165, 16
      %v1710 = vpop.permute.xlu0 %1709
      %1711 = vrot.lane.b32.xlu0 %v1174, 16
      %v1712 = vpop.permute.xlu0 %1711
      %1713 = vrot.lane.b32.xlu0 %v1183, 16
      %v1714 = vpop.permute.xlu0 %1713
      %1715 = vrot.lane.b32.xlu0 %v1192, 16
      %v1716 = vpop.permute.xlu0 %1715
      %1717 = vrot.lane.b32.xlu0 %v1201, 16
      %v1718 = vpop.permute.xlu0 %1717
      %1719 = vrot.lane.b32.xlu0 %v1210, 16
      %v1720 = vpop.permute.xlu0 %1719
      %1721 = vrot.lane.b32.xlu0 %v1219, 16
      %v1722 = vpop.permute.xlu0 %1721
      %1723 = vrot.lane.b32.xlu0 %v1228, 16
      %v1724 = vpop.permute.xlu0 %1723
      %1725 = vrot.lane.b32.xlu0 %v1237, 16
      %v1726 = vpop.permute.xlu0 %1725
      %1727 = vrot.lane.b32.xlu0 %v1246, 16
      %v1728 = vpop.permute.xlu0 %1727
      %1729 = vrot.lane.b32.xlu0 %v1255, 16
      %v1730 = vpop.permute.xlu0 %1729
      %1731 = vrot.lane.b32.xlu0 %v1264, 16
      %v1732 = vpop.permute.xlu0 %1731
      %1733 = vrot.lane.b32.xlu0 %v1273, 16
      %v1734 = vpop.permute.xlu0 %1733
      %1735 = vrot.lane.b32.xlu0 %v1282, 16
      %v1736 = vpop.permute.xlu0 %1735
      %1737 = vrot.lane.b32.xlu0 %v1291, 16
      %v1738 = vpop.permute.xlu0 %1737
      %1739 = vrot.lane.b32.xlu0 %v1300, 16
      %v1740 = vpop.permute.xlu0 %1739
      %1741 = vrot.lane.b32.xlu0 %v1309, 16
      %v1742 = vpop.permute.xlu0 %1741
      %1743 = vrot.lane.b32.xlu0 %v1318, 16
      %v1744 = vpop.permute.xlu0 %1743
      %1745 = vrot.lane.b32.xlu0 %v1327, 16
      %v1746 = vpop.permute.xlu0 %1745
      %1747 = vrot.lane.b32.xlu0 %v1336, 16
      %v1748 = vpop.permute.xlu0 %1747
      %1749 = vrot.lane.b32.xlu0 %v1345, 16
      %v1750 = vpop.permute.xlu0 %1749
      %1751 = vrot.lane.b32.xlu0 %v1354, 16
      %v1752 = vpop.permute.xlu0 %1751
      %1753 = vrot.lane.b32.xlu0 %v1363, 16
      %v1754 = vpop.permute.xlu0 %1753
      %1755 = vrot.lane.b32.xlu0 %v1372, 16
      %v1756 = vpop.permute.xlu0 %1755
      %1757 = vrot.lane.b32.xlu0 %v1381, 16
      %v1758 = vpop.permute.xlu0 %1757
      %1759 = vrot.lane.b32.xlu0 %v1390, 16
      %v1760 = vpop.permute.xlu0 %1759
      %1761 = vrot.lane.b32.xlu0 %v1399, 16
      %v1762 = vpop.permute.xlu0 %1761
      %1763 = vrot.lane.b32.xlu0 %v1408, 16
      %v1764 = vpop.permute.xlu0 %1763
      %1765 = vrot.lane.b32.xlu0 %v1417, 16
      %v1766 = vpop.permute.xlu0 %1765
      %1767 = vrot.lane.b32.xlu0 %v1697, 16
      %v1768 = vpop.permute.xlu0 %1767
      %1769 = vrot.lane.b32.xlu0 %v1706, 16
      %v1770 = vpop.permute.xlu0 %1769
      %v1771 = vrot.slane %v1687, 5
      %v1772 = vsel %vm1482, %v1544, %v1771
      %v1773 = vrot.slane %v1688, 5
      %v1774 = vsel %vm1482, %v1771, %v1773
      %1775 = vrot.lane.b32.xlu0 %v1486, 20
      %v1776 = vpop.permute.xlu0 %1775
      %1777 = vrot.lane.b32.xlu0 %v1489, 20
      %v1778 = vpop.permute.xlu0 %1777
      %1779 = vrot.lane.b32.xlu0 %v1491, 20
      %v1780 = vpop.permute.xlu0 %1779
      %1781 = vrot.lane.b32.xlu0 %v1493, 20
      %v1782 = vpop.permute.xlu0 %1781
      %1783 = vrot.lane.b32.xlu0 %v1495, 20
      %v1784 = vpop.permute.xlu0 %1783
      %1785 = vrot.lane.b32.xlu0 %v1497, 20
      %v1786 = vpop.permute.xlu0 %1785
      %1787 = vrot.lane.b32.xlu0 %v1499, 20
      %v1788 = vpop.permute.xlu0 %1787
      %1789 = vrot.lane.b32.xlu0 %v1501, 20
      %v1790 = vpop.permute.xlu0 %1789
      %1791 = vrot.lane.b32.xlu0 %v1503, 20
      %v1792 = vpop.permute.xlu0 %1791
      %1793 = vrot.lane.b32.xlu0 %v1505, 20
      %v1794 = vpop.permute.xlu0 %1793
      %1795 = vrot.lane.b32.xlu0 %v1507, 20
      %v1796 = vpop.permute.xlu0 %1795
      %1797 = vrot.lane.b32.xlu0 %v1509, 20
      %v1798 = vpop.permute.xlu0 %1797
      %1799 = vrot.lane.b32.xlu0 %v1511, 20
      %v1800 = vpop.permute.xlu0 %1799
      %1801 = vrot.lane.b32.xlu0 %v1513, 20
      %v1802 = vpop.permute.xlu0 %1801
      %1803 = vrot.lane.b32.xlu0 %v1515, 20
      %v1804 = vpop.permute.xlu0 %1803
      %1805 = vrot.lane.b32.xlu0 %v1517, 20
      %v1806 = vpop.permute.xlu0 %1805
      %1807 = vrot.lane.b32.xlu0 %v1519, 20
      %v1808 = vpop.permute.xlu0 %1807
      %1809 = vrot.lane.b32.xlu0 %v1521, 20
      %v1810 = vpop.permute.xlu0 %1809
      %1811 = vrot.lane.b32.xlu0 %v1523, 20
      %v1812 = vpop.permute.xlu0 %1811
      %1813 = vrot.lane.b32.xlu0 %v1525, 20
      %v1814 = vpop.permute.xlu0 %1813
      %1815 = vrot.lane.b32.xlu0 %v1527, 20
      %v1816 = vpop.permute.xlu0 %1815
      %1817 = vrot.lane.b32.xlu0 %v1529, 20
      %v1818 = vpop.permute.xlu0 %1817
      %1819 = vrot.lane.b32.xlu0 %v1531, 20
      %v1820 = vpop.permute.xlu0 %1819
      %1821 = vrot.lane.b32.xlu0 %v1533, 20
      %v1822 = vpop.permute.xlu0 %1821
      %1823 = vrot.lane.b32.xlu0 %v1535, 20
      %v1824 = vpop.permute.xlu0 %1823
      %1825 = vrot.lane.b32.xlu0 %v1537, 20
      %v1826 = vpop.permute.xlu0 %1825
      %1827 = vrot.lane.b32.xlu0 %v1539, 20
      %v1828 = vpop.permute.xlu0 %1827
      %1829 = vrot.lane.b32.xlu0 %v1541, 20
      %v1830 = vpop.permute.xlu0 %1829
      %1831 = vrot.lane.b32.xlu0 %v1543, 20
      %v1832 = vpop.permute.xlu0 %1831
      %1833 = vrot.lane.b32.xlu0 %v1545, 20
      %v1834 = vpop.permute.xlu0 %1833
      %1835 = vrot.lane.b32.xlu0 %v1772, 20
      %v1836 = vpop.permute.xlu0 %1835
      %1837 = vrot.lane.b32.xlu0 %v1774, 20
      %v1838 = vpop.permute.xlu0 %1837
      %v1843 = vunpack.c.l.b16 %v931
      %v1844 = vunpack.c.l.b16 %v932
      %v1845 = vunpack.c.l.b16 %v933
      %v1846 = vunpack.c.l.b16 %v934
      %v1847 = vpack.c.b16 %v1009, %v1843
      %v1848 = vpack.c.b16 %v1844, %v1686
      %v1849 = vpack.c.b16 %v1846, %v1845
      %1850 = vrot.lane.b32.xlu0 %v1847, 24
      %v1851 = vpop.permute.xlu0 %1850
      %1852 = vrot.lane.b32.xlu0 %v1069, 24
      %v1853 = vpop.permute.xlu0 %1852
      %1854 = vrot.lane.b32.xlu0 %v1070, 24
      %v1855 = vpop.permute.xlu0 %1854
      %1856 = vrot.lane.b32.xlu0 %v1071, 24
      %v1857 = vpop.permute.xlu0 %1856
      %1858 = vrot.lane.b32.xlu0 %v1072, 24
      %v1859 = vpop.permute.xlu0 %1858
      %1860 = vrot.lane.b32.xlu0 %v1073, 24
      %v1861 = vpop.permute.xlu0 %1860
      %1862 = vrot.lane.b32.xlu0 %v1074, 24
      %v1863 = vpop.permute.xlu0 %1862
      %1864 = vrot.lane.b32.xlu0 %v1075, 24
      %v1865 = vpop.permute.xlu0 %1864
      %1866 = vrot.lane.b32.xlu0 %v1076, 24
      %v1867 = vpop.permute.xlu0 %1866
      %1868 = vrot.lane.b32.xlu0 %v1077, 24
      %v1869 = vpop.permute.xlu0 %1868
      %1870 = vrot.lane.b32.xlu0 %v1078, 24
      %v1871 = vpop.permute.xlu0 %1870
      %1872 = vrot.lane.b32.xlu0 %v1079, 24
      %v1873 = vpop.permute.xlu0 %1872
      %1874 = vrot.lane.b32.xlu0 %v1080, 24
      %v1875 = vpop.permute.xlu0 %1874
      %1876 = vrot.lane.b32.xlu0 %v1081, 24
      %v1877 = vpop.permute.xlu0 %1876
      %1878 = vrot.lane.b32.xlu0 %v1082, 24
      %v1879 = vpop.permute.xlu0 %1878
      %1880 = vrot.lane.b32.xlu0 %v1083, 24
      %v1881 = vpop.permute.xlu0 %1880
      %1882 = vrot.lane.b32.xlu0 %v1084, 24
      %v1883 = vpop.permute.xlu0 %1882
      %1884 = vrot.lane.b32.xlu0 %v1085, 24
      %v1885 = vpop.permute.xlu0 %1884
      %1886 = vrot.lane.b32.xlu0 %v1086, 24
      %v1887 = vpop.permute.xlu0 %1886
      %1888 = vrot.lane.b32.xlu0 %v1087, 24
      %v1889 = vpop.permute.xlu0 %1888
      %1890 = vrot.lane.b32.xlu0 %v1088, 24
      %v1891 = vpop.permute.xlu0 %1890
      %1892 = vrot.lane.b32.xlu0 %v1089, 24
      %v1893 = vpop.permute.xlu0 %1892
      %1894 = vrot.lane.b32.xlu0 %v1090, 24
      %v1895 = vpop.permute.xlu0 %1894
      %1896 = vrot.lane.b32.xlu0 %v1091, 24
      %v1897 = vpop.permute.xlu0 %1896
      %1898 = vrot.lane.b32.xlu0 %v1092, 24
      %v1899 = vpop.permute.xlu0 %1898
      %1900 = vrot.lane.b32.xlu0 %v1093, 24
      %v1901 = vpop.permute.xlu0 %1900
      %1902 = vrot.lane.b32.xlu0 %v1094, 24
      %v1903 = vpop.permute.xlu0 %1902
      %1904 = vrot.lane.b32.xlu0 %v1095, 24
      %v1905 = vpop.permute.xlu0 %1904
      %1906 = vrot.lane.b32.xlu0 %v1619, 24
      %v1907 = vpop.permute.xlu0 %1906
      %1908 = vrot.lane.b32.xlu0 %v1620, 24
      %v1909 = vpop.permute.xlu0 %1908
      %1910 = vrot.lane.b32.xlu0 %v1848, 24
      %v1911 = vpop.permute.xlu0 %1910
      %1912 = vrot.lane.b32.xlu0 %v1849, 24
      %v1913 = vpop.permute.xlu0 %1912
      %v1915 = vunpack.c.l.b16 %v935
      %v1916 = vpack.c.b16 %v1845, %v1844
      %v1917 = vpack.c.b16 %v1915, %v1846
      %v1919 = vshrl.u32 %v1916, 16
      %v1921 = vrot.slane %v1919, 4
      %v1922 = vshll.u32 %v1916, 16
      %v1924 = vrot.slane %v1922, 5
      %v1925 = vor.u32 %v1921, %v1924
      %v1926 = vsel %vm1130, %v1705, %v1925
      %v1928 = vshrl.u32 %v1917, 16
      %v1930 = vrot.slane %v1928, 4
      %v1931 = vshll.u32 %v1917, 16
      %v1933 = vrot.slane %v1931, 5
      %v1934 = vor.u32 %v1930, %v1933
      %v1935 = vsel %vm1130, %v1925, %v1934
      %1936 = vrot.lane.b32.xlu0 %v1173, 28
      %v1937 = vpop.permute.xlu0 %1936
      %1938 = vrot.lane.b32.xlu0 %v1183, 28
      %v1939 = vpop.permute.xlu0 %1938
      %1940 = vrot.lane.b32.xlu0 %v1192, 28
      %v1941 = vpop.permute.xlu0 %1940
      %1942 = vrot.lane.b32.xlu0 %v1201, 28
      %v1943 = vpop.permute.xlu0 %1942
      %1944 = vrot.lane.b32.xlu0 %v1210, 28
      %v1945 = vpop.permute.xlu0 %1944
      %1946 = vrot.lane.b32.xlu0 %v1219, 28
      %v1947 = vpop.permute.xlu0 %1946
      %1948 = vrot.lane.b32.xlu0 %v1228, 28
      %v1949 = vpop.permute.xlu0 %1948
      %1950 = vrot.lane.b32.xlu0 %v1237, 28
      %v1951 = vpop.permute.xlu0 %1950
      %1952 = vrot.lane.b32.xlu0 %v1246, 28
      %v1953 = vpop.permute.xlu0 %1952
      %1954 = vrot.lane.b32.xlu0 %v1255, 28
      %v1955 = vpop.permute.xlu0 %1954
      %1956 = vrot.lane.b32.xlu0 %v1264, 28
      %v1957 = vpop.permute.xlu0 %1956
      %1958 = vrot.lane.b32.xlu0 %v1273, 28
      %v1959 = vpop.permute.xlu0 %1958
      %1960 = vrot.lane.b32.xlu0 %v1282, 28
      %v1961 = vpop.permute.xlu0 %1960
      %1962 = vrot.lane.b32.xlu0 %v1291, 28
      %v1963 = vpop.permute.xlu0 %1962
      %1964 = vrot.lane.b32.xlu0 %v1300, 28
      %v1965 = vpop.permute.xlu0 %1964
      %1966 = vrot.lane.b32.xlu0 %v1309, 28
      %v1967 = vpop.permute.xlu0 %1966
      %1968 = vrot.lane.b32.xlu0 %v1318, 28
      %v1969 = vpop.permute.xlu0 %1968
      %1970 = vrot.lane.b32.xlu0 %v1327, 28
      %v1971 = vpop.permute.xlu0 %1970
      %1972 = vrot.lane.b32.xlu0 %v1336, 28
      %v1973 = vpop.permute.xlu0 %1972
      %1974 = vrot.lane.b32.xlu0 %v1345, 28
      %v1975 = vpop.permute.xlu0 %1974
      %1976 = vrot.lane.b32.xlu0 %v1354, 28
      %v1977 = vpop.permute.xlu0 %1976
      %1978 = vrot.lane.b32.xlu0 %v1363, 28
      %v1979 = vpop.permute.xlu0 %1978
      %1980 = vrot.lane.b32.xlu0 %v1372, 28
      %v1981 = vpop.permute.xlu0 %1980
      %1982 = vrot.lane.b32.xlu0 %v1381, 28
      %v1983 = vpop.permute.xlu0 %1982
      %1984 = vrot.lane.b32.xlu0 %v1390, 28
      %v1985 = vpop.permute.xlu0 %1984
      %1986 = vrot.lane.b32.xlu0 %v1399, 28
      %v1987 = vpop.permute.xlu0 %1986
      %1988 = vrot.lane.b32.xlu0 %v1408, 28
      %v1989 = vpop.permute.xlu0 %1988
      %1990 = vrot.lane.b32.xlu0 %v1417, 28
      %v1991 = vpop.permute.xlu0 %1990
      %1992 = vrot.lane.b32.xlu0 %v1697, 28
      %v1993 = vpop.permute.xlu0 %1992
      %1994 = vrot.lane.b32.xlu0 %v1706, 28
      %v1995 = vpop.permute.xlu0 %1994
      %1996 = vrot.lane.b32.xlu0 %v1926, 28
      %v1997 = vpop.permute.xlu0 %1996
      %1998 = vrot.lane.b32.xlu0 %v1935, 28
      %v1999 = vpop.permute.xlu0 %1998
      %v2000 = vrot.slane %v1916, 5
      %v2001 = vsel %vm1482, %v1773, %v2000
      %v2002 = vrot.slane %v1917, 5
      %v2003 = vsel %vm1482, %v2000, %v2002
      %2004 = vrot.lane.b32.xlu0 %v1490, 32
      %v2005 = vpop.permute.xlu0 %2004
      %2006 = vrot.lane.b32.xlu0 %v1493, 32
      %v2007 = vpop.permute.xlu0 %2006
      %2008 = vrot.lane.b32.xlu0 %v1495, 32
      %v2009 = vpop.permute.xlu0 %2008
      %2010 = vrot.lane.b32.xlu0 %v1497, 32
      %v2011 = vpop.permute.xlu0 %2010
      %2012 = vrot.lane.b32.xlu0 %v1499, 32
      %v2013 = vpop.permute.xlu0 %2012
      %2014 = vrot.lane.b32.xlu0 %v1501, 32
      %v2015 = vpop.permute.xlu0 %2014
      %2016 = vrot.lane.b32.xlu0 %v1503, 32
      %v2017 = vpop.permute.xlu0 %2016
      %2018 = vrot.lane.b32.xlu0 %v1505, 32
      %v2019 = vpop.permute.xlu0 %2018
      %2020 = vrot.lane.b32.xlu0 %v1507, 32
      %v2021 = vpop.permute.xlu0 %2020
      %2022 = vrot.lane.b32.xlu0 %v1509, 32
      %v2023 = vpop.permute.xlu0 %2022
      %2024 = vrot.lane.b32.xlu0 %v1511, 32
      %v2025 = vpop.permute.xlu0 %2024
      %2026 = vrot.lane.b32.xlu0 %v1513, 32
      %v2027 = vpop.permute.xlu0 %2026
      %2028 = vrot.lane.b32.xlu0 %v1515, 32
      %v2029 = vpop.permute.xlu0 %2028
      %2030 = vrot.lane.b32.xlu0 %v1517, 32
      %v2031 = vpop.permute.xlu0 %2030
      %2032 = vrot.lane.b32.xlu0 %v1519, 32
      %v2033 = vpop.permute.xlu0 %2032
      %2034 = vrot.lane.b32.xlu0 %v1521, 32
      %v2035 = vpop.permute.xlu0 %2034
      %2036 = vrot.lane.b32.xlu0 %v1523, 32
      %v2037 = vpop.permute.xlu0 %2036
      %2038 = vrot.lane.b32.xlu0 %v1525, 32
      %v2039 = vpop.permute.xlu0 %2038
      %2040 = vrot.lane.b32.xlu0 %v1527, 32
      %v2041 = vpop.permute.xlu0 %2040
      %2042 = vrot.lane.b32.xlu0 %v1529, 32
      %v2043 = vpop.permute.xlu0 %2042
      %2044 = vrot.lane.b32.xlu0 %v1531, 32
      %v2045 = vpop.permute.xlu0 %2044
      %2046 = vrot.lane.b32.xlu0 %v1533, 32
      %v2047 = vpop.permute.xlu0 %2046
      %2048 = vrot.lane.b32.xlu0 %v1535, 32
      %v2049 = vpop.permute.xlu0 %2048
      %2050 = vrot.lane.b32.xlu0 %v1537, 32
      %v2051 = vpop.permute.xlu0 %2050
      %2052 = vrot.lane.b32.xlu0 %v1539, 32
      %v2053 = vpop.permute.xlu0 %2052
      %2054 = vrot.lane.b32.xlu0 %v1541, 32
      %v2055 = vpop.permute.xlu0 %2054
      %2056 = vrot.lane.b32.xlu0 %v1543, 32
      %v2057 = vpop.permute.xlu0 %2056
      %2058 = vrot.lane.b32.xlu0 %v1545, 32
      %v2059 = vpop.permute.xlu0 %2058
      %2060 = vrot.lane.b32.xlu0 %v1772, 32
      %v2061 = vpop.permute.xlu0 %2060
      %2062 = vrot.lane.b32.xlu0 %v1774, 32
      %v2063 = vpop.permute.xlu0 %2062
      %2064 = vrot.lane.b32.xlu0 %v2001, 32
      %v2065 = vpop.permute.xlu0 %2064
      %2066 = vrot.lane.b32.xlu0 %v2003, 32
      %v2067 = vpop.permute.xlu0 %2066
      %vm2068 = vcmask 31744
      %v2071 = vsel %vm2068, %v1064, %v1419
      %v2074 = vsel %vm2068, %v1065, %v1421
      %v2077 = vsel %vm2068, %v1066, %v1423
      %v2080 = vsel %vm2068, %v1067, %v1425
      %v2083 = vsel %vm2068, %v1068, %v1427
      %v2086 = vsel %vm2068, %v1069, %v1429
      %v2089 = vsel %vm2068, %v1070, %v1431
      %v2092 = vsel %vm2068, %v1071, %v1433
      %v2095 = vsel %vm2068, %v1072, %v1435
      %v2098 = vsel %vm2068, %v1073, %v1437
      %v2101 = vsel %vm2068, %v1074, %v1439
      %v2104 = vsel %vm2068, %v1075, %v1441
      %v2107 = vsel %vm2068, %v1076, %v1443
      %v2110 = vsel %vm2068, %v1077, %v1445
      %v2113 = vsel %vm2068, %v1078, %v1447
      %v2116 = vsel %vm2068, %v1079, %v1449
      %v2119 = vsel %vm2068, %v1080, %v1451
      %v2122 = vsel %vm2068, %v1081, %v1453
      %v2125 = vsel %vm2068, %v1082, %v1455
      %v2128 = vsel %vm2068, %v1083, %v1457
      %v2131 = vsel %vm2068, %v1084, %v1459
      %v2134 = vsel %vm2068, %v1085, %v1461
      %v2137 = vsel %vm2068, %v1086, %v1463
      %v2140 = vsel %vm2068, %v1087, %v1465
      %v2143 = vsel %vm2068, %v1088, %v1467
      %v2146 = vsel %vm2068, %v1089, %v1469
      %v2149 = vsel %vm2068, %v1090, %v1471
      %v2152 = vsel %vm2068, %v1091, %v1473
      %v2155 = vsel %vm2068, %v1092, %v1475
      %v2158 = vsel %vm2068, %v1093, %v1477
      %v2161 = vsel %vm2068, %v1094, %v1479
      %v2164 = vsel %vm2068, %v1095, %v1481
      %v2166 = vsel %vm346, %v2071, %v1547
      %v2168 = vsel %vm346, %v2074, %v1549
      %v2170 = vsel %vm346, %v2077, %v1551
      %v2172 = vsel %vm346, %v2080, %v1553
      %v2174 = vsel %vm346, %v2083, %v1555
      %v2176 = vsel %vm346, %v2086, %v1557
      %v2178 = vsel %vm346, %v2089, %v1559
      %v2180 = vsel %vm346, %v2092, %v1561
      %v2182 = vsel %vm346, %v2095, %v1563
      %v2184 = vsel %vm346, %v2098, %v1565
      %v2186 = vsel %vm346, %v2101, %v1567
      %v2188 = vsel %vm346, %v2104, %v1569
      %v2190 = vsel %vm346, %v2107, %v1571
      %v2192 = vsel %vm346, %v2110, %v1573
      %v2194 = vsel %vm346, %v2113, %v1575
      %v2196 = vsel %vm346, %v2116, %v1577
      %v2198 = vsel %vm346, %v2119, %v1579
      %v2200 = vsel %vm346, %v2122, %v1581
      %v2202 = vsel %vm346, %v2125, %v1583
      %v2204 = vsel %vm346, %v2128, %v1585
      %v2206 = vsel %vm346, %v2131, %v1587
      %v2208 = vsel %vm346, %v2134, %v1589
      %v2210 = vsel %vm346, %v2137, %v1591
      %v2212 = vsel %vm346, %v2140, %v1593
      %v2214 = vsel %vm346, %v2143, %v1595
      %v2216 = vsel %vm346, %v2146, %v1597
      %v2218 = vsel %vm346, %v2149, %v1599
      %v2220 = vsel %vm346, %v2152, %v1601
      %v2222 = vsel %vm346, %v2155, %v1603
      %v2224 = vsel %vm346, %v2158, %v1605
      %v2226 = vsel %vm346, %v2161, %v1607
      %v2228 = vsel %vm346, %v2164, %v1609
      %vm2229 = vcmask 97280
      %v2231 = vsel %vm2229, %v2166, %v1622
      %v2233 = vsel %vm2229, %v2168, %v1624
      %v2235 = vsel %vm2229, %v2170, %v1626
      %v2237 = vsel %vm2229, %v2172, %v1628
      %v2239 = vsel %vm2229, %v2174, %v1630
      %v2241 = vsel %vm2229, %v2176, %v1632
      %v2243 = vsel %vm2229, %v2178, %v1634
      %v2245 = vsel %vm2229, %v2180, %v1636
      %v2247 = vsel %vm2229, %v2182, %v1638
      %v2249 = vsel %vm2229, %v2184, %v1640
      %v2251 = vsel %vm2229, %v2186, %v1642
      %v2253 = vsel %vm2229, %v2188, %v1644
      %v2255 = vsel %vm2229, %v2190, %v1646
      %v2257 = vsel %vm2229, %v2192, %v1648
      %v2259 = vsel %vm2229, %v2194, %v1650
      %v2261 = vsel %vm2229, %v2196, %v1652
      %v2263 = vsel %vm2229, %v2198, %v1654
      %v2265 = vsel %vm2229, %v2200, %v1656
      %v2267 = vsel %vm2229, %v2202, %v1658
      %v2269 = vsel %vm2229, %v2204, %v1660
      %v2271 = vsel %vm2229, %v2206, %v1662
      %v2273 = vsel %vm2229, %v2208, %v1664
      %v2275 = vsel %vm2229, %v2210, %v1666
      %v2277 = vsel %vm2229, %v2212, %v1668
      %v2279 = vsel %vm2229, %v2214, %v1670
      %v2281 = vsel %vm2229, %v2216, %v1672
      %v2283 = vsel %vm2229, %v2218, %v1674
      %v2285 = vsel %vm2229, %v2220, %v1676
      %v2287 = vsel %vm2229, %v2222, %v1678
      %v2289 = vsel %vm2229, %v2224, %v1680
      %v2291 = vsel %vm2229, %v2226, %v1682
      %v2293 = vsel %vm2229, %v2228, %v1684
      %vm2294 = vcmask 130048
      %v2296 = vsel %vm2294, %v2231, %v1708
      %v2298 = vsel %vm2294, %v2233, %v1710
      %v2300 = vsel %vm2294, %v2235, %v1712
      %v2302 = vsel %vm2294, %v2237, %v1714
      %v2304 = vsel %vm2294, %v2239, %v1716
      %v2306 = vsel %vm2294, %v2241, %v1718
      %v2308 = vsel %vm2294, %v2243, %v1720
      %v2310 = vsel %vm2294, %v2245, %v1722
      %v2312 = vsel %vm2294, %v2247, %v1724
      %v2314 = vsel %vm2294, %v2249, %v1726
      %v2316 = vsel %vm2294, %v2251, %v1728
      %v2318 = vsel %vm2294, %v2253, %v1730
      %v2320 = vsel %vm2294, %v2255, %v1732
      %v2322 = vsel %vm2294, %v2257, %v1734
      %v2324 = vsel %vm2294, %v2259, %v1736
      %v2326 = vsel %vm2294, %v2261, %v1738
      %v2328 = vsel %vm2294, %v2263, %v1740
      %v2330 = vsel %vm2294, %v2265, %v1742
      %v2332 = vsel %vm2294, %v2267, %v1744
      %v2334 = vsel %vm2294, %v2269, %v1746
      %v2336 = vsel %vm2294, %v2271, %v1748
      %v2338 = vsel %vm2294, %v2273, %v1750
      %v2340 = vsel %vm2294, %v2275, %v1752
      %v2342 = vsel %vm2294, %v2277, %v1754
      %v2344 = vsel %vm2294, %v2279, %v1756
      %v2346 = vsel %vm2294, %v2281, %v1758
      %v2348 = vsel %vm2294, %v2283, %v1760
      %v2350 = vsel %vm2294, %v2285, %v1762
      %v2352 = vsel %vm2294, %v2287, %v1764
      %v2354 = vsel %vm2294, %v2289, %v1766
      %v2356 = vsel %vm2294, %v2291, %v1768
      %v2358 = vsel %vm2294, %v2293, %v1770
      %vm2359 = vcmask 162816
      %v2361 = vsel %vm2359, %v2296, %v1776
      %v2363 = vsel %vm2359, %v2298, %v1778
      %v2365 = vsel %vm2359, %v2300, %v1780
      %v2367 = vsel %vm2359, %v2302, %v1782
      %v2369 = vsel %vm2359, %v2304, %v1784
      %v2371 = vsel %vm2359, %v2306, %v1786
      %v2373 = vsel %vm2359, %v2308, %v1788
      %v2375 = vsel %vm2359, %v2310, %v1790
      %v2377 = vsel %vm2359, %v2312, %v1792
      %v2379 = vsel %vm2359, %v2314, %v1794
      %v2381 = vsel %vm2359, %v2316, %v1796
      %v2383 = vsel %vm2359, %v2318, %v1798
      %v2385 = vsel %vm2359, %v2320, %v1800
      %v2387 = vsel %vm2359, %v2322, %v1802
      %v2389 = vsel %vm2359, %v2324, %v1804
      %v2391 = vsel %vm2359, %v2326, %v1806
      %v2393 = vsel %vm2359, %v2328, %v1808
      %v2395 = vsel %vm2359, %v2330, %v1810
      %v2397 = vsel %vm2359, %v2332, %v1812
      %v2399 = vsel %vm2359, %v2334, %v1814
      %v2401 = vsel %vm2359, %v2336, %v1816
      %v2403 = vsel %vm2359, %v2338, %v1818
      %v2405 = vsel %vm2359, %v2340, %v1820
      %v2407 = vsel %vm2359, %v2342, %v1822
      %v2409 = vsel %vm2359, %v2344, %v1824
      %v2411 = vsel %vm2359, %v2346, %v1826
      %v2413 = vsel %vm2359, %v2348, %v1828
      %v2415 = vsel %vm2359, %v2350, %v1830
      %v2417 = vsel %vm2359, %v2352, %v1832
      %v2419 = vsel %vm2359, %v2354, %v1834
      %v2421 = vsel %vm2359, %v2356, %v1836
      %v2423 = vsel %vm2359, %v2358, %v1838
      %vm2424 = vcmask 195584
      %v2426 = vsel %vm2424, %v2361, %v1851
      %v2428 = vsel %vm2424, %v2363, %v1853
      %v2430 = vsel %vm2424, %v2365, %v1855
      %v2432 = vsel %vm2424, %v2367, %v1857
      %v2434 = vsel %vm2424, %v2369, %v1859
      %v2436 = vsel %vm2424, %v2371, %v1861
      %v2438 = vsel %vm2424, %v2373, %v1863
      %v2440 = vsel %vm2424, %v2375, %v1865
      %v2442 = vsel %vm2424, %v2377, %v1867
      %v2444 = vsel %vm2424, %v2379, %v1869
      %v2446 = vsel %vm2424, %v2381, %v1871
      %v2448 = vsel %vm2424, %v2383, %v1873
      %v2450 = vsel %vm2424, %v2385, %v1875
      %v2452 = vsel %vm2424, %v2387, %v1877
      %v2454 = vsel %vm2424, %v2389, %v1879
      %v2456 = vsel %vm2424, %v2391, %v1881
      %v2458 = vsel %vm2424, %v2393, %v1883
      %v2460 = vsel %vm2424, %v2395, %v1885
      %v2462 = vsel %vm2424, %v2397, %v1887
      %v2464 = vsel %vm2424, %v2399, %v1889
      %v2466 = vsel %vm2424, %v2401, %v1891
      %v2468 = vsel %vm2424, %v2403, %v1893
      %v2470 = vsel %vm2424, %v2405, %v1895
      %v2472 = vsel %vm2424, %v2407, %v1897
      %v2474 = vsel %vm2424, %v2409, %v1899
      %v2476 = vsel %vm2424, %v2411, %v1901
      %v2478 = vsel %vm2424, %v2413, %v1903
      %v2480 = vsel %vm2424, %v2415, %v1905
      %v2482 = vsel %vm2424, %v2417, %v1907
      %v2484 = vsel %vm2424, %v2419, %v1909
      %v2486 = vsel %vm2424, %v2421, %v1911
      %v2488 = vsel %vm2424, %v2423, %v1913
      %vm2489 = vcmask 228352
      %v2491 = vsel %vm2489, %v2426, %v1937
      %v2493 = vsel %vm2489, %v2428, %v1939
      %v2495 = vsel %vm2489, %v2430, %v1941
      %v2497 = vsel %vm2489, %v2432, %v1943
      %v2499 = vsel %vm2489, %v2434, %v1945
      %v2501 = vsel %vm2489, %v2436, %v1947
      %v2503 = vsel %vm2489, %v2438, %v1949
      %v2505 = vsel %vm2489, %v2440, %v1951
      %v2507 = vsel %vm2489, %v2442, %v1953
      %v2509 = vsel %vm2489, %v2444, %v1955
      %v2511 = vsel %vm2489, %v2446, %v1957
      %v2513 = vsel %vm2489, %v2448, %v1959
      %v2515 = vsel %vm2489, %v2450, %v1961
      %v2517 = vsel %vm2489, %v2452, %v1963
      %v2519 = vsel %vm2489, %v2454, %v1965
      %v2521 = vsel %vm2489, %v2456, %v1967
      %v2523 = vsel %vm2489, %v2458, %v1969
      %v2525 = vsel %vm2489, %v2460, %v1971
      %v2527 = vsel %vm2489, %v2462, %v1973
      %v2529 = vsel %vm2489, %v2464, %v1975
      %v2531 = vsel %vm2489, %v2466, %v1977
      %v2533 = vsel %vm2489, %v2468, %v1979
      %v2535 = vsel %vm2489, %v2470, %v1981
      %v2537 = vsel %vm2489, %v2472, %v1983
      %v2539 = vsel %vm2489, %v2474, %v1985
      %v2541 = vsel %vm2489, %v2476, %v1987
      %v2543 = vsel %vm2489, %v2478, %v1989
      %v2545 = vsel %vm2489, %v2480, %v1991
      %v2547 = vsel %vm2489, %v2482, %v1993
      %v2549 = vsel %vm2489, %v2484, %v1995
      %v2551 = vsel %vm2489, %v2486, %v1997
      %v2553 = vsel %vm2489, %v2488, %v1999
      %vm2554 = vcmask 261120
      %v2556 = vsel %vm2554, %v2491, %v2005
      %v2558 = vsel %vm2554, %v2493, %v2007
      %v2560 = vsel %vm2554, %v2495, %v2009
      %v2562 = vsel %vm2554, %v2497, %v2011
      %v2564 = vsel %vm2554, %v2499, %v2013
      %v2566 = vsel %vm2554, %v2501, %v2015
      %v2568 = vsel %vm2554, %v2503, %v2017
      %v2570 = vsel %vm2554, %v2505, %v2019
      %v2572 = vsel %vm2554, %v2507, %v2021
      %v2574 = vsel %vm2554, %v2509, %v2023
      %v2576 = vsel %vm2554, %v2511, %v2025
      %v2578 = vsel %vm2554, %v2513, %v2027
      %v2580 = vsel %vm2554, %v2515, %v2029
      %v2582 = vsel %vm2554, %v2517, %v2031
      %v2584 = vsel %vm2554, %v2519, %v2033
      %v2586 = vsel %vm2554, %v2521, %v2035
      %v2588 = vsel %vm2554, %v2523, %v2037
      %v2590 = vsel %vm2554, %v2525, %v2039
      %v2592 = vsel %vm2554, %v2527, %v2041
      %v2594 = vsel %vm2554, %v2529, %v2043
      %v2596 = vsel %vm2554, %v2531, %v2045
      %v2598 = vsel %vm2554, %v2533, %v2047
      %v2600 = vsel %vm2554, %v2535, %v2049
      %v2602 = vsel %vm2554, %v2537, %v2051
      %v2604 = vsel %vm2554, %v2539, %v2053
      %v2606 = vsel %vm2554, %v2541, %v2055
      %v2608 = vsel %vm2554, %v2543, %v2057
      %v2610 = vsel %vm2554, %v2545, %v2059
      %v2612 = vsel %vm2554, %v2547, %v2061
      %v2614 = vsel %vm2554, %v2549, %v2063
      %v2616 = vsel %vm2554, %v2551, %v2065
      %v2618 = vsel %vm2554, %v2553, %v2067
      %v2619 = vunpack.c.l.bf16 %v226
      %v2620 = vunpack.c.l.bf16 %v227
      %v2621 = vunpack.c.l.bf16 %v228
      %v2622 = vunpack.c.l.bf16 %v229
      %v2623 = vunpack.c.l.bf16 %v230
      %v2624 = vunpack.c.l.bf16 %v231
      %v2625 = vunpack.c.l.bf16 %v232
      %v2626 = vunpack.c.l.bf16 %v233
      %v2627 = vunpack.c.l.bf16 %v234
      %v2628 = vunpack.c.l.bf16 %v235
      %v2629 = vunpack.c.l.bf16 %v236
      %v2630 = vunpack.c.l.bf16 %v237
      %v2631 = vunpack.c.l.bf16 %v238
      %v2632 = vunpack.c.l.bf16 %v239
      %v2633 = vunpack.c.l.bf16 %v240
      %v2634 = vunpack.c.l.bf16 %v241
      %v2635 = vunpack.c.l.bf16 %v242
      %v2636 = vunpack.c.l.bf16 %v243
      %v2637 = vunpack.c.l.bf16 %v244
      %v2638 = vunpack.c.l.bf16 %v245
      %v2639 = vunpack.c.l.bf16 %v246
      %v2640 = vunpack.c.l.bf16 %v247
      %v2641 = vunpack.c.l.bf16 %v248
      %v2642 = vunpack.c.l.bf16 %v249
      %v2643 = vunpack.c.l.bf16 %v250
      %v2644 = vunpack.c.l.bf16 %v251
      %v2645 = vunpack.c.l.bf16 %v252
      %v2646 = vunpack.c.l.bf16 %v253
      %v2647 = vunpack.c.l.bf16 %v254
      %v2648 = vunpack.c.l.bf16 %v255
      %v2649 = vunpack.c.l.bf16 %v256
      %v2650 = vunpack.c.l.bf16 %v257
      %vm2651 = vsmask.f32 4352
      %v2652 = vshrl.u32 %v2556, 16
      %v2654 = vrot.slane %v2652, 3
      %v2655 = vshll.u32 %v2556, 16
      %v2657 = vrot.slane %v2655, 4
      %v2658 = vor.u32 %v2654, %v2657
      %v2659 = vshrl.u32 %v2558, 16
      %v2661 = vrot.slane %v2659, 3
      %v2662 = vshll.u32 %v2558, 16
      %v2664 = vrot.slane %v2662, 4
      %v2665 = vor.u32 %v2661, %v2664
      %v2666 = vsel %vm2651, %v2658, %v2665
      %v2667 = vshrl.u32 %v2560, 16
      %v2669 = vrot.slane %v2667, 3
      %v2670 = vshll.u32 %v2560, 16
      %v2672 = vrot.slane %v2670, 4
      %v2673 = vor.u32 %v2669, %v2672
      %v2674 = vshrl.u32 %v2562, 16
      %v2676 = vrot.slane %v2674, 3
      %v2677 = vshll.u32 %v2562, 16
      %v2679 = vrot.slane %v2677, 4
      %v2680 = vor.u32 %v2676, %v2679
      %v2681 = vsel %vm2651, %v2673, %v2680
      %v2682 = vshrl.u32 %v2564, 16
      %v2684 = vrot.slane %v2682, 3
      %v2685 = vshll.u32 %v2564, 16
      %v2687 = vrot.slane %v2685, 4
      %v2688 = vor.u32 %v2684, %v2687
      %v2689 = vshrl.u32 %v2566, 16
      %v2691 = vrot.slane %v2689, 3
      %v2692 = vshll.u32 %v2566, 16
      %v2694 = vrot.slane %v2692, 4
      %v2695 = vor.u32 %v2691, %v2694
      %v2696 = vsel %vm2651, %v2688, %v2695
      %v2697 = vshrl.u32 %v2568, 16
      %v2699 = vrot.slane %v2697, 3
      %v2700 = vshll.u32 %v2568, 16
      %v2702 = vrot.slane %v2700, 4
      %v2703 = vor.u32 %v2699, %v2702
      %v2704 = vshrl.u32 %v2570, 16
      %v2706 = vrot.slane %v2704, 3
      %v2707 = vshll.u32 %v2570, 16
      %v2709 = vrot.slane %v2707, 4
      %v2710 = vor.u32 %v2706, %v2709
      %v2711 = vsel %vm2651, %v2703, %v2710
      %v2712 = vshrl.u32 %v2572, 16
      %v2714 = vrot.slane %v2712, 3
      %v2715 = vshll.u32 %v2572, 16
      %v2717 = vrot.slane %v2715, 4
      %v2718 = vor.u32 %v2714, %v2717
      %v2719 = vshrl.u32 %v2574, 16
      %v2721 = vrot.slane %v2719, 3
      %v2722 = vshll.u32 %v2574, 16
      %v2724 = vrot.slane %v2722, 4
      %v2725 = vor.u32 %v2721, %v2724
      %v2726 = vsel %vm2651, %v2718, %v2725
      %v2727 = vshrl.u32 %v2576, 16
      %v2729 = vrot.slane %v2727, 3
      %v2730 = vshll.u32 %v2576, 16
      %v2732 = vrot.slane %v2730, 4
      %v2733 = vor.u32 %v2729, %v2732
      %v2734 = vshrl.u32 %v2578, 16
      %v2736 = vrot.slane %v2734, 3
      %v2737 = vshll.u32 %v2578, 16
      %v2739 = vrot.slane %v2737, 4
      %v2740 = vor.u32 %v2736, %v2739
      %v2741 = vsel %vm2651, %v2733, %v2740
      %v2742 = vshrl.u32 %v2580, 16
      %v2744 = vrot.slane %v2742, 3
      %v2745 = vshll.u32 %v2580, 16
      %v2747 = vrot.slane %v2745, 4
      %v2748 = vor.u32 %v2744, %v2747
      %v2749 = vshrl.u32 %v2582, 16
      %v2751 = vrot.slane %v2749, 3
      %v2752 = vshll.u32 %v2582, 16
      %v2754 = vrot.slane %v2752, 4
      %v2755 = vor.u32 %v2751, %v2754
      %v2756 = vsel %vm2651, %v2748, %v2755
      %v2757 = vshrl.u32 %v2584, 16
      %v2759 = vrot.slane %v2757, 3
      %v2760 = vshll.u32 %v2584, 16
      %v2762 = vrot.slane %v2760, 4
      %v2763 = vor.u32 %v2759, %v2762
      %v2764 = vshrl.u32 %v2586, 16
      %v2766 = vrot.slane %v2764, 3
      %v2767 = vshll.u32 %v2586, 16
      %v2769 = vrot.slane %v2767, 4
      %v2770 = vor.u32 %v2766, %v2769
      %v2771 = vsel %vm2651, %v2763, %v2770
      %v2772 = vshrl.u32 %v2588, 16
      %v2774 = vrot.slane %v2772, 3
      %v2775 = vshll.u32 %v2588, 16
      %v2777 = vrot.slane %v2775, 4
      %v2778 = vor.u32 %v2774, %v2777
      %v2779 = vshrl.u32 %v2590, 16
      %v2781 = vrot.slane %v2779, 3
      %v2782 = vshll.u32 %v2590, 16
      %v2784 = vrot.slane %v2782, 4
      %v2785 = vor.u32 %v2781, %v2784
      %v2786 = vsel %vm2651, %v2778, %v2785
      %v2787 = vshrl.u32 %v2592, 16
      %v2789 = vrot.slane %v2787, 3
      %v2790 = vshll.u32 %v2592, 16
      %v2792 = vrot.slane %v2790, 4
      %v2793 = vor.u32 %v2789, %v2792
      %v2794 = vshrl.u32 %v2594, 16
      %v2796 = vrot.slane %v2794, 3
      %v2797 = vshll.u32 %v2594, 16
      %v2799 = vrot.slane %v2797, 4
      %v2800 = vor.u32 %v2796, %v2799
      %v2801 = vsel %vm2651, %v2793, %v2800
      %v2802 = vshrl.u32 %v2596, 16
      %v2804 = vrot.slane %v2802, 3
      %v2805 = vshll.u32 %v2596, 16
      %v2807 = vrot.slane %v2805, 4
      %v2808 = vor.u32 %v2804, %v2807
      %v2809 = vshrl.u32 %v2598, 16
      %v2811 = vrot.slane %v2809, 3
      %v2812 = vshll.u32 %v2598, 16
      %v2814 = vrot.slane %v2812, 4
      %v2815 = vor.u32 %v2811, %v2814
      %v2816 = vsel %vm2651, %v2808, %v2815
      %v2817 = vshrl.u32 %v2600, 16
      %v2819 = vrot.slane %v2817, 3
      %v2820 = vshll.u32 %v2600, 16
      %v2822 = vrot.slane %v2820, 4
      %v2823 = vor.u32 %v2819, %v2822
      %v2824 = vshrl.u32 %v2602, 16
      %v2826 = vrot.slane %v2824, 3
      %v2827 = vshll.u32 %v2602, 16
      %v2829 = vrot.slane %v2827, 4
      %v2830 = vor.u32 %v2826, %v2829
      %v2831 = vsel %vm2651, %v2823, %v2830
      %v2832 = vshrl.u32 %v2604, 16
      %v2834 = vrot.slane %v2832, 3
      %v2835 = vshll.u32 %v2604, 16
      %v2837 = vrot.slane %v2835, 4
      %v2838 = vor.u32 %v2834, %v2837
      %v2839 = vshrl.u32 %v2606, 16
      %v2841 = vrot.slane %v2839, 3
      %v2842 = vshll.u32 %v2606, 16
      %v2844 = vrot.slane %v2842, 4
      %v2845 = vor.u32 %v2841, %v2844
      %v2846 = vsel %vm2651, %v2838, %v2845
      %v2847 = vshrl.u32 %v2608, 16
      %v2849 = vrot.slane %v2847, 3
      %v2850 = vshll.u32 %v2608, 16
      %v2852 = vrot.slane %v2850, 4
      %v2853 = vor.u32 %v2849, %v2852
      %v2854 = vshrl.u32 %v2610, 16
      %v2856 = vrot.slane %v2854, 3
      %v2857 = vshll.u32 %v2610, 16
      %v2859 = vrot.slane %v2857, 4
      %v2860 = vor.u32 %v2856, %v2859
      %v2861 = vsel %vm2651, %v2853, %v2860
      %v2862 = vshrl.u32 %v2612, 16
      %v2864 = vrot.slane %v2862, 3
      %v2865 = vshll.u32 %v2612, 16
      %v2867 = vrot.slane %v2865, 4
      %v2868 = vor.u32 %v2864, %v2867
      %v2869 = vshrl.u32 %v2614, 16
      %v2871 = vrot.slane %v2869, 3
      %v2872 = vshll.u32 %v2614, 16
      %v2874 = vrot.slane %v2872, 4
      %v2875 = vor.u32 %v2871, %v2874
      %v2876 = vsel %vm2651, %v2868, %v2875
      %v2877 = vshrl.u32 %v2616, 16
      %v2879 = vrot.slane %v2877, 3
      %v2880 = vshll.u32 %v2616, 16
      %v2882 = vrot.slane %v2880, 4
      %v2883 = vor.u32 %v2879, %v2882
      %v2884 = vshrl.u32 %v2618, 16
      %v2886 = vrot.slane %v2884, 3
      %v2887 = vshll.u32 %v2618, 16
      %v2889 = vrot.slane %v2887, 4
      %v2890 = vor.u32 %v2886, %v2889
      %v2891 = vsel %vm2651, %v2883, %v2890
      %v2892 = vld [vmem:[%s3] sm:$0xf]
      %v2893 = vld [vmem:[%s3 + $0x4] sm:$0xf]
      %v2894 = vld [vmem:[%s3 + $0x8] sm:$0xf]
      %v2895 = vld [vmem:[%s3 + $0xc] sm:$0xf]
      %v2896 = vld [vmem:[%s3 + $0x10] sm:$0x3]
      %v2897 = vld [vmem:[%s4] sm:$0x1]
      %v2899 = vlaneseq
      %v2900 = vshrl.u32 %v2899, 7
      %v2901 = vsub.s32 0, %v2900
      %v2902 = vrot.slane %v2897, %v2901
      %v2909 = vunpack.c.l.b16 %v2892
      %v2910 = vunpack.c.l.b16 %v2893
      %v2911 = vunpack.c.l.b16 %v2894
      %v2912 = vunpack.c.l.b16 %v2895
      %v2913 = vunpack.c.l.b16 %v2896
      %v2914 = vpack.c.b16 %v2910, %v2909
      %v2915 = vpack.c.b16 %v2912, %v2911
      %v2916 = vpack.c.b16 %v2913, %v2913
      %vm2919 = vcmask 293888
      %v2921 = vsel %vm2919, %v2666, 0
      %v2924 = vsel %vm2919, %v2681, 0
      %v2927 = vsel %vm2919, %v2696, 0
      %v2930 = vsel %vm2919, %v2711, 0
      %v2933 = vsel %vm2919, %v2726, 0
      %v2936 = vsel %vm2919, %v2741, 0
      %v2939 = vsel %vm2919, %v2756, 0
      %v2942 = vsel %vm2919, %v2771, 0
      %v2945 = vsel %vm2919, %v2786, 0
      %v2948 = vsel %vm2919, %v2801, 0
      %v2951 = vsel %vm2919, %v2816, 0
      %v2954 = vsel %vm2919, %v2831, 0
      %v2957 = vsel %vm2919, %v2846, 0
      %v2960 = vsel %vm2919, %v2861, 0
      %v2963 = vsel %vm2919, %v2876, 0
      %v2966 = vsel %vm2919, %v2891, 0
      %vm2968 = vcmask 1041408
      %v2970 = vsel %vm2968, %v2916, 0
      %2972 = vmatprep.subr.bf16.mxu0 0
      %2973 = vmatpush1.bf16.msra.mxu0 0
      %2974 = vmatprep.subr.bf16.mxu0 0
      %2975 = vmatpush1.bf16.msra.mxu0 0
      %2976 = vmatprep.subr.bf16.mxu0 0
      %2977 = vmatpush1.bf16.msra.mxu0 0
      %2978 = vmatprep.subr.bf16.mxu0 0
      %2979 = vmatpush1.bf16.msra.mxu0 0
      %2980 = vmatprep.subr.bf16.mxu0 0
      %2981 = vmatpush1.bf16.msra.mxu0 0
      %2982 = vmatprep.subr.bf16.mxu0 0
      %2983 = vmatpush1.bf16.msra.mxu0 %v2970
      %2984 = vmatprep.subr.bf16.mxu0 0
      %2985 = vmatpush1.bf16.msra.mxu0 %v2915
      %2986 = vmatprep.subr.bf16.mxu0 0
      %2987 = vmatpush1.bf16.msra.mxu0 %v2914
      %2988 = vmatprep.subr.bf16.mxu0 0
      %2989 = vmatpush2.bf16.msra.mxu0 0
      %2990 = vmatprep.subr.bf16.mxu0 0
      %2991 = vmatpush2.bf16.msra.mxu0 0
      %2992 = vmatprep.subr.bf16.mxu0 0
      %2993 = vmatpush2.bf16.msra.mxu0 0
      %2994 = vmatprep.subr.bf16.mxu0 0
      %2995 = vmatpush2.bf16.msra.mxu0 0
      %2996 = vmatprep.subr.bf16.mxu0 0
      %2997 = vmatpush2.bf16.msra.mxu0 0
      %2998 = vmatprep.subr.bf16.mxu0 0
      %2999 = vmatpush2.bf16.msra.mxu0 0
      %3000 = vmatprep.subr.bf16.mxu0 0
      %3001 = vmatpush2.bf16.msra.mxu0 0
      %3002 = vmatprep.subr.bf16.mxu0 0
      %3003 = vmatpush2.bf16.msra.mxu0 0
      %3004 = vmatprep.mubr.bf16.mxu0 0
      %3005 = vmatmul.mubr.bf16.gmra.mxu0 %v2921
      %v3006 = vpop.f32.mrf.mxu0
      %v3007 = vadd.f32 %v2902, %v3006
      %v3008 = vpop.f32.mrf.mxu0
      %v3009 = vpop.f32.mrf.mxu0
      %v3010 = vadd.f32 %v2902, %v3009
      %v3011 = vpop.f32.mrf.mxu0
      %3012 = vmatprep.mubr.bf16.mxu0 0
      %3013 = vmatmul.mubr.bf16.gmra.mxu0 %v2924
      %v3014 = vpop.f32.mrf.mxu0
      %v3015 = vadd.f32 %v2902, %v3014
      %v3016 = vpop.f32.mrf.mxu0
      %v3017 = vpop.f32.mrf.mxu0
      %v3018 = vadd.f32 %v2902, %v3017
      %v3019 = vpop.f32.mrf.mxu0
      %3020 = vmatprep.mubr.bf16.mxu0 0
      %3021 = vmatmul.mubr.bf16.gmra.mxu0 %v2927
      %v3022 = vpop.f32.mrf.mxu0
      %v3023 = vadd.f32 %v2902, %v3022
      %v3024 = vpop.f32.mrf.mxu0
      %v3025 = vpop.f32.mrf.mxu0
      %v3026 = vadd.f32 %v2902, %v3025
      %v3027 = vpop.f32.mrf.mxu0
      %3028 = vmatprep.mubr.bf16.mxu0 0
      %3029 = vmatmul.mubr.bf16.gmra.mxu0 %v2930
      %v3030 = vpop.f32.mrf.mxu0
      %v3031 = vadd.f32 %v2902, %v3030
      %v3032 = vpop.f32.mrf.mxu0
      %v3033 = vpop.f32.mrf.mxu0
      %v3034 = vadd.f32 %v2902, %v3033
      %v3035 = vpop.f32.mrf.mxu0
      %3036 = vmatprep.mubr.bf16.mxu0 0
      %3037 = vmatmul.mubr.bf16.gmra.mxu0 %v2933
      %v3038 = vpop.f32.mrf.mxu0
      %v3039 = vadd.f32 %v2902, %v3038
      %v3040 = vpop.f32.mrf.mxu0
      %v3041 = vpop.f32.mrf.mxu0
      %v3042 = vadd.f32 %v2902, %v3041
      %v3043 = vpop.f32.mrf.mxu0
      %3044 = vmatprep.mubr.bf16.mxu0 0
      %3045 = vmatmul.mubr.bf16.gmra.mxu0 %v2936
      %v3046 = vpop.f32.mrf.mxu0
      %v3047 = vadd.f32 %v2902, %v3046
      %v3048 = vpop.f32.mrf.mxu0
      %v3049 = vpop.f32.mrf.mxu0
      %v3050 = vadd.f32 %v2902, %v3049
      %v3051 = vpop.f32.mrf.mxu0
      %3052 = vmatprep.mubr.bf16.mxu0 0
      %3053 = vmatmul.mubr.bf16.gmra.mxu0 %v2939
      %v3054 = vpop.f32.mrf.mxu0
      %v3055 = vadd.f32 %v2902, %v3054
      %v3056 = vpop.f32.mrf.mxu0
      %v3057 = vpop.f32.mrf.mxu0
      %v3058 = vadd.f32 %v2902, %v3057
      %v3059 = vpop.f32.mrf.mxu0
      %3060 = vmatprep.mubr.bf16.mxu0 0
      %3061 = vmatmul.mubr.bf16.gmra.mxu0 %v2942
      %v3062 = vpop.f32.mrf.mxu0
      %v3063 = vadd.f32 %v2902, %v3062
      %v3064 = vpop.f32.mrf.mxu0
      %v3065 = vpop.f32.mrf.mxu0
      %v3066 = vadd.f32 %v2902, %v3065
      %v3067 = vpop.f32.mrf.mxu0
      %3068 = vmatprep.mubr.bf16.mxu0 0
      %3069 = vmatmul.mubr.bf16.gmra.mxu0 %v2945
      %v3070 = vpop.f32.mrf.mxu0
      %v3071 = vadd.f32 %v2902, %v3070
      %v3072 = vpop.f32.mrf.mxu0
      %v3073 = vpop.f32.mrf.mxu0
      %v3074 = vadd.f32 %v2902, %v3073
      %v3075 = vpop.f32.mrf.mxu0
      %3076 = vmatprep.mubr.bf16.mxu0 0
      %3077 = vmatmul.mubr.bf16.gmra.mxu0 %v2948
      %v3078 = vpop.f32.mrf.mxu0
      %v3079 = vadd.f32 %v2902, %v3078
      %v3080 = vpop.f32.mrf.mxu0
      %v3081 = vpop.f32.mrf.mxu0
      %v3082 = vadd.f32 %v2902, %v3081
      %v3083 = vpop.f32.mrf.mxu0
      %3084 = vmatprep.mubr.bf16.mxu0 0
      %3085 = vmatmul.mubr.bf16.gmra.mxu0 %v2951
      %v3086 = vpop.f32.mrf.mxu0
      %v3087 = vadd.f32 %v2902, %v3086
      %v3088 = vpop.f32.mrf.mxu0
      %v3089 = vpop.f32.mrf.mxu0
      %v3090 = vadd.f32 %v2902, %v3089
      %v3091 = vpop.f32.mrf.mxu0
      %3092 = vmatprep.mubr.bf16.mxu0 0
      %3093 = vmatmul.mubr.bf16.gmra.mxu0 %v2954
      %v3094 = vpop.f32.mrf.mxu0
      %v3095 = vadd.f32 %v2902, %v3094
      %v3096 = vpop.f32.mrf.mxu0
      %v3097 = vpop.f32.mrf.mxu0
      %v3098 = vadd.f32 %v2902, %v3097
      %v3099 = vpop.f32.mrf.mxu0
      %3100 = vmatprep.mubr.bf16.mxu0 0
      %3101 = vmatmul.mubr.bf16.gmra.mxu0 %v2957
      %v3102 = vpop.f32.mrf.mxu0
      %v3103 = vadd.f32 %v2902, %v3102
      %v3104 = vpop.f32.mrf.mxu0
      %v3105 = vpop.f32.mrf.mxu0
      %v3106 = vadd.f32 %v2902, %v3105
      %v3107 = vpop.f32.mrf.mxu0
      %3108 = vmatprep.mubr.bf16.mxu0 0
      %3109 = vmatmul.mubr.bf16.gmra.mxu0 %v2960
      %v3110 = vpop.f32.mrf.mxu0
      %v3111 = vadd.f32 %v2902, %v3110
      %v3112 = vpop.f32.mrf.mxu0
      %v3113 = vpop.f32.mrf.mxu0
      %v3114 = vadd.f32 %v2902, %v3113
      %v3115 = vpop.f32.mrf.mxu0
      %3116 = vmatprep.mubr.bf16.mxu0 0
      %3117 = vmatmul.mubr.bf16.gmra.mxu0 %v2963
      %v3118 = vpop.f32.mrf.mxu0
      %v3119 = vadd.f32 %v2902, %v3118
      %v3120 = vpop.f32.mrf.mxu0
      %v3121 = vpop.f32.mrf.mxu0
      %v3122 = vadd.f32 %v2902, %v3121
      %v3123 = vpop.f32.mrf.mxu0
      %3124 = vmatprep.mubr.bf16.mxu0 0
      %3125 = vmatmul.mubr.bf16.gmra.mxu0 %v2966
      %v3126 = vpop.f32.mrf.mxu0
      %v3127 = vadd.f32 %v2902, %v3126
      %v3128 = vpop.f32.mrf.mxu0
      %v3129 = vpop.f32.mrf.mxu0
      %v3130 = vadd.f32 %v2902, %v3129
      %v3131 = vpop.f32.mrf.mxu0
      %3132 = vdwg.mxu0
      %vm3133 = vcmp.ge.f32.partialorder %v3007, 0.0
      %vm3134 = vcmp.ge.f32.partialorder %v3010, 0.0
      %vm3135 = vcmp.ge.f32.partialorder %v3015, 0.0
      %vm3136 = vcmp.ge.f32.partialorder %v3018, 0.0
      %vm3137 = vcmp.ge.f32.partialorder %v3023, 0.0
      %vm3138 = vcmp.ge.f32.partialorder %v3026, 0.0
      %vm3139 = vcmp.ge.f32.partialorder %v3031, 0.0
      %vm3140 = vcmp.ge.f32.partialorder %v3034, 0.0
      %vm3141 = vcmp.ge.f32.partialorder %v3039, 0.0
      %vm3142 = vcmp.ge.f32.partialorder %v3042, 0.0
      %vm3143 = vcmp.ge.f32.partialorder %v3047, 0.0
      %vm3144 = vcmp.ge.f32.partialorder %v3050, 0.0
      %vm3145 = vcmp.ge.f32.partialorder %v3055, 0.0
      %vm3146 = vcmp.ge.f32.partialorder %v3058, 0.0
      %vm3147 = vcmp.ge.f32.partialorder %v3063, 0.0
      %vm3148 = vcmp.ge.f32.partialorder %v3066, 0.0
      %vm3149 = vcmp.ge.f32.partialorder %v3071, 0.0
      %vm3150 = vcmp.ge.f32.partialorder %v3074, 0.0
      %vm3151 = vcmp.ge.f32.partialorder %v3079, 0.0
      %vm3152 = vcmp.ge.f32.partialorder %v3082, 0.0
      %vm3153 = vcmp.ge.f32.partialorder %v3087, 0.0
      %vm3154 = vcmp.ge.f32.partialorder %v3090, 0.0
      %vm3155 = vcmp.ge.f32.partialorder %v3095, 0.0
      %vm3156 = vcmp.ge.f32.partialorder %v3098, 0.0
      %vm3157 = vcmp.ge.f32.partialorder %v3103, 0.0
      %vm3158 = vcmp.ge.f32.partialorder %v3106, 0.0
      %vm3159 = vcmp.ge.f32.partialorder %v3111, 0.0
      %vm3160 = vcmp.ge.f32.partialorder %v3114, 0.0
      %vm3161 = vcmp.ge.f32.partialorder %v3119, 0.0
      %vm3162 = vcmp.ge.f32.partialorder %v3122, 0.0
      %vm3163 = vcmp.ge.f32.partialorder %v3127, 0.0
      %vm3164 = vcmp.ge.f32.partialorder %v3130, 0.0
      %v3165 = vmul.f32 %v3007, 0.1
      %v3166 = vmul.f32 %v3010, 0.1
      %v3167 = vmul.f32 %v3015, 0.1
      %v3168 = vmul.f32 %v3018, 0.1
      %v3169 = vmul.f32 %v3023, 0.1
      %v3170 = vmul.f32 %v3026, 0.1
      %v3171 = vmul.f32 %v3031, 0.1
      %v3172 = vmul.f32 %v3034, 0.1
      %v3173 = vmul.f32 %v3039, 0.1
      %v3174 = vmul.f32 %v3042, 0.1
      %v3175 = vmul.f32 %v3047, 0.1
      %v3176 = vmul.f32 %v3050, 0.1
      %v3177 = vmul.f32 %v3055, 0.1
      %v3178 = vmul.f32 %v3058, 0.1
      %v3179 = vmul.f32 %v3063, 0.1
      %v3180 = vmul.f32 %v3066, 0.1
      %v3181 = vmul.f32 %v3071, 0.1
      %v3182 = vmul.f32 %v3074, 0.1
      %v3183 = vmul.f32 %v3079, 0.1
      %v3184 = vmul.f32 %v3082, 0.1
      %v3185 = vmul.f32 %v3087, 0.1
      %v3186 = vmul.f32 %v3090, 0.1
      %v3187 = vmul.f32 %v3095, 0.1
      %v3188 = vmul.f32 %v3098, 0.1
      %v3189 = vmul.f32 %v3103, 0.1
      %v3190 = vmul.f32 %v3106, 0.1
      %v3191 = vmul.f32 %v3111, 0.1
      %v3192 = vmul.f32 %v3114, 0.1
      %v3193 = vmul.f32 %v3119, 0.1
      %v3194 = vmul.f32 %v3122, 0.1
      %v3195 = vmul.f32 %v3127, 0.1
      %v3196 = vmul.f32 %v3130, 0.1
      %v3197 = vsel %vm3133, %v3007, %v3165
      %v3198 = vsel %vm3134, %v3010, %v3166
      %v3199 = vsel %vm3135, %v3015, %v3167
      %v3200 = vsel %vm3136, %v3018, %v3168
      %v3201 = vsel %vm3137, %v3023, %v3169
      %v3202 = vsel %vm3138, %v3026, %v3170
      %v3203 = vsel %vm3139, %v3031, %v3171
      %v3204 = vsel %vm3140, %v3034, %v3172
      %v3205 = vsel %vm3141, %v3039, %v3173
      %v3206 = vsel %vm3142, %v3042, %v3174
      %v3207 = vsel %vm3143, %v3047, %v3175
      %v3208 = vsel %vm3144, %v3050, %v3176
      %v3209 = vsel %vm3145, %v3055, %v3177
      %v3210 = vsel %vm3146, %v3058, %v3178
      %v3211 = vsel %vm3147, %v3063, %v3179
      %v3212 = vsel %vm3148, %v3066, %v3180
      %v3213 = vsel %vm3149, %v3071, %v3181
      %v3214 = vsel %vm3150, %v3074, %v3182
      %v3215 = vsel %vm3151, %v3079, %v3183
      %v3216 = vsel %vm3152, %v3082, %v3184
      %v3217 = vsel %vm3153, %v3087, %v3185
      %v3218 = vsel %vm3154, %v3090, %v3186
      %v3219 = vsel %vm3155, %v3095, %v3187
      %v3220 = vsel %vm3156, %v3098, %v3188
      %v3221 = vsel %vm3157, %v3103, %v3189
      %v3222 = vsel %vm3158, %v3106, %v3190
      %v3223 = vsel %vm3159, %v3111, %v3191
      %v3224 = vsel %vm3160, %v3114, %v3192
      %v3225 = vsel %vm3161, %v3119, %v3193
      %v3226 = vsel %vm3162, %v3122, %v3194
      %v3227 = vsel %vm3163, %v3127, %v3195
      %v3228 = vsel %vm3164, %v3130, %v3196
      %v3229 = vadd.f32 %v2619, %v3197
      %v3230 = vadd.f32 %v2620, %v3198
      %v3231 = vadd.f32 %v2621, %v3199
      %v3232 = vadd.f32 %v2622, %v3200
      %v3233 = vadd.f32 %v2623, %v3201
      %v3234 = vadd.f32 %v2624, %v3202
      %v3235 = vadd.f32 %v2625, %v3203
      %v3236 = vadd.f32 %v2626, %v3204
      %v3237 = vadd.f32 %v2627, %v3205
      %v3238 = vadd.f32 %v2628, %v3206
      %v3239 = vadd.f32 %v2629, %v3207
      %v3240 = vadd.f32 %v2630, %v3208
      %v3241 = vadd.f32 %v2631, %v3209
      %v3242 = vadd.f32 %v2632, %v3210
      %v3243 = vadd.f32 %v2633, %v3211
      %v3244 = vadd.f32 %v2634, %v3212
      %v3245 = vadd.f32 %v2635, %v3213
      %v3246 = vadd.f32 %v2636, %v3214
      %v3247 = vadd.f32 %v2637, %v3215
      %v3248 = vadd.f32 %v2638, %v3216
      %v3249 = vadd.f32 %v2639, %v3217
      %v3250 = vadd.f32 %v2640, %v3218
      %v3251 = vadd.f32 %v2641, %v3219
      %v3252 = vadd.f32 %v2642, %v3220
      %v3253 = vadd.f32 %v2643, %v3221
      %v3254 = vadd.f32 %v2644, %v3222
      %v3255 = vadd.f32 %v2645, %v3223
      %v3256 = vadd.f32 %v2646, %v3224
      %v3257 = vadd.f32 %v2647, %v3225
      %v3258 = vadd.f32 %v2648, %v3226
      %v3259 = vadd.f32 %v2649, %v3227
      %v3260 = vadd.f32 %v2650, %v3228
      %3261 = vst.msk [vmem:[%s224] sm:$0xff] %vm346, %v3229
      %3262 = vst.msk [vmem:[%s224 + $0x8] sm:$0xff] %vm346, %v3230
      %3263 = vst.msk [vmem:[%s224 + $0x10] sm:$0xff] %vm346, %v3231
      %3264 = vst.msk [vmem:[%s224 + $0x18] sm:$0xff] %vm346, %v3232
      %3265 = vst.msk [vmem:[%s224 + $0x20] sm:$0xff] %vm346, %v3233
      %3266 = vst.msk [vmem:[%s224 + $0x28] sm:$0xff] %vm346, %v3234
      %3267 = vst.msk [vmem:[%s224 + $0x30] sm:$0xff] %vm346, %v3235
      %3268 = vst.msk [vmem:[%s224 + $0x38] sm:$0xff] %vm346, %v3236
      %3269 = vst.msk [vmem:[%s224 + $0x40] sm:$0xff] %vm346, %v3237
      %3270 = vst.msk [vmem:[%s224 + $0x48] sm:$0xff] %vm346, %v3238
      %3271 = vst.msk [vmem:[%s224 + $0x50] sm:$0xff] %vm346, %v3239
      %3272 = vst.msk [vmem:[%s224 + $0x58] sm:$0xff] %vm346, %v3240
      %3273 = vst.msk [vmem:[%s224 + $0x60] sm:$0xff] %vm346, %v3241
      %3274 = vst.msk [vmem:[%s224 + $0x68] sm:$0xff] %vm346, %v3242
      %3275 = vst.msk [vmem:[%s224 + $0x70] sm:$0xff] %vm346, %v3243
      %3276 = vst.msk [vmem:[%s224 + $0x78] sm:$0xff] %vm346, %v3244
      %3277 = vst.msk [vmem:[%s224 + $0x80] sm:$0xff] %vm346, %v3245
      %3278 = vst.msk [vmem:[%s224 + $0x88] sm:$0xff] %vm346, %v3246
      %3279 = vst.msk [vmem:[%s224 + $0x90] sm:$0xff] %vm346, %v3247
      %3280 = vst.msk [vmem:[%s224 + $0x98] sm:$0xff] %vm346, %v3248
      %3281 = vst.msk [vmem:[%s224 + $0xa0] sm:$0xff] %vm346, %v3249
      %3282 = vst.msk [vmem:[%s224 + $0xa8] sm:$0xff] %vm346, %v3250
      %3283 = vst.msk [vmem:[%s224 + $0xb0] sm:$0xff] %vm346, %v3251
      %3284 = vst.msk [vmem:[%s224 + $0xb8] sm:$0xff] %vm346, %v3252
      %3285 = vst.msk [vmem:[%s224 + $0xc0] sm:$0xff] %vm346, %v3253
      %3286 = vst.msk [vmem:[%s224 + $0xc8] sm:$0xff] %vm346, %v3254
      %3287 = vst.msk [vmem:[%s224 + $0xd0] sm:$0xff] %vm346, %v3255
      %3288 = vst.msk [vmem:[%s224 + $0xd8] sm:$0xff] %vm346, %v3256
      %3289 = vst.msk [vmem:[%s224 + $0xe0] sm:$0xff] %vm346, %v3257
      %3290 = vst.msk [vmem:[%s224 + $0xe8] sm:$0xff] %vm346, %v3258
      %3291 = vst.msk [vmem:[%s224 + $0xf0] sm:$0xff] %vm346, %v3259
      %3292 = vst.msk [vmem:[%s224 + $0xf8] sm:$0xff] %vm346, %v3260
      %p3293 = scmp.lt.s32.totalorder %s16, 1
      %s3294 = scalar_select %p3293, %s16, 1
      %s3295 = smul.addr %s3294, 32
      %s3296 = smul.addr %s3295, 8
      %s3297 = scalar_lea.vmem %s5, %s3296
      // Predicated region
      $region41: #{tpu_custom_call.1} parent=39 // pred_check
        %p3298 = pneg %p144
      $region42: #{tpu_custom_call.1} parent=39 // pred_check_branch
        %3300 = sbr.rel (%p3298) target = $region44
      $region43: #{tpu_custom_call.1} parent=39 // pred_region
        _
      $region44: #{tpu_custom_call.1} parent=39 // pred_fallthru
        _
    $region40: #{tpu_custom_call.1} parent=5 // pred_fallthru
      _
    %p3301 = scmp.le.s32.totalorder 2, %s11
    // Predicated region
    $region45: #{tpu_custom_call.1} parent=5 // pred_check
      %p3302 = pneg %p3301
    $region46: #{tpu_custom_call.1} parent=5 // pred_check_branch
      %3304 = sbr.rel (%p3302) target = $region48
    $region47: #{tpu_custom_call.1} parent=5 // pred_region
      %s3305 = ssub.s32 %s11, 2
      // Predicated region
      $region49: #{tpu_custom_call.1} parent=47 // pred_check
        %p3306 = pneg %p150
      $region50: #{tpu_custom_call.1} parent=47 // pred_check_branch
        %3308 = sbr.rel (%p3306) target = $region52
      $region51: #{tpu_custom_call.1} parent=47 // pred_region
        %p3309 = scmp.lt.s32.totalorder %s17, 1
        %s3310 = scalar_select %p3309, %s17, 1
        %s3311 = smul.addr %s3310, 32
        %s3312 = smul.addr %s3311, 8
        %s3313 = scalar_lea.vmem %s5, %s3312
      $region52: #{tpu_custom_call.1} parent=47 // pred_fallthru
        _
    $region48: #{tpu_custom_call.1} parent=5 // pred_fallthru
      _
  $region6: #{tpu_custom_call.1} parent=0 // loop_footer
    %s15 = sadd.s32 1, %s11
  $region7: #{tpu_custom_call.1} parent=0 // loop_footer_branch
    %10 = sbr.rel target = $region3
  $region8: #{tpu_custom_call.1} parent=0 // loop_exit
    _

</llo_original>
